<compile_context>
chip_gen: v7x
topology: tpu7x:2x2x1
jax: 0.10.0
libtpu: 0.0.40
codegen_flags: <defaults>
</compile_context>

<pallas_src>
import jax
import jax.numpy as jnp
import numpy as np
from jax.experimental import pallas as pl
from jax.experimental.pallas import tpu as pltpu

# Problem sizes (inplanes = planes = 32, small spatial extent).
N, C, D, H, W = 2, 32, 4, 8, 8
WC = W * C            # lane axis: W folded into channels -> 256 lanes
NDH = N * D * H       # row axis of the conv matmuls (64)
HP = H + 16           # H padded by a full 8-sublane tile on each side
EPS = 1e-5


def basic_block_kernel(x_ref, m1_ref, m2_ref, gfold_ref,
                       g1_ref, b1_ref, g2_ref, b2_ref, out_ref):
    # x_ref    : (N, D, H, WC)  f32   unpadded input, channels-last, W in lanes
    # m*_ref   : (9, WC, WC)    bf16  banded conv matrices, index kd*3 + kh
    # gfold_ref: (WC, WC)       f32   per-channel fold/broadcast (incl. 1/count)
    # g*/b*    : (1, WC)        f32   BN gamma / beta tiled across the W groups
    # out_ref  : (NDH, WC)      f32   lane-dense output
    x = x_ref[...]
    gfold = gfold_ref[...]

    def pad_dh(v):
        # Zero-pad D by 1 and H by 8 (a full f32 sublane tile so the sublane
        # concatenation stays tile-aligned).  W padding is already folded into
        # the banded weight matrices, so the lane dim never needs padding.
        zh = jnp.zeros((N, D, 8, WC), jnp.float32)
        v = jnp.concatenate([zh, v, zh], axis=2)          # (N, D, H+16, WC)
        zd = jnp.zeros((N, 1, HP, WC), jnp.float32)
        return jnp.concatenate([zd, v, zd], axis=1)       # (N, D+2, H+16, WC)

    def conv3x3x3(vp, m_ref):
        # vp: (N, D+2, H+16, WC) f32.  9 taps, each a (NDH, 256) @ (256, 256)
        # bf16 MXU matmul with f32 accumulation.
        acc = jnp.zeros((NDH, WC), jnp.float32)
        for kd in range(3):
            for kh in range(3):
                slab = vp[:, kd:kd + D, kh + 7:kh + 7 + H, :].reshape(NDH, WC)
                acc = acc + jnp.dot(slab.astype(jnp.bfloat16),
                                    m_ref[kd * 3 + kh],
                                    preferred_element_type=jnp.float32)
        return acc

    def bn_scale_shift(h, gamma_t, beta_t):
        # Training-mode BN, single pass: sum & sum-of-squares row reductions,
        # then one small matmul folds the per-(w, c) partial sums to
        # per-channel mean / E[x^2] and broadcasts them back across the W
        # lane-groups (gfold already contains the 1/count factor).
        s1 = jnp.sum(h, axis=0, keepdims=True)            # (1, WC)
        s2 = jnp.sum(h * h, axis=0, keepdims=True)        # (1, WC)
        mean = jnp.dot(s1, gfold, preferred_element_type=jnp.float32)
        ex2 = jnp.dot(s2, gfold, preferred_element_type=jnp.float32)
        scale = gamma_t * jax.lax.rsqrt(ex2 - mean * mean + EPS)
        shift = beta_t - mean * scale
        return scale, shift

    # conv1 -> bn1 -> relu (fused affine + relu)
    h1 = conv3x3x3(pad_dh(x), m1_ref)
    a1, c1 = bn_scale_shift(h1, g1_ref[...], b1_ref[...])
    h1 = jnp.maximum(h1 * a1 + c1, 0.0)

    # conv2 -> bn2 -> +residual -> relu (fused epilogue, full-lane store)
    h2 = conv3x3x3(pad_dh(h1.reshape(N, D, H, WC)), m2_ref)
    a2, c2 = bn_scale_shift(h2, g2_ref[...], b2_ref[...])
    out_ref[...] = jnp.maximum(h2 * a2 + c2 + x.reshape(NDH, WC), 0.0)


def _banded_conv_matrices(wt):
    # wt: (Cout, Cin, 3, 3, 3) PyTorch conv3d weights.  Returns (9, WC, WC)
    # bf16 matrices M with
    #   M[kd*3+kh, wi*Cin+ci, wo*Cout+co] = wt[co, ci, kd, kh, wi - wo + 1]
    # when |wi - wo| <= 1 and zero otherwise, i.e. the kw tap and the W
    # zero-padding are folded into the matmul contraction.
    wg = jnp.transpose(wt, (2, 3, 4, 1, 0)).astype(jnp.float32)  # (kd,kh,kw,Ci,Co)
    m = jnp.zeros((3, 3, W, C, W, C), jnp.float32)
    for wo in range(W):
        for kw in range(3):
            wi = wo + kw - 1
            if 0 <= wi < W:
                m = m.at[:, :, wi, :, wo, :].set(wg[:, :, kw, :, :])
    return m.reshape(9, WC, WC).astype(jnp.bfloat16)


def _tile_param(p):
    # (C,) -> (1, W*C): per-channel affine params broadcast over the W groups.
    return jnp.tile(p.astype(jnp.float32), W).reshape(1, WC)


def basic_block_pallas(x_ncdhw, w1, w2, g1, b1, g2, b2):
    """x_ncdhw: (N, C, D, H, W) (PyTorch layout). Returns (N, C, D, H, W)."""
    # channels-last with W folded into the lane axis: (N, D, H, W*C)
    x2 = jnp.transpose(x_ncdhw, (0, 2, 3, 4, 1)).astype(jnp.float32)
    x2 = x2.reshape(N, D, H, WC)

    m1 = _banded_conv_matrices(w1)
    m2 = _banded_conv_matrices(w2)

    # Per-channel fold + broadcast matrix for BN stats (includes 1/count).
    ch = jnp.arange(WC, dtype=jnp.int32) % C
    gfold = (ch[:, None] == ch[None, :]).astype(jnp.float32) / float(N * D * H * W)

    out2 = pl.pallas_call(
        basic_block_kernel,
        out_shape=jax.ShapeDtypeStruct((NDH, WC), jnp.float32),
        in_specs=[pl.BlockSpec(memory_space=pltpu.MemorySpace.VMEM)] * 8,
        out_specs=pl.BlockSpec(memory_space=pltpu.MemorySpace.VMEM),
    )(x2, m1, m2, gfold,
      _tile_param(g1), _tile_param(b1), _tile_param(g2), _tile_param(b2))

    out = out2.reshape(N, D, H, W, C)
    return jnp.transpose(out, (0, 4, 1, 2, 3))  # back to NCDHW


def basic_block_reference(x, w1, w2, g1, b1, g2, b2):
    """Pure-JAX reference mirroring the PyTorch forward (training-mode BN)."""
    dn = jax.lax.conv_dimension_numbers(x.shape, w1.shape,
                                        ("NCDHW", "OIDHW", "NCDHW"))

    def conv(a, w):
        return jax.lax.conv_general_dilated(
            a, w, window_strides=(1, 1, 1),
            padding=((1, 1), (1, 1), (1, 1)), dimension_numbers=dn,
            precision=jax.lax.Precision.HIGHEST)

    def bn(h, g, b):
        mean = jnp.mean(h, axis=(0, 2, 3, 4), keepdims=True)
        var = jnp.mean((h - mean) ** 2, axis=(0, 2, 3, 4), keepdims=True)
        return ((h - mean) * jax.lax.rsqrt(var + EPS)
                * g.reshape(1, -1, 1, 1, 1) + b.reshape(1, -1, 1, 1, 1))

    out = jnp.maximum(bn(conv(x, w1), g1, b1), 0.0)
    out = bn(conv(out, w2), g2, b2) + x
    return jnp.maximum(out, 0.0)


if __name__ == "__main__":
    key = jax.random.PRNGKey(0)
    k1, k2, k3, k4, k5, k6, k7 = jax.random.split(key, 7)

    x = jax.random.normal(k1, (N, C, D, H, W), jnp.float32)
    w1 = jax.random.normal(k2, (C, C, 3, 3, 3), jnp.float32) * 0.05
    w2 = jax.random.normal(k3, (C, C, 3, 3, 3), jnp.float32) * 0.05
    g1 = jax.random.uniform(k4, (C,), jnp.float32, 0.5, 1.5)
    b1 = jax.random.normal(k5, (C,), jnp.float32) * 0.1
    g2 = jax.random.uniform(k6, (C,), jnp.float32, 0.5, 1.5)
    b2 = jax.random.normal(k7, (C,), jnp.float32) * 0.1

    out = basic_block_pallas(x, w1, w2, g1, b1, g2, b2)
    out = jax.block_until_ready(out)

    ref = jax.block_until_ready(basic_block_reference(x, w1, w2, g1, b1, g2, b2))
    assert out.shape == (N, C, D, H, W)
    # Tolerance accounts for bf16 MXU matmuls (f32 accumulation) in the kernel
    # vs. the f32 HIGHEST-precision reference.
    assert np.allclose(np.asarray(out), np.asarray(ref), rtol=5e-2, atol=5e-2), (
        "mismatch vs reference")

    print("KERNEL_OK")
</pallas_src>

<mosaic_0001>
module attributes {stable_mosaic.version = 11 : i64} {
  func.func @basic_block_kernel(%arg0: memref<2x4x8x256xf32, #tpu.memory_space<vmem>>, %arg1: memref<9x256x256xbf16, #tpu.memory_space<vmem>>, %arg2: memref<9x256x256xbf16, #tpu.memory_space<vmem>>, %arg3: memref<256x256xf32, #tpu.memory_space<vmem>>, %arg4: memref<1x256xf32, #tpu.memory_space<vmem>>, %arg5: memref<1x256xf32, #tpu.memory_space<vmem>>, %arg6: memref<1x256xf32, #tpu.memory_space<vmem>>, %arg7: memref<1x256xf32, #tpu.memory_space<vmem>>, %arg8: memref<64x256xf32, #tpu.memory_space<vmem>>) attributes {dimension_semantics = [], scalar_prefetch = 0 : i64, scratch_operands = 0 : i64, tpu.core_type = #tpu.core_type<tc>} {
    %c0 = arith.constant 0 : index
    %c0_0 = arith.constant 0 : index
    %c0_1 = arith.constant 0 : index
    %c0_2 = arith.constant 0 : index
    %0 = vector.load %arg0[%c0, %c0_0, %c0_1, %c0_2] : memref<2x4x8x256xf32, #tpu.memory_space<vmem>>, vector<2x4x8x256xf32>
    %c0_3 = arith.constant 0 : index
    %c0_4 = arith.constant 0 : index
    %1 = vector.load %arg3[%c0_3, %c0_4] : memref<256x256xf32, #tpu.memory_space<vmem>>, vector<256x256xf32>
    %cst = arith.constant 0.000000e+00 : f32
    %2 = vector.broadcast %cst : f32 to vector<2x4x8x256xf32>
    %3 = tpu.concatenate %2, %0, %2 in 2 : vector<2x4x8x256xf32>, vector<2x4x8x256xf32>, vector<2x4x8x256xf32> -> vector<2x4x24x256xf32>
    %cst_5 = arith.constant 0.000000e+00 : f32
    %4 = vector.broadcast %cst_5 : f32 to vector<2x1x24x256xf32>
    %5 = tpu.concatenate %4, %3, %4 in 1 : vector<2x1x24x256xf32>, vector<2x4x24x256xf32>, vector<2x1x24x256xf32> -> vector<2x6x24x256xf32>
    %cst_6 = arith.constant 0.000000e+00 : f32
    %6 = vector.broadcast %cst_6 : f32 to vector<64x256xf32>
    %7 = vector.extract_strided_slice %5 {offsets = [0, 0, 7, 0], sizes = [2, 4, 8, 256], strides = [1, 1, 1, 1]} : vector<2x6x24x256xf32> to vector<2x4x8x256xf32>
    %8 = vector.shape_cast %7 : vector<2x4x8x256xf32> to vector<64x256xf32>
    %9 = arith.truncf %8 : vector<64x256xf32> to vector<64x256xbf16>
    %c0_7 = arith.constant 0 : index
    %c0_8 = arith.constant 0 : index
    %c0_9 = arith.constant 0 : index
    %10 = vector.load %arg1[%c0_7, %c0_8, %c0_9] : memref<9x256x256xbf16, #tpu.memory_space<vmem>>, vector<1x256x256xbf16>
    %11 = vector.shape_cast %10 : vector<1x256x256xbf16> to vector<256x256xbf16>
    %cst_10 = arith.constant dense<0.000000e+00> : vector<64x256xf32>
    %12 = tpu.matmul %9, %11, %cst_10 {dimension_numbers = #tpu.dot_dimension_numbers<[1], [0], [0], [1], [0, 0, 1, 1], [], []>} : vector<64x256xbf16>, vector<256x256xbf16>, vector<64x256xf32> -> vector<64x256xf32>
    %13 = arith.addf %6, %12 : vector<64x256xf32>
    %14 = vector.extract_strided_slice %5 {offsets = [0, 0, 8, 0], sizes = [2, 4, 8, 256], strides = [1, 1, 1, 1]} : vector<2x6x24x256xf32> to vector<2x4x8x256xf32>
    %15 = vector.shape_cast %14 : vector<2x4x8x256xf32> to vector<64x256xf32>
    %16 = arith.truncf %15 : vector<64x256xf32> to vector<64x256xbf16>
    %c1 = arith.constant 1 : index
    %c0_11 = arith.constant 0 : index
    %c0_12 = arith.constant 0 : index
    %17 = vector.load %arg1[%c1, %c0_11, %c0_12] : memref<9x256x256xbf16, #tpu.memory_space<vmem>>, vector<1x256x256xbf16>
    %18 = vector.shape_cast %17 : vector<1x256x256xbf16> to vector<256x256xbf16>
    %cst_13 = arith.constant dense<0.000000e+00> : vector<64x256xf32>
    %19 = tpu.matmul %16, %18, %cst_13 {dimension_numbers = #tpu.dot_dimension_numbers<[1], [0], [0], [1], [0, 0, 1, 1], [], []>} : vector<64x256xbf16>, vector<256x256xbf16>, vector<64x256xf32> -> vector<64x256xf32>
    %20 = arith.addf %13, %19 : vector<64x256xf32>
    %21 = vector.extract_strided_slice %5 {offsets = [0, 0, 9, 0], sizes = [2, 4, 8, 256], strides = [1, 1, 1, 1]} : vector<2x6x24x256xf32> to vector<2x4x8x256xf32>
    %22 = vector.shape_cast %21 : vector<2x4x8x256xf32> to vector<64x256xf32>
    %23 = arith.truncf %22 : vector<64x256xf32> to vector<64x256xbf16>
    %c2 = arith.constant 2 : index
    %c0_14 = arith.constant 0 : index
    %c0_15 = arith.constant 0 : index
    %24 = vector.load %arg1[%c2, %c0_14, %c0_15] : memref<9x256x256xbf16, #tpu.memory_space<vmem>>, vector<1x256x256xbf16>
    %25 = vector.shape_cast %24 : vector<1x256x256xbf16> to vector<256x256xbf16>
    %cst_16 = arith.constant dense<0.000000e+00> : vector<64x256xf32>
    %26 = tpu.matmul %23, %25, %cst_16 {dimension_numbers = #tpu.dot_dimension_numbers<[1], [0], [0], [1], [0, 0, 1, 1], [], []>} : vector<64x256xbf16>, vector<256x256xbf16>, vector<64x256xf32> -> vector<64x256xf32>
    %27 = arith.addf %20, %26 : vector<64x256xf32>
    %28 = vector.extract_strided_slice %5 {offsets = [0, 1, 7, 0], sizes = [2, 4, 8, 256], strides = [1, 1, 1, 1]} : vector<2x6x24x256xf32> to vector<2x4x8x256xf32>
    %29 = vector.shape_cast %28 : vector<2x4x8x256xf32> to vector<64x256xf32>
    %30 = arith.truncf %29 : vector<64x256xf32> to vector<64x256xbf16>
    %c3 = arith.constant 3 : index
    %c0_17 = arith.constant 0 : index
    %c0_18 = arith.constant 0 : index
    %31 = vector.load %arg1[%c3, %c0_17, %c0_18] : memref<9x256x256xbf16, #tpu.memory_space<vmem>>, vector<1x256x256xbf16>
    %32 = vector.shape_cast %31 : vector<1x256x256xbf16> to vector<256x256xbf16>
    %cst_19 = arith.constant dense<0.000000e+00> : vector<64x256xf32>
    %33 = tpu.matmul %30, %32, %cst_19 {dimension_numbers = #tpu.dot_dimension_numbers<[1], [0], [0], [1], [0, 0, 1, 1], [], []>} : vector<64x256xbf16>, vector<256x256xbf16>, vector<64x256xf32> -> vector<64x256xf32>
    %34 = arith.addf %27, %33 : vector<64x256xf32>
    %35 = vector.extract_strided_slice %5 {offsets = [0, 1, 8, 0], sizes = [2, 4, 8, 256], strides = [1, 1, 1, 1]} : vector<2x6x24x256xf32> to vector<2x4x8x256xf32>
    %36 = vector.shape_cast %35 : vector<2x4x8x256xf32> to vector<64x256xf32>
    %37 = arith.truncf %36 : vector<64x256xf32> to vector<64x256xbf16>
    %c4 = arith.constant 4 : index
    %c0_20 = arith.constant 0 : index
    %c0_21 = arith.constant 0 : index
    %38 = vector.load %arg1[%c4, %c0_20, %c0_21] : memref<9x256x256xbf16, #tpu.memory_space<vmem>>, vector<1x256x256xbf16>
    %39 = vector.shape_cast %38 : vector<1x256x256xbf16> to vector<256x256xbf16>
    %cst_22 = arith.constant dense<0.000000e+00> : vector<64x256xf32>
    %40 = tpu.matmul %37, %39, %cst_22 {dimension_numbers = #tpu.dot_dimension_numbers<[1], [0], [0], [1], [0, 0, 1, 1], [], []>} : vector<64x256xbf16>, vector<256x256xbf16>, vector<64x256xf32> -> vector<64x256xf32>
    %41 = arith.addf %34, %40 : vector<64x256xf32>
    %42 = vector.extract_strided_slice %5 {offsets = [0, 1, 9, 0], sizes = [2, 4, 8, 256], strides = [1, 1, 1, 1]} : vector<2x6x24x256xf32> to vector<2x4x8x256xf32>
    %43 = vector.shape_cast %42 : vector<2x4x8x256xf32> to vector<64x256xf32>
    %44 = arith.truncf %43 : vector<64x256xf32> to vector<64x256xbf16>
    %c5 = arith.constant 5 : index
    %c0_23 = arith.constant 0 : index
    %c0_24 = arith.constant 0 : index
    %45 = vector.load %arg1[%c5, %c0_23, %c0_24] : memref<9x256x256xbf16, #tpu.memory_space<vmem>>, vector<1x256x256xbf16>
    %46 = vector.shape_cast %45 : vector<1x256x256xbf16> to vector<256x256xbf16>
    %cst_25 = arith.constant dense<0.000000e+00> : vector<64x256xf32>
    %47 = tpu.matmul %44, %46, %cst_25 {dimension_numbers = #tpu.dot_dimension_numbers<[1], [0], [0], [1], [0, 0, 1, 1], [], []>} : vector<64x256xbf16>, vector<256x256xbf16>, vector<64x256xf32> -> vector<64x256xf32>
    %48 = arith.addf %41, %47 : vector<64x256xf32>
    %49 = vector.extract_strided_slice %5 {offsets = [0, 2, 7, 0], sizes = [2, 4, 8, 256], strides = [1, 1, 1, 1]} : vector<2x6x24x256xf32> to vector<2x4x8x256xf32>
    %50 = vector.shape_cast %49 : vector<2x4x8x256xf32> to vector<64x256xf32>
    %51 = arith.truncf %50 : vector<64x256xf32> to vector<64x256xbf16>
    %c6 = arith.constant 6 : index
    %c0_26 = arith.constant 0 : index
    %c0_27 = arith.constant 0 : index
    %52 = vector.load %arg1[%c6, %c0_26, %c0_27] : memref<9x256x256xbf16, #tpu.memory_space<vmem>>, vector<1x256x256xbf16>
    %53 = vector.shape_cast %52 : vector<1x256x256xbf16> to vector<256x256xbf16>
    %cst_28 = arith.constant dense<0.000000e+00> : vector<64x256xf32>
    %54 = tpu.matmul %51, %53, %cst_28 {dimension_numbers = #tpu.dot_dimension_numbers<[1], [0], [0], [1], [0, 0, 1, 1], [], []>} : vector<64x256xbf16>, vector<256x256xbf16>, vector<64x256xf32> -> vector<64x256xf32>
    %55 = arith.addf %48, %54 : vector<64x256xf32>
    %56 = vector.extract_strided_slice %5 {offsets = [0, 2, 8, 0], sizes = [2, 4, 8, 256], strides = [1, 1, 1, 1]} : vector<2x6x24x256xf32> to vector<2x4x8x256xf32>
    %57 = vector.shape_cast %56 : vector<2x4x8x256xf32> to vector<64x256xf32>
    %58 = arith.truncf %57 : vector<64x256xf32> to vector<64x256xbf16>
    %c7 = arith.constant 7 : index
    %c0_29 = arith.constant 0 : index
    %c0_30 = arith.constant 0 : index
    %59 = vector.load %arg1[%c7, %c0_29, %c0_30] : memref<9x256x256xbf16, #tpu.memory_space<vmem>>, vector<1x256x256xbf16>
    %60 = vector.shape_cast %59 : vector<1x256x256xbf16> to vector<256x256xbf16>
    %cst_31 = arith.constant dense<0.000000e+00> : vector<64x256xf32>
    %61 = tpu.matmul %58, %60, %cst_31 {dimension_numbers = #tpu.dot_dimension_numbers<[1], [0], [0], [1], [0, 0, 1, 1], [], []>} : vector<64x256xbf16>, vector<256x256xbf16>, vector<64x256xf32> -> vector<64x256xf32>
    %62 = arith.addf %55, %61 : vector<64x256xf32>
    %63 = vector.extract_strided_slice %5 {offsets = [0, 2, 9, 0], sizes = [2, 4, 8, 256], strides = [1, 1, 1, 1]} : vector<2x6x24x256xf32> to vector<2x4x8x256xf32>
    %64 = vector.shape_cast %63 : vector<2x4x8x256xf32> to vector<64x256xf32>
    %65 = arith.truncf %64 : vector<64x256xf32> to vector<64x256xbf16>
    %c8 = arith.constant 8 : index
    %c0_32 = arith.constant 0 : index
    %c0_33 = arith.constant 0 : index
    %66 = vector.load %arg1[%c8, %c0_32, %c0_33] : memref<9x256x256xbf16, #tpu.memory_space<vmem>>, vector<1x256x256xbf16>
    %67 = vector.shape_cast %66 : vector<1x256x256xbf16> to vector<256x256xbf16>
    %cst_34 = arith.constant dense<0.000000e+00> : vector<64x256xf32>
    %68 = tpu.matmul %65, %67, %cst_34 {dimension_numbers = #tpu.dot_dimension_numbers<[1], [0], [0], [1], [0, 0, 1, 1], [], []>} : vector<64x256xbf16>, vector<256x256xbf16>, vector<64x256xf32> -> vector<64x256xf32>
    %69 = arith.addf %62, %68 : vector<64x256xf32>
    %c0_35 = arith.constant 0 : index
    %c0_36 = arith.constant 0 : index
    %70 = vector.load %arg4[%c0_35, %c0_36] : memref<1x256xf32, #tpu.memory_space<vmem>>, vector<1x256xf32>
    %c0_37 = arith.constant 0 : index
    %c0_38 = arith.constant 0 : index
    %71 = vector.load %arg5[%c0_37, %c0_38] : memref<1x256xf32, #tpu.memory_space<vmem>>, vector<1x256xf32>
    %cst_39 = arith.constant dense<0.000000e+00> : vector<256xf32>
    %72 = vector.multi_reduction <add>, %69, %cst_39 [0] : vector<64x256xf32> to vector<256xf32>
    %73 = vector.shape_cast %72 : vector<256xf32> to vector<1x256xf32>
    %74 = arith.mulf %69, %69 : vector<64x256xf32>
    %cst_40 = arith.constant dense<0.000000e+00> : vector<256xf32>
    %75 = vector.multi_reduction <add>, %74, %cst_40 [0] : vector<64x256xf32> to vector<256xf32>
    %76 = vector.shape_cast %75 : vector<256xf32> to vector<1x256xf32>
    %cst_41 = arith.constant dense<0.000000e+00> : vector<1x256xf32>
    %77 = tpu.matmul %73, %1, %cst_41 {dimension_numbers = #tpu.dot_dimension_numbers<[1], [0], [0], [1], [0, 0, 1, 1], [], []>} : vector<1x256xf32>, vector<256x256xf32>, vector<1x256xf32> -> vector<1x256xf32>
    %cst_42 = arith.constant dense<0.000000e+00> : vector<1x256xf32>
    %78 = tpu.matmul %76, %1, %cst_42 {dimension_numbers = #tpu.dot_dimension_numbers<[1], [0], [0], [1], [0, 0, 1, 1], [], []>} : vector<1x256xf32>, vector<256x256xf32>, vector<1x256xf32> -> vector<1x256xf32>
    %79 = arith.mulf %77, %77 : vector<1x256xf32>
    %80 = arith.subf %78, %79 : vector<1x256xf32>
    %cst_43 = arith.constant 9.99999974E-6 : f32
    %81 = vector.broadcast %cst_43 : f32 to vector<1x256xf32>
    %82 = arith.addf %80, %81 : vector<1x256xf32>
    %83 = math.rsqrt %82 : vector<1x256xf32>
    %84 = arith.mulf %70, %83 : vector<1x256xf32>
    %85 = arith.mulf %77, %84 : vector<1x256xf32>
    %86 = arith.subf %71, %85 : vector<1x256xf32>
    %87 = vector.broadcast %84 : vector<1x256xf32> to vector<64x256xf32>
    %88 = arith.mulf %69, %87 : vector<64x256xf32>
    %89 = vector.broadcast %86 : vector<1x256xf32> to vector<64x256xf32>
    %90 = arith.addf %88, %89 : vector<64x256xf32>
    %cst_44 = arith.constant 0.000000e+00 : f32
    %91 = vector.broadcast %cst_44 : f32 to vector<64x256xf32>
    %92 = arith.maximumf %90, %91 : vector<64x256xf32>
    %93 = vector.shape_cast %92 : vector<64x256xf32> to vector<2x4x8x256xf32>
    %cst_45 = arith.constant 0.000000e+00 : f32
    %94 = vector.broadcast %cst_45 : f32 to vector<2x4x8x256xf32>
    %95 = tpu.concatenate %94, %93, %94 in 2 : vector<2x4x8x256xf32>, vector<2x4x8x256xf32>, vector<2x4x8x256xf32> -> vector<2x4x24x256xf32>
    %cst_46 = arith.constant 0.000000e+00 : f32
    %96 = vector.broadcast %cst_46 : f32 to vector<2x1x24x256xf32>
    %97 = tpu.concatenate %96, %95, %96 in 1 : vector<2x1x24x256xf32>, vector<2x4x24x256xf32>, vector<2x1x24x256xf32> -> vector<2x6x24x256xf32>
    %cst_47 = arith.constant 0.000000e+00 : f32
    %98 = vector.broadcast %cst_47 : f32 to vector<64x256xf32>
    %99 = vector.extract_strided_slice %97 {offsets = [0, 0, 7, 0], sizes = [2, 4, 8, 256], strides = [1, 1, 1, 1]} : vector<2x6x24x256xf32> to vector<2x4x8x256xf32>
    %100 = vector.shape_cast %99 : vector<2x4x8x256xf32> to vector<64x256xf32>
    %101 = arith.truncf %100 : vector<64x256xf32> to vector<64x256xbf16>
    %c0_48 = arith.constant 0 : index
    %c0_49 = arith.constant 0 : index
    %c0_50 = arith.constant 0 : index
    %102 = vector.load %arg2[%c0_48, %c0_49, %c0_50] : memref<9x256x256xbf16, #tpu.memory_space<vmem>>, vector<1x256x256xbf16>
    %103 = vector.shape_cast %102 : vector<1x256x256xbf16> to vector<256x256xbf16>
    %cst_51 = arith.constant dense<0.000000e+00> : vector<64x256xf32>
    %104 = tpu.matmul %101, %103, %cst_51 {dimension_numbers = #tpu.dot_dimension_numbers<[1], [0], [0], [1], [0, 0, 1, 1], [], []>} : vector<64x256xbf16>, vector<256x256xbf16>, vector<64x256xf32> -> vector<64x256xf32>
    %105 = arith.addf %98, %104 : vector<64x256xf32>
    %106 = vector.extract_strided_slice %97 {offsets = [0, 0, 8, 0], sizes = [2, 4, 8, 256], strides = [1, 1, 1, 1]} : vector<2x6x24x256xf32> to vector<2x4x8x256xf32>
    %107 = vector.shape_cast %106 : vector<2x4x8x256xf32> to vector<64x256xf32>
    %108 = arith.truncf %107 : vector<64x256xf32> to vector<64x256xbf16>
    %c1_52 = arith.constant 1 : index
    %c0_53 = arith.constant 0 : index
    %c0_54 = arith.constant 0 : index
    %109 = vector.load %arg2[%c1_52, %c0_53, %c0_54] : memref<9x256x256xbf16, #tpu.memory_space<vmem>>, vector<1x256x256xbf16>
    %110 = vector.shape_cast %109 : vector<1x256x256xbf16> to vector<256x256xbf16>
    %cst_55 = arith.constant dense<0.000000e+00> : vector<64x256xf32>
    %111 = tpu.matmul %108, %110, %cst_55 {dimension_numbers = #tpu.dot_dimension_numbers<[1], [0], [0], [1], [0, 0, 1, 1], [], []>} : vector<64x256xbf16>, vector<256x256xbf16>, vector<64x256xf32> -> vector<64x256xf32>
    %112 = arith.addf %105, %111 : vector<64x256xf32>
    %113 = vector.extract_strided_slice %97 {offsets = [0, 0, 9, 0], sizes = [2, 4, 8, 256], strides = [1, 1, 1, 1]} : vector<2x6x24x256xf32> to vector<2x4x8x256xf32>
    %114 = vector.shape_cast %113 : vector<2x4x8x256xf32> to vector<64x256xf32>
    %115 = arith.truncf %114 : vector<64x256xf32> to vector<64x256xbf16>
    %c2_56 = arith.constant 2 : index
    %c0_57 = arith.constant 0 : index
    %c0_58 = arith.constant 0 : index
    %116 = vector.load %arg2[%c2_56, %c0_57, %c0_58] : memref<9x256x256xbf16, #tpu.memory_space<vmem>>, vector<1x256x256xbf16>
    %117 = vector.shape_cast %116 : vector<1x256x256xbf16> to vector<256x256xbf16>
    %cst_59 = arith.constant dense<0.000000e+00> : vector<64x256xf32>
    %118 = tpu.matmul %115, %117, %cst_59 {dimension_numbers = #tpu.dot_dimension_numbers<[1], [0], [0], [1], [0, 0, 1, 1], [], []>} : vector<64x256xbf16>, vector<256x256xbf16>, vector<64x256xf32> -> vector<64x256xf32>
    %119 = arith.addf %112, %118 : vector<64x256xf32>
    %120 = vector.extract_strided_slice %97 {offsets = [0, 1, 7, 0], sizes = [2, 4, 8, 256], strides = [1, 1, 1, 1]} : vector<2x6x24x256xf32> to vector<2x4x8x256xf32>
    %121 = vector.shape_cast %120 : vector<2x4x8x256xf32> to vector<64x256xf32>
    %122 = arith.truncf %121 : vector<64x256xf32> to vector<64x256xbf16>
    %c3_60 = arith.constant 3 : index
    %c0_61 = arith.constant 0 : index
    %c0_62 = arith.constant 0 : index
    %123 = vector.load %arg2[%c3_60, %c0_61, %c0_62] : memref<9x256x256xbf16, #tpu.memory_space<vmem>>, vector<1x256x256xbf16>
    %124 = vector.shape_cast %123 : vector<1x256x256xbf16> to vector<256x256xbf16>
    %cst_63 = arith.constant dense<0.000000e+00> : vector<64x256xf32>
    %125 = tpu.matmul %122, %124, %cst_63 {dimension_numbers = #tpu.dot_dimension_numbers<[1], [0], [0], [1], [0, 0, 1, 1], [], []>} : vector<64x256xbf16>, vector<256x256xbf16>, vector<64x256xf32> -> vector<64x256xf32>
    %126 = arith.addf %119, %125 : vector<64x256xf32>
    %127 = vector.extract_strided_slice %97 {offsets = [0, 1, 8, 0], sizes = [2, 4, 8, 256], strides = [1, 1, 1, 1]} : vector<2x6x24x256xf32> to vector<2x4x8x256xf32>
    %128 = vector.shape_cast %127 : vector<2x4x8x256xf32> to vector<64x256xf32>
    %129 = arith.truncf %128 : vector<64x256xf32> to vector<64x256xbf16>
    %c4_64 = arith.constant 4 : index
    %c0_65 = arith.constant 0 : index
    %c0_66 = arith.constant 0 : index
    %130 = vector.load %arg2[%c4_64, %c0_65, %c0_66] : memref<9x256x256xbf16, #tpu.memory_space<vmem>>, vector<1x256x256xbf16>
    %131 = vector.shape_cast %130 : vector<1x256x256xbf16> to vector<256x256xbf16>
    %cst_67 = arith.constant dense<0.000000e+00> : vector<64x256xf32>
    %132 = tpu.matmul %129, %131, %cst_67 {dimension_numbers = #tpu.dot_dimension_numbers<[1], [0], [0], [1], [0, 0, 1, 1], [], []>} : vector<64x256xbf16>, vector<256x256xbf16>, vector<64x256xf32> -> vector<64x256xf32>
    %133 = arith.addf %126, %132 : vector<64x256xf32>
    %134 = vector.extract_strided_slice %97 {offsets = [0, 1, 9, 0], sizes = [2, 4, 8, 256], strides = [1, 1, 1, 1]} : vector<2x6x24x256xf32> to vector<2x4x8x256xf32>
    %135 = vector.shape_cast %134 : vector<2x4x8x256xf32> to vector<64x256xf32>
    %136 = arith.truncf %135 : vector<64x256xf32> to vector<64x256xbf16>
    %c5_68 = arith.constant 5 : index
    %c0_69 = arith.constant 0 : index
    %c0_70 = arith.constant 0 : index
    %137 = vector.load %arg2[%c5_68, %c0_69, %c0_70] : memref<9x256x256xbf16, #tpu.memory_space<vmem>>, vector<1x256x256xbf16>
    %138 = vector.shape_cast %137 : vector<1x256x256xbf16> to vector<256x256xbf16>
    %cst_71 = arith.constant dense<0.000000e+00> : vector<64x256xf32>
    %139 = tpu.matmul %136, %138, %cst_71 {dimension_numbers = #tpu.dot_dimension_numbers<[1], [0], [0], [1], [0, 0, 1, 1], [], []>} : vector<64x256xbf16>, vector<256x256xbf16>, vector<64x256xf32> -> vector<64x256xf32>
    %140 = arith.addf %133, %139 : vector<64x256xf32>
    %141 = vector.extract_strided_slice %97 {offsets = [0, 2, 7, 0], sizes = [2, 4, 8, 256], strides = [1, 1, 1, 1]} : vector<2x6x24x256xf32> to vector<2x4x8x256xf32>
    %142 = vector.shape_cast %141 : vector<2x4x8x256xf32> to vector<64x256xf32>
    %143 = arith.truncf %142 : vector<64x256xf32> to vector<64x256xbf16>
    %c6_72 = arith.constant 6 : index
    %c0_73 = arith.constant 0 : index
    %c0_74 = arith.constant 0 : index
    %144 = vector.load %arg2[%c6_72, %c0_73, %c0_74] : memref<9x256x256xbf16, #tpu.memory_space<vmem>>, vector<1x256x256xbf16>
    %145 = vector.shape_cast %144 : vector<1x256x256xbf16> to vector<256x256xbf16>
    %cst_75 = arith.constant dense<0.000000e+00> : vector<64x256xf32>
    %146 = tpu.matmul %143, %145, %cst_75 {dimension_numbers = #tpu.dot_dimension_numbers<[1], [0], [0], [1], [0, 0, 1, 1], [], []>} : vector<64x256xbf16>, vector<256x256xbf16>, vector<64x256xf32> -> vector<64x256xf32>
    %147 = arith.addf %140, %146 : vector<64x256xf32>
    %148 = vector.extract_strided_slice %97 {offsets = [0, 2, 8, 0], sizes = [2, 4, 8, 256], strides = [1, 1, 1, 1]} : vector<2x6x24x256xf32> to vector<2x4x8x256xf32>
    %149 = vector.shape_cast %148 : vector<2x4x8x256xf32> to vector<64x256xf32>
    %150 = arith.truncf %149 : vector<64x256xf32> to vector<64x256xbf16>
    %c7_76 = arith.constant 7 : index
    %c0_77 = arith.constant 0 : index
    %c0_78 = arith.constant 0 : index
    %151 = vector.load %arg2[%c7_76, %c0_77, %c0_78] : memref<9x256x256xbf16, #tpu.memory_space<vmem>>, vector<1x256x256xbf16>
    %152 = vector.shape_cast %151 : vector<1x256x256xbf16> to vector<256x256xbf16>
    %cst_79 = arith.constant dense<0.000000e+00> : vector<64x256xf32>
    %153 = tpu.matmul %150, %152, %cst_79 {dimension_numbers = #tpu.dot_dimension_numbers<[1], [0], [0], [1], [0, 0, 1, 1], [], []>} : vector<64x256xbf16>, vector<256x256xbf16>, vector<64x256xf32> -> vector<64x256xf32>
    %154 = arith.addf %147, %153 : vector<64x256xf32>
    %155 = vector.extract_strided_slice %97 {offsets = [0, 2, 9, 0], sizes = [2, 4, 8, 256], strides = [1, 1, 1, 1]} : vector<2x6x24x256xf32> to vector<2x4x8x256xf32>
    %156 = vector.shape_cast %155 : vector<2x4x8x256xf32> to vector<64x256xf32>
    %157 = arith.truncf %156 : vector<64x256xf32> to vector<64x256xbf16>
    %c8_80 = arith.constant 8 : index
    %c0_81 = arith.constant 0 : index
    %c0_82 = arith.constant 0 : index
    %158 = vector.load %arg2[%c8_80, %c0_81, %c0_82] : memref<9x256x256xbf16, #tpu.memory_space<vmem>>, vector<1x256x256xbf16>
    %159 = vector.shape_cast %158 : vector<1x256x256xbf16> to vector<256x256xbf16>
    %cst_83 = arith.constant dense<0.000000e+00> : vector<64x256xf32>
    %160 = tpu.matmul %157, %159, %cst_83 {dimension_numbers = #tpu.dot_dimension_numbers<[1], [0], [0], [1], [0, 0, 1, 1], [], []>} : vector<64x256xbf16>, vector<256x256xbf16>, vector<64x256xf32> -> vector<64x256xf32>
    %161 = arith.addf %154, %160 : vector<64x256xf32>
    %c0_84 = arith.constant 0 : index
    %c0_85 = arith.constant 0 : index
    %162 = vector.load %arg6[%c0_84, %c0_85] : memref<1x256xf32, #tpu.memory_space<vmem>>, vector<1x256xf32>
    %c0_86 = arith.constant 0 : index
    %c0_87 = arith.constant 0 : index
    %163 = vector.load %arg7[%c0_86, %c0_87] : memref<1x256xf32, #tpu.memory_space<vmem>>, vector<1x256xf32>
    %cst_88 = arith.constant dense<0.000000e+00> : vector<256xf32>
    %164 = vector.multi_reduction <add>, %161, %cst_88 [0] : vector<64x256xf32> to vector<256xf32>
    %165 = vector.shape_cast %164 : vector<256xf32> to vector<1x256xf32>
    %166 = arith.mulf %161, %161 : vector<64x256xf32>
    %cst_89 = arith.constant dense<0.000000e+00> : vector<256xf32>
    %167 = vector.multi_reduction <add>, %166, %cst_89 [0] : vector<64x256xf32> to vector<256xf32>
    %168 = vector.shape_cast %167 : vector<256xf32> to vector<1x256xf32>
    %cst_90 = arith.constant dense<0.000000e+00> : vector<1x256xf32>
    %169 = tpu.matmul %165, %1, %cst_90 {dimension_numbers = #tpu.dot_dimension_numbers<[1], [0], [0], [1], [0, 0, 1, 1], [], []>} : vector<1x256xf32>, vector<256x256xf32>, vector<1x256xf32> -> vector<1x256xf32>
    %cst_91 = arith.constant dense<0.000000e+00> : vector<1x256xf32>
    %170 = tpu.matmul %168, %1, %cst_91 {dimension_numbers = #tpu.dot_dimension_numbers<[1], [0], [0], [1], [0, 0, 1, 1], [], []>} : vector<1x256xf32>, vector<256x256xf32>, vector<1x256xf32> -> vector<1x256xf32>
    %171 = arith.mulf %169, %169 : vector<1x256xf32>
    %172 = arith.subf %170, %171 : vector<1x256xf32>
    %cst_92 = arith.constant 9.99999974E-6 : f32
    %173 = vector.broadcast %cst_92 : f32 to vector<1x256xf32>
    %174 = arith.addf %172, %173 : vector<1x256xf32>
    %175 = math.rsqrt %174 : vector<1x256xf32>
    %176 = arith.mulf %162, %175 : vector<1x256xf32>
    %177 = arith.mulf %169, %176 : vector<1x256xf32>
    %178 = arith.subf %163, %177 : vector<1x256xf32>
    %179 = vector.broadcast %176 : vector<1x256xf32> to vector<64x256xf32>
    %180 = arith.mulf %161, %179 : vector<64x256xf32>
    %181 = vector.broadcast %178 : vector<1x256xf32> to vector<64x256xf32>
    %182 = arith.addf %180, %181 : vector<64x256xf32>
    %183 = vector.shape_cast %0 : vector<2x4x8x256xf32> to vector<64x256xf32>
    %184 = arith.addf %182, %183 : vector<64x256xf32>
    %cst_93 = arith.constant 0.000000e+00 : f32
    %185 = vector.broadcast %cst_93 : f32 to vector<64x256xf32>
    %186 = arith.maximumf %184, %185 : vector<64x256xf32>
    %c0_94 = arith.constant 0 : index
    %c0_95 = arith.constant 0 : index
    %187 = vector.load %arg8[%c0_94, %c0_95] : memref<64x256xf32, #tpu.memory_space<vmem>>, vector<64x256xf32>
    tpu.vector_store %arg8[%c0_94, %c0_95], %186 {strides = array<i32>} : memref<64x256xf32, #tpu.memory_space<vmem>>, vector<64x256xf32>,
    return
  }
}

</mosaic_0001>

<llo_original>
// kernel: tpu_custom_call.1
$region0: #{tpu_custom_call.1}
  #allocation0 [shape = 'u32[]', space=smem, size = 0x4, offset = 0x4, fixed_abs, tag = 'smem constant byte address 0x4 - core index']
  #allocation1 [shape = 'u32[144,128]{1,0:T(1,128)}', space=vmem, size = 0x12000, scoped, tag = 'internal scratch']
  %s0 = inlined_call_operand.hbm [shape: f32[2,4,8,256], index: 0, kind: input, shape index: {}]
  %s1 = inlined_call_operand.hbm [shape: bf16[9,256,256], index: 1, kind: input, shape index: {}]
  %s2 = inlined_call_operand.hbm [shape: bf16[9,256,256], index: 2, kind: input, shape index: {}]
  %s3 = inlined_call_operand.hbm [shape: f32[256,256], index: 3, kind: input, shape index: {}]
  %s4 = inlined_call_operand.hbm [shape: f32[1,256], index: 4, kind: input, shape index: {}]
  %s5 = inlined_call_operand.hbm [shape: f32[1,256], index: 5, kind: input, shape index: {}]
  %s6 = inlined_call_operand.hbm [shape: f32[1,256], index: 6, kind: input, shape index: {}]
  %s7 = inlined_call_operand.hbm [shape: f32[1,256], index: 7, kind: input, shape index: {}]
  %s8 = inlined_call_operand.hbm [shape: f32[64,256], index: 8, kind: output, shape index: {}]
  %s9 = sld [smem:[#allocation0]]
  $region74: #{tpu_custom_call.1} parent=0
    _
  %s11 = ssub.s32 1, %s9
  %s12 = scalar_select 0, %s11, %s9
  $region1: #{tpu_custom_call.1} parent=0
    #allocation2 [shape = 'u8[65536]{0}', space=vmem, size = 0x10000, scoped, tag = 'input window, operand 0, single buffered']
    #allocation3 [shape = 's32[1]{0}', space=sflag, size = 0x4, scoped, tag = 'scoped memory for tpu_custom_call.1']
    #allocation4 [shape = 's32[1]{0}', space=sflag, size = 0x4, scoped, tag = 'scoped memory for tpu_custom_call.1']
    #allocation5 [shape = 'u8[1179648]{0}', space=vmem, size = 0x120000, scoped, tag = 'input window, operand 1, single buffered']
    #allocation6 [shape = 's32[1]{0}', space=sflag, size = 0x4, scoped, tag = 'scoped memory for tpu_custom_call.1']
    #allocation7 [shape = 'u8[1179648]{0}', space=vmem, size = 0x120000, scoped, tag = 'input window, operand 2, single buffered']
    #allocation8 [shape = 'u8[262144]{0}', space=vmem, size = 0x40000, scoped, tag = 'input window, operand 3, single buffered']
    #allocation9 [shape = 's32[1]{0}', space=sflag, size = 0x4, scoped, tag = 'scoped memory for tpu_custom_call.1']
    #allocation10 [shape = 'u8[1024]{0}', space=vmem, size = 0x400, scoped, tag = 'input window, operand 4, single buffered']
    #allocation11 [shape = 'u8[1024]{0}', space=vmem, size = 0x400, scoped, tag = 'input window, operand 5, single buffered']
    #allocation12 [shape = 's32[1]{0}', space=sflag, size = 0x4, scoped, tag = 'scoped memory for tpu_custom_call.1']
    #allocation13 [shape = 'u8[1024]{0}', space=vmem, size = 0x400, scoped, tag = 'input window, operand 6, single buffered']
    #allocation14 [shape = 'u8[1024]{0}', space=vmem, size = 0x400, scoped, tag = 'input window, operand 7, single buffered']
    #allocation15 [shape = 's32[1]{0}', space=sflag, size = 0x4, scoped, tag = 'scoped memory for tpu_custom_call.1']
    #allocation16 [shape = 'u8[65536]{0}', space=vmem, size = 0x10000, scoped, tag = 'output window, operand 0, single buffered']
    %13 = vsyncpa [#allocation3], 0
    %14 = vsyncpa [#allocation6], 0
    %15 = vsyncpa [#allocation9], 0
    %16 = vsyncpa [#allocation12], 0
    %17 = vsyncpa [#allocation15], 0
    %18 = vsyncpa [#allocation4], 0
    // Predicated region
    $region2: #{tpu_custom_call.1} parent=1 // pred_check
      _
    $region3: #{tpu_custom_call.1} parent=1 // pred_check_branch
      %20 = sbr.rel (0) target = $region5
    $region4: #{tpu_custom_call.1} parent=1 // pred_region
      %s22 = ssub.s32 2048, 2048
      %23 = vsyncadd [#allocation3], %s22
      %s24 = sshll.u32 [#allocation2], 4
      %s25 = int_to_ptr.vmem [resolvable:$true] %s24
      %30 = dma.hbm_to_vmem [thread:$0]  %s0, 2048, %s25, [#allocation3], 256, 256, 16
    $region5: #{tpu_custom_call.1} parent=1 // pred_fallthru
      _
    // Predicated region
    $region6: #{tpu_custom_call.1} parent=1 // pred_check
      _
    $region7: #{tpu_custom_call.1} parent=1 // pred_check_branch
      %32 = sbr.rel (0) target = $region9
    $region8: #{tpu_custom_call.1} parent=1 // pred_region
      %s34 = ssub.s32 36864, 36864
      %35 = vsyncadd [#allocation6], %s34
      %s36 = sshll.u32 [#allocation5], 4
      %s37 = int_to_ptr.vmem [resolvable:$true] %s36
      %42 = dma.hbm_to_vmem [thread:$0]  %s1, 36864, %s37, [#allocation6], 128, 128, 8
    $region9: #{tpu_custom_call.1} parent=1 // pred_fallthru
      _
    // Predicated region
    $region10: #{tpu_custom_call.1} parent=1 // pred_check
      _
    $region11: #{tpu_custom_call.1} parent=1 // pred_check_branch
      %44 = sbr.rel (0) target = $region13
    $region12: #{tpu_custom_call.1} parent=1 // pred_region
      %s46 = ssub.s32 36864, 36864
      %47 = vsyncadd [#allocation6], %s46
      %s48 = sshll.u32 [#allocation7], 4
      %s49 = int_to_ptr.vmem [resolvable:$true] %s48
      %54 = dma.hbm_to_vmem [thread:$0]  %s2, 36864, %s49, [#allocation6], 128, 128, 8
    $region13: #{tpu_custom_call.1} parent=1 // pred_fallthru
      _
    // Predicated region
    $region14: #{tpu_custom_call.1} parent=1 // pred_check
      _
    $region15: #{tpu_custom_call.1} parent=1 // pred_check_branch
      %56 = sbr.rel (0) target = $region17
    $region16: #{tpu_custom_call.1} parent=1 // pred_region
      %s58 = ssub.s32 8192, 8192
      %59 = vsyncadd [#allocation9], %s58
      %s60 = sshll.u32 [#allocation8], 4
      %s61 = int_to_ptr.vmem [resolvable:$true] %s60
      %66 = dma.hbm_to_vmem [thread:$0]  %s3, 8192, %s61, [#allocation9], 256, 256, 16
    $region17: #{tpu_custom_call.1} parent=1 // pred_fallthru
      _
    // Predicated region
    $region18: #{tpu_custom_call.1} parent=1 // pred_check
      _
    $region19: #{tpu_custom_call.1} parent=1 // pred_check_branch
      %68 = sbr.rel (0) target = $region21
    $region20: #{tpu_custom_call.1} parent=1 // pred_region
      %s70 = ssub.s32 32, 32
      %71 = vsyncadd [#allocation9], %s70
      %s73 = sshll.u32 [#allocation10], 4
      %s74 = int_to_ptr.vmem [resolvable:$true] %s73
      %76 = dma.hbm_to_vmem [thread:$0]  %s4, 32, %s74, [#allocation9]
    $region21: #{tpu_custom_call.1} parent=1 // pred_fallthru
      _
    // Predicated region
    $region22: #{tpu_custom_call.1} parent=1 // pred_check
      _
    $region23: #{tpu_custom_call.1} parent=1 // pred_check_branch
      %78 = sbr.rel (0) target = $region25
    $region24: #{tpu_custom_call.1} parent=1 // pred_region
      %s80 = ssub.s32 32, 32
      %81 = vsyncadd [#allocation12], %s80
      %s83 = sshll.u32 [#allocation11], 4
      %s84 = int_to_ptr.vmem [resolvable:$true] %s83
      %86 = dma.hbm_to_vmem [thread:$0]  %s5, 32, %s84, [#allocation12]
    $region25: #{tpu_custom_call.1} parent=1 // pred_fallthru
      _
    // Predicated region
    $region26: #{tpu_custom_call.1} parent=1 // pred_check
      _
    $region27: #{tpu_custom_call.1} parent=1 // pred_check_branch
      %88 = sbr.rel (0) target = $region29
    $region28: #{tpu_custom_call.1} parent=1 // pred_region
      %s90 = ssub.s32 32, 32
      %91 = vsyncadd [#allocation12], %s90
      %s93 = sshll.u32 [#allocation13], 4
      %s94 = int_to_ptr.vmem [resolvable:$true] %s93
      %96 = dma.hbm_to_vmem [thread:$0]  %s6, 32, %s94, [#allocation12]
    $region29: #{tpu_custom_call.1} parent=1 // pred_fallthru
      _
    // Predicated region
    $region30: #{tpu_custom_call.1} parent=1 // pred_check
      _
    $region31: #{tpu_custom_call.1} parent=1 // pred_check_branch
      %98 = sbr.rel (0) target = $region33
    $region32: #{tpu_custom_call.1} parent=1 // pred_region
      %s100 = ssub.s32 32, 32
      %101 = vsyncadd [#allocation15], %s100
      %s103 = sshll.u32 [#allocation14], 4
      %s104 = int_to_ptr.vmem [resolvable:$true] %s103
      %106 = dma.hbm_to_vmem [thread:$0]  %s7, 32, %s104, [#allocation15]
    $region33: #{tpu_custom_call.1} parent=1 // pred_fallthru
      _
    // Predicated region
    $region34: #{tpu_custom_call.1} parent=1 // pred_check
      _
    $region35: #{tpu_custom_call.1} parent=1 // pred_check_branch
      %108 = sbr.rel (0) target = $region37
    $region36: #{tpu_custom_call.1} parent=1 // pred_region
      %109 = dma.done [#allocation3], 2048
    $region37: #{tpu_custom_call.1} parent=1 // pred_fallthru
      _
    // Predicated region
    $region38: #{tpu_custom_call.1} parent=1 // pred_check
      _
    $region39: #{tpu_custom_call.1} parent=1 // pred_check_branch
      %111 = sbr.rel (0) target = $region41
    $region40: #{tpu_custom_call.1} parent=1 // pred_region
      %112 = dma.done [#allocation6], 36864
    $region41: #{tpu_custom_call.1} parent=1 // pred_fallthru
      _
    // Predicated region
    $region42: #{tpu_custom_call.1} parent=1 // pred_check
      _
    $region43: #{tpu_custom_call.1} parent=1 // pred_check_branch
      %114 = sbr.rel (0) target = $region45
    $region44: #{tpu_custom_call.1} parent=1 // pred_region
      %115 = dma.done [#allocation6], 36864
    $region45: #{tpu_custom_call.1} parent=1 // pred_fallthru
      _
    // Predicated region
    $region46: #{tpu_custom_call.1} parent=1 // pred_check
      _
    $region47: #{tpu_custom_call.1} parent=1 // pred_check_branch
      %117 = sbr.rel (0) target = $region49
    $region48: #{tpu_custom_call.1} parent=1 // pred_region
      %118 = dma.done [#allocation9], 8192
    $region49: #{tpu_custom_call.1} parent=1 // pred_fallthru
      _
    // Predicated region
    $region50: #{tpu_custom_call.1} parent=1 // pred_check
      _
    $region51: #{tpu_custom_call.1} parent=1 // pred_check_branch
      %120 = sbr.rel (0) target = $region53
    $region52: #{tpu_custom_call.1} parent=1 // pred_region
      %121 = dma.done [#allocation9], 32
    $region53: #{tpu_custom_call.1} parent=1 // pred_fallthru
      _
    // Predicated region
    $region54: #{tpu_custom_call.1} parent=1 // pred_check
      _
    $region55: #{tpu_custom_call.1} parent=1 // pred_check_branch
      %123 = sbr.rel (0) target = $region57
    $region56: #{tpu_custom_call.1} parent=1 // pred_region
      %124 = dma.done [#allocation12], 32
    $region57: #{tpu_custom_call.1} parent=1 // pred_fallthru
      _
    // Predicated region
    $region58: #{tpu_custom_call.1} parent=1 // pred_check
      _
    $region59: #{tpu_custom_call.1} parent=1 // pred_check_branch
      %126 = sbr.rel (0) target = $region61
    $region60: #{tpu_custom_call.1} parent=1 // pred_region
      %127 = dma.done [#allocation12], 32
    $region61: #{tpu_custom_call.1} parent=1 // pred_fallthru
      _
    // Predicated region
    $region62: #{tpu_custom_call.1} parent=1 // pred_check
      _
    $region63: #{tpu_custom_call.1} parent=1 // pred_check_branch
      %129 = sbr.rel (0) target = $region65
    $region64: #{tpu_custom_call.1} parent=1 // pred_region
      %130 = dma.done [#allocation15], 32
    $region65: #{tpu_custom_call.1} parent=1 // pred_fallthru
      _
    %v131 = vld [vmem:[#allocation2] sm:$0xff]
    %v132 = vld [vmem:[#allocation2 + $0x8] sm:$0xff]
    %v133 = vld [vmem:[#allocation2 + $0x10] sm:$0xff]
    %v134 = vld [vmem:[#allocation2 + $0x18] sm:$0xff]
    %v135 = vld [vmem:[#allocation2 + $0x20] sm:$0xff]
    %v136 = vld [vmem:[#allocation2 + $0x28] sm:$0xff]
    %v137 = vld [vmem:[#allocation2 + $0x30] sm:$0xff]
    %v138 = vld [vmem:[#allocation2 + $0x38] sm:$0xff]
    %v139 = vld [vmem:[#allocation2 + $0x40] sm:$0xff]
    %v140 = vld [vmem:[#allocation2 + $0x48] sm:$0xff]
    %v141 = vld [vmem:[#allocation2 + $0x50] sm:$0xff]
    %v142 = vld [vmem:[#allocation2 + $0x58] sm:$0xff]
    %v143 = vld [vmem:[#allocation2 + $0x60] sm:$0xff]
    %v144 = vld [vmem:[#allocation2 + $0x68] sm:$0xff]
    %v145 = vld [vmem:[#allocation2 + $0x70] sm:$0xff]
    %v146 = vld [vmem:[#allocation2 + $0x78] sm:$0xff]
    %v147 = vld [vmem:[#allocation8] sm:$0xff]
    %v148 = vld [vmem:[#allocation8 + $0x8] sm:$0xff]
    %v149 = vld [vmem:[#allocation8 + $0x10] sm:$0xff]
    %v150 = vld [vmem:[#allocation8 + $0x18] sm:$0xff]
    %v151 = vld [vmem:[#allocation8 + $0x20] sm:$0xff]
    %v152 = vld [vmem:[#allocation8 + $0x28] sm:$0xff]
    %v153 = vld [vmem:[#allocation8 + $0x30] sm:$0xff]
    %v154 = vld [vmem:[#allocation8 + $0x38] sm:$0xff]
    %v155 = vld [vmem:[#allocation8 + $0x40] sm:$0xff]
    %v156 = vld [vmem:[#allocation8 + $0x48] sm:$0xff]
    %v157 = vld [vmem:[#allocation8 + $0x50] sm:$0xff]
    %v158 = vld [vmem:[#allocation8 + $0x58] sm:$0xff]
    %v159 = vld [vmem:[#allocation8 + $0x60] sm:$0xff]
    %v160 = vld [vmem:[#allocation8 + $0x68] sm:$0xff]
    %v161 = vld [vmem:[#allocation8 + $0x70] sm:$0xff]
    %v162 = vld [vmem:[#allocation8 + $0x78] sm:$0xff]
    %v163 = vld [vmem:[#allocation8 + $0x80] sm:$0xff]
    %v164 = vld [vmem:[#allocation8 + $0x88] sm:$0xff]
    %v165 = vld [vmem:[#allocation8 + $0x90] sm:$0xff]
    %v166 = vld [vmem:[#allocation8 + $0x98] sm:$0xff]
    %v167 = vld [vmem:[#allocation8 + $0xa0] sm:$0xff]
    %v168 = vld [vmem:[#allocation8 + $0xa8] sm:$0xff]
    %v169 = vld [vmem:[#allocation8 + $0xb0] sm:$0xff]
    %v170 = vld [vmem:[#allocation8 + $0xb8] sm:$0xff]
    %v171 = vld [vmem:[#allocation8 + $0xc0] sm:$0xff]
    %v172 = vld [vmem:[#allocation8 + $0xc8] sm:$0xff]
    %v173 = vld [vmem:[#allocation8 + $0xd0] sm:$0xff]
    %v174 = vld [vmem:[#allocation8 + $0xd8] sm:$0xff]
    %v175 = vld [vmem:[#allocation8 + $0xe0] sm:$0xff]
    %v176 = vld [vmem:[#allocation8 + $0xe8] sm:$0xff]
    %v177 = vld [vmem:[#allocation8 + $0xf0] sm:$0xff]
    %v178 = vld [vmem:[#allocation8 + $0xf8] sm:$0xff]
    %v179 = vld [vmem:[#allocation8 + $0x100] sm:$0xff]
    %v180 = vld [vmem:[#allocation8 + $0x108] sm:$0xff]
    %v181 = vld [vmem:[#allocation8 + $0x110] sm:$0xff]
    %v182 = vld [vmem:[#allocation8 + $0x118] sm:$0xff]
    %v183 = vld [vmem:[#allocation8 + $0x120] sm:$0xff]
    %v184 = vld [vmem:[#allocation8 + $0x128] sm:$0xff]
    %v185 = vld [vmem:[#allocation8 + $0x130] sm:$0xff]
    %v186 = vld [vmem:[#allocation8 + $0x138] sm:$0xff]
    %v187 = vld [vmem:[#allocation8 + $0x140] sm:$0xff]
    %v188 = vld [vmem:[#allocation8 + $0x148] sm:$0xff]
    %v189 = vld [vmem:[#allocation8 + $0x150] sm:$0xff]
    %v190 = vld [vmem:[#allocation8 + $0x158] sm:$0xff]
    %v191 = vld [vmem:[#allocation8 + $0x160] sm:$0xff]
    %v192 = vld [vmem:[#allocation8 + $0x168] sm:$0xff]
    %v193 = vld [vmem:[#allocation8 + $0x170] sm:$0xff]
    %v194 = vld [vmem:[#allocation8 + $0x178] sm:$0xff]
    %v195 = vld [vmem:[#allocation8 + $0x180] sm:$0xff]
    %v196 = vld [vmem:[#allocation8 + $0x188] sm:$0xff]
    %v197 = vld [vmem:[#allocation8 + $0x190] sm:$0xff]
    %v198 = vld [vmem:[#allocation8 + $0x198] sm:$0xff]
    %v199 = vld [vmem:[#allocation8 + $0x1a0] sm:$0xff]
    %v200 = vld [vmem:[#allocation8 + $0x1a8] sm:$0xff]
    %v201 = vld [vmem:[#allocation8 + $0x1b0] sm:$0xff]
    %v202 = vld [vmem:[#allocation8 + $0x1b8] sm:$0xff]
    %v203 = vld [vmem:[#allocation8 + $0x1c0] sm:$0xff]
    %v204 = vld [vmem:[#allocation8 + $0x1c8] sm:$0xff]
    %v205 = vld [vmem:[#allocation8 + $0x1d0] sm:$0xff]
    %v206 = vld [vmem:[#allocation8 + $0x1d8] sm:$0xff]
    %v207 = vld [vmem:[#allocation8 + $0x1e0] sm:$0xff]
    %v208 = vld [vmem:[#allocation8 + $0x1e8] sm:$0xff]
    %v209 = vld [vmem:[#allocation8 + $0x1f0] sm:$0xff]
    %v210 = vld [vmem:[#allocation8 + $0x1f8] sm:$0xff]
    %vm224 = vcmask 1040384
    %v225 = vrot.slane 0.0, 7
    %v226 = vsel %vm224, %v225, %v225
    %v227 = vrot.slane %v131, 7
    %v228 = vsel %vm224, %v225, %v227
    %v229 = vrot.slane %v132, 7
    %v230 = vsel %vm224, %v225, %v229
    %v231 = vrot.slane %v133, 7
    %v232 = vsel %vm224, %v225, %v231
    %v233 = vrot.slane %v134, 7
    %v234 = vsel %vm224, %v225, %v233
    %v235 = vrot.slane %v135, 7
    %v236 = vsel %vm224, %v225, %v235
    %v237 = vrot.slane %v136, 7
    %v238 = vsel %vm224, %v225, %v237
    %v239 = vrot.slane %v139, 7
    %v240 = vsel %vm224, %v225, %v239
    %v241 = vrot.slane %v140, 7
    %v242 = vsel %vm224, %v225, %v241
    %v243 = vrot.slane %v141, 7
    %v244 = vsel %vm224, %v225, %v243
    %v245 = vrot.slane %v142, 7
    %v246 = vsel %vm224, %v225, %v245
    %v247 = vrot.slane %v143, 7
    %v248 = vsel %vm224, %v225, %v247
    %v249 = vrot.slane %v144, 7
    %v250 = vsel %vm224, %v225, %v249
    %v264 = vpack.c.bf16 %v228, %v226
    %v265 = vpack.c.bf16 %v230, %v226
    %v266 = vpack.c.bf16 %v236, %v232
    %v267 = vpack.c.bf16 %v238, %v234
    %v268 = vpack.c.bf16 %v240, %v226
    %v269 = vpack.c.bf16 %v242, %v226
    %v270 = vpack.c.bf16 %v248, %v244
    %v271 = vpack.c.bf16 %v250, %v246
    %v272 = vld [vmem:[#allocation5] sm:$0xff]
    %v273 = vld [vmem:[#allocation5 + $0x8] sm:$0xff]
    %v274 = vld [vmem:[#allocation5 + $0x10] sm:$0xff]
    %v275 = vld [vmem:[#allocation5 + $0x18] sm:$0xff]
    %v276 = vld [vmem:[#allocation5 + $0x20] sm:$0xff]
    %v277 = vld [vmem:[#allocation5 + $0x28] sm:$0xff]
    %v278 = vld [vmem:[#allocation5 + $0x30] sm:$0xff]
    %v279 = vld [vmem:[#allocation5 + $0x38] sm:$0xff]
    %v280 = vld [vmem:[#allocation5 + $0x40] sm:$0xff]
    %v281 = vld [vmem:[#allocation5 + $0x48] sm:$0xff]
    %v282 = vld [vmem:[#allocation5 + $0x50] sm:$0xff]
    %v283 = vld [vmem:[#allocation5 + $0x58] sm:$0xff]
    %v284 = vld [vmem:[#allocation5 + $0x60] sm:$0xff]
    %v285 = vld [vmem:[#allocation5 + $0x68] sm:$0xff]
    %v286 = vld [vmem:[#allocation5 + $0x70] sm:$0xff]
    %v287 = vld [vmem:[#allocation5 + $0x78] sm:$0xff]
    %v288 = vld [vmem:[#allocation5 + $0x80] sm:$0xff]
    %v289 = vld [vmem:[#allocation5 + $0x88] sm:$0xff]
    %v290 = vld [vmem:[#allocation5 + $0x90] sm:$0xff]
    %v291 = vld [vmem:[#allocation5 + $0x98] sm:$0xff]
    %v292 = vld [vmem:[#allocation5 + $0xa0] sm:$0xff]
    %v293 = vld [vmem:[#allocation5 + $0xa8] sm:$0xff]
    %v294 = vld [vmem:[#allocation5 + $0xb0] sm:$0xff]
    %v295 = vld [vmem:[#allocation5 + $0xb8] sm:$0xff]
    %v296 = vld [vmem:[#allocation5 + $0xc0] sm:$0xff]
    %v297 = vld [vmem:[#allocation5 + $0xc8] sm:$0xff]
    %v298 = vld [vmem:[#allocation5 + $0xd0] sm:$0xff]
    %v299 = vld [vmem:[#allocation5 + $0xd8] sm:$0xff]
    %v300 = vld [vmem:[#allocation5 + $0xe0] sm:$0xff]
    %v301 = vld [vmem:[#allocation5 + $0xe8] sm:$0xff]
    %v302 = vld [vmem:[#allocation5 + $0xf0] sm:$0xff]
    %v303 = vld [vmem:[#allocation5 + $0xf8] sm:$0xff]
    %v304 = vpack.c.bf16 %v131, 0.0
    %v305 = vpack.c.bf16 %v132, 0.0
    %v306 = vpack.c.bf16 %v135, %v133
    %v307 = vpack.c.bf16 %v136, %v134
    %v308 = vpack.c.bf16 %v139, 0.0
    %v309 = vpack.c.bf16 %v140, 0.0
    %v310 = vpack.c.bf16 %v143, %v141
    %v311 = vpack.c.bf16 %v144, %v142
    %s312 = scalar_lea.vmem [#allocation5], 256
    %v313 = vld [vmem:[%s312] sm:$0xff]
    %v314 = vld [vmem:[%s312 + $0x8] sm:$0xff]
    %v315 = vld [vmem:[%s312 + $0x10] sm:$0xff]
    %v316 = vld [vmem:[%s312 + $0x18] sm:$0xff]
    %v317 = vld [vmem:[%s312 + $0x20] sm:$0xff]
    %v318 = vld [vmem:[%s312 + $0x28] sm:$0xff]
    %v319 = vld [vmem:[%s312 + $0x30] sm:$0xff]
    %v320 = vld [vmem:[%s312 + $0x38] sm:$0xff]
    %v321 = vld [vmem:[%s312 + $0x40] sm:$0xff]
    %v322 = vld [vmem:[%s312 + $0x48] sm:$0xff]
    %v323 = vld [vmem:[%s312 + $0x50] sm:$0xff]
    %v324 = vld [vmem:[%s312 + $0x58] sm:$0xff]
    %v325 = vld [vmem:[%s312 + $0x60] sm:$0xff]
    %v326 = vld [vmem:[%s312 + $0x68] sm:$0xff]
    %v327 = vld [vmem:[%s312 + $0x70] sm:$0xff]
    %v328 = vld [vmem:[%s312 + $0x78] sm:$0xff]
    %v329 = vld [vmem:[%s312 + $0x80] sm:$0xff]
    %v330 = vld [vmem:[%s312 + $0x88] sm:$0xff]
    %v331 = vld [vmem:[%s312 + $0x90] sm:$0xff]
    %v332 = vld [vmem:[%s312 + $0x98] sm:$0xff]
    %v333 = vld [vmem:[%s312 + $0xa0] sm:$0xff]
    %v334 = vld [vmem:[%s312 + $0xa8] sm:$0xff]
    %v335 = vld [vmem:[%s312 + $0xb0] sm:$0xff]
    %v336 = vld [vmem:[%s312 + $0xb8] sm:$0xff]
    %v337 = vld [vmem:[%s312 + $0xc0] sm:$0xff]
    %v338 = vld [vmem:[%s312 + $0xc8] sm:$0xff]
    %v339 = vld [vmem:[%s312 + $0xd0] sm:$0xff]
    %v340 = vld [vmem:[%s312 + $0xd8] sm:$0xff]
    %v341 = vld [vmem:[%s312 + $0xe0] sm:$0xff]
    %v342 = vld [vmem:[%s312 + $0xe8] sm:$0xff]
    %v343 = vld [vmem:[%s312 + $0xf0] sm:$0xff]
    %v344 = vld [vmem:[%s312 + $0xf8] sm:$0xff]
    %v377 = vunpack.c.l.b16 %v313
    %v378 = vunpack.c.h.b16 %v313
    %v379 = vunpack.c.l.b16 %v314
    %v380 = vunpack.c.h.b16 %v314
    %v381 = vunpack.c.l.b16 %v315
    %v382 = vunpack.c.h.b16 %v315
    %v383 = vunpack.c.l.b16 %v316
    %v384 = vunpack.c.h.b16 %v316
    %v385 = vunpack.c.l.b16 %v317
    %v386 = vunpack.c.h.b16 %v317
    %v387 = vunpack.c.l.b16 %v318
    %v388 = vunpack.c.h.b16 %v318
    %v389 = vunpack.c.l.b16 %v319
    %v390 = vunpack.c.h.b16 %v319
    %v391 = vunpack.c.l.b16 %v320
    %v392 = vunpack.c.h.b16 %v320
    %v393 = vunpack.c.l.b16 %v321
    %v394 = vunpack.c.h.b16 %v321
    %v395 = vunpack.c.l.b16 %v322
    %v396 = vunpack.c.h.b16 %v322
    %v397 = vunpack.c.l.b16 %v323
    %v398 = vunpack.c.h.b16 %v323
    %v399 = vunpack.c.l.b16 %v324
    %v400 = vunpack.c.h.b16 %v324
    %v401 = vunpack.c.l.b16 %v325
    %v402 = vunpack.c.h.b16 %v325
    %v403 = vunpack.c.l.b16 %v326
    %v404 = vunpack.c.h.b16 %v326
    %v405 = vunpack.c.l.b16 %v327
    %v406 = vunpack.c.h.b16 %v327
    %v407 = vunpack.c.l.b16 %v328
    %v408 = vunpack.c.h.b16 %v328
    %v409 = vunpack.c.l.b16 %v329
    %v410 = vunpack.c.h.b16 %v329
    %v411 = vunpack.c.l.b16 %v330
    %v412 = vunpack.c.h.b16 %v330
    %v413 = vunpack.c.l.b16 %v331
    %v414 = vunpack.c.h.b16 %v331
    %v415 = vunpack.c.l.b16 %v332
    %v416 = vunpack.c.h.b16 %v332
    %v417 = vunpack.c.l.b16 %v333
    %v418 = vunpack.c.h.b16 %v333
    %v419 = vunpack.c.l.b16 %v334
    %v420 = vunpack.c.h.b16 %v334
    %v421 = vunpack.c.l.b16 %v335
    %v422 = vunpack.c.h.b16 %v335
    %v423 = vunpack.c.l.b16 %v336
    %v424 = vunpack.c.h.b16 %v336
    %v425 = vunpack.c.l.b16 %v337
    %v426 = vunpack.c.h.b16 %v337
    %v427 = vunpack.c.l.b16 %v338
    %v428 = vunpack.c.h.b16 %v338
    %v429 = vunpack.c.l.b16 %v339
    %v430 = vunpack.c.h.b16 %v339
    %v431 = vunpack.c.l.b16 %v340
    %v432 = vunpack.c.h.b16 %v340
    %v433 = vunpack.c.l.b16 %v341
    %v434 = vunpack.c.h.b16 %v341
    %v435 = vunpack.c.l.b16 %v342
    %v436 = vunpack.c.h.b16 %v342
    %v437 = vunpack.c.l.b16 %v343
    %v438 = vunpack.c.h.b16 %v343
    %v439 = vunpack.c.l.b16 %v344
    %v440 = vunpack.c.h.b16 %v344
    %v441 = vpack.c.b16 %v379, %v377
    %v442 = vpack.c.b16 %v380, %v378
    %v443 = vpack.c.b16 %v383, %v381
    %v444 = vpack.c.b16 %v384, %v382
    %v445 = vpack.c.b16 %v387, %v385
    %v446 = vpack.c.b16 %v388, %v386
    %v447 = vpack.c.b16 %v391, %v389
    %v448 = vpack.c.b16 %v392, %v390
    %v449 = vpack.c.b16 %v395, %v393
    %v450 = vpack.c.b16 %v396, %v394
    %v451 = vpack.c.b16 %v399, %v397
    %v452 = vpack.c.b16 %v400, %v398
    %v453 = vpack.c.b16 %v403, %v401
    %v454 = vpack.c.b16 %v404, %v402
    %v455 = vpack.c.b16 %v407, %v405
    %v456 = vpack.c.b16 %v408, %v406
    %v457 = vpack.c.b16 %v411, %v409
    %v458 = vpack.c.b16 %v412, %v410
    %v459 = vpack.c.b16 %v415, %v413
    %v460 = vpack.c.b16 %v416, %v414
    %v461 = vpack.c.b16 %v419, %v417
    %v462 = vpack.c.b16 %v420, %v418
    %v463 = vpack.c.b16 %v423, %v421
    %v464 = vpack.c.b16 %v424, %v422
    %v465 = vpack.c.b16 %v427, %v425
    %v466 = vpack.c.b16 %v428, %v426
    %v467 = vpack.c.b16 %v431, %v429
    %v468 = vpack.c.b16 %v432, %v430
    %v469 = vpack.c.b16 %v435, %v433
    %v470 = vpack.c.b16 %v436, %v434
    %v471 = vpack.c.b16 %v439, %v437
    %v472 = vpack.c.b16 %v440, %v438
    %505 = vmatprep.subr.bf16.mxu0 %v442
    %506 = vmatpush1.bf16.msra.mxu0 %v441
    %507 = vmatprep.subr.bf16.mxu0 %v444
    %508 = vmatpush1.bf16.msra.mxu0 %v443
    %509 = vmatprep.subr.bf16.mxu0 %v446
    %510 = vmatpush1.bf16.msra.mxu0 %v445
    %511 = vmatprep.subr.bf16.mxu0 %v448
    %512 = vmatpush1.bf16.msra.mxu0 %v447
    %513 = vmatprep.subr.bf16.mxu0 %v450
    %514 = vmatpush1.bf16.msra.mxu0 %v449
    %515 = vmatprep.subr.bf16.mxu0 %v452
    %516 = vmatpush1.bf16.msra.mxu0 %v451
    %517 = vmatprep.subr.bf16.mxu0 %v454
    %518 = vmatpush1.bf16.msra.mxu0 %v453
    %519 = vmatprep.subr.bf16.mxu0 %v456
    %520 = vmatpush1.bf16.msra.mxu0 %v455
    %521 = vmatprep.subr.bf16.mxu0 %v458
    %522 = vmatpush1.bf16.msra.mxu0 %v457
    %523 = vmatprep.subr.bf16.mxu0 %v460
    %524 = vmatpush1.bf16.msra.mxu0 %v459
    %525 = vmatprep.subr.bf16.mxu0 %v462
    %526 = vmatpush1.bf16.msra.mxu0 %v461
    %527 = vmatprep.subr.bf16.mxu0 %v464
    %528 = vmatpush1.bf16.msra.mxu0 %v463
    %529 = vmatprep.subr.bf16.mxu0 %v466
    %530 = vmatpush1.bf16.msra.mxu0 %v465
    %531 = vmatprep.subr.bf16.mxu0 %v468
    %532 = vmatpush1.bf16.msra.mxu0 %v467
    %533 = vmatprep.subr.bf16.mxu0 %v470
    %534 = vmatpush1.bf16.msra.mxu0 %v469
    %535 = vmatprep.subr.bf16.mxu0 %v472
    %536 = vmatpush1.bf16.msra.mxu0 %v471
    %537 = vmatprep.mubr.bf16.mxu0 %v305
    %538 = vmatmul.mubr.bf16.gmra.mrb[0].mxu0 %v304
    %v539 = vpop.f32.mrb[0].mxu0
    %v540 = vadd.f32 0.0, %v539
    %v541 = vpop.f32.mrb[0].mxu0
    %v542 = vadd.f32 0.0, %v541
    %v543 = vpop.f32.mrb[0].mxu0
    %v544 = vadd.f32 0.0, %v543
    %v545 = vpop.f32.mrb[0].mxu0
    %v546 = vadd.f32 0.0, %v545
    %547 = vmatprep.mubr.bf16.mxu0 %v307
    %548 = vmatmul.mubr.bf16.gmra.mrb[0].mxu0 %v306
    %v549 = vpop.f32.mrb[0].mxu0
    %v550 = vadd.f32 0.0, %v549
    %v551 = vpop.f32.mrb[0].mxu0
    %v552 = vadd.f32 0.0, %v551
    %v553 = vpop.f32.mrb[0].mxu0
    %v554 = vadd.f32 0.0, %v553
    %v555 = vpop.f32.mrb[0].mxu0
    %v556 = vadd.f32 0.0, %v555
    %557 = vmatprep.mubr.bf16.mxu0 %v309
    %558 = vmatmul.mubr.bf16.gmra.mrb[0].mxu0 %v308
    %v559 = vpop.f32.mrb[0].mxu0
    %v560 = vadd.f32 0.0, %v559
    %v561 = vpop.f32.mrb[0].mxu0
    %v562 = vadd.f32 0.0, %v561
    %v563 = vpop.f32.mrb[0].mxu0
    %v564 = vadd.f32 0.0, %v563
    %v565 = vpop.f32.mrb[0].mxu0
    %v566 = vadd.f32 0.0, %v565
    %567 = vmatprep.mubr.bf16.mxu0 %v311
    %568 = vmatmul.mubr.bf16.gmra.mrb[0].mxu0 %v310
    %v569 = vpop.f32.mrb[0].mxu0
    %v570 = vadd.f32 0.0, %v569
    %v571 = vpop.f32.mrb[0].mxu0
    %v572 = vadd.f32 0.0, %v571
    %v573 = vpop.f32.mrb[0].mxu0
    %v574 = vadd.f32 0.0, %v573
    %v575 = vpop.f32.mrb[0].mxu0
    %v576 = vadd.f32 0.0, %v575
    %577 = vdwg.mxu0
    %v610 = vunpack.c.l.b16 %v272
    %v611 = vunpack.c.h.b16 %v272
    %v612 = vunpack.c.l.b16 %v273
    %v613 = vunpack.c.h.b16 %v273
    %v614 = vunpack.c.l.b16 %v274
    %v615 = vunpack.c.h.b16 %v274
    %v616 = vunpack.c.l.b16 %v275
    %v617 = vunpack.c.h.b16 %v275
    %v618 = vunpack.c.l.b16 %v276
    %v619 = vunpack.c.h.b16 %v276
    %v620 = vunpack.c.l.b16 %v277
    %v621 = vunpack.c.h.b16 %v277
    %v622 = vunpack.c.l.b16 %v278
    %v623 = vunpack.c.h.b16 %v278
    %v624 = vunpack.c.l.b16 %v279
    %v625 = vunpack.c.h.b16 %v279
    %v626 = vunpack.c.l.b16 %v280
    %v627 = vunpack.c.h.b16 %v280
    %v628 = vunpack.c.l.b16 %v281
    %v629 = vunpack.c.h.b16 %v281
    %v630 = vunpack.c.l.b16 %v282
    %v631 = vunpack.c.h.b16 %v282
    %v632 = vunpack.c.l.b16 %v283
    %v633 = vunpack.c.h.b16 %v283
    %v634 = vunpack.c.l.b16 %v284
    %v635 = vunpack.c.h.b16 %v284
    %v636 = vunpack.c.l.b16 %v285
    %v637 = vunpack.c.h.b16 %v285
    %v638 = vunpack.c.l.b16 %v286
    %v639 = vunpack.c.h.b16 %v286
    %v640 = vunpack.c.l.b16 %v287
    %v641 = vunpack.c.h.b16 %v287
    %v642 = vunpack.c.l.b16 %v288
    %v643 = vunpack.c.h.b16 %v288
    %v644 = vunpack.c.l.b16 %v289
    %v645 = vunpack.c.h.b16 %v289
    %v646 = vunpack.c.l.b16 %v290
    %v647 = vunpack.c.h.b16 %v290
    %v648 = vunpack.c.l.b16 %v291
    %v649 = vunpack.c.h.b16 %v291
    %v650 = vunpack.c.l.b16 %v292
    %v651 = vunpack.c.h.b16 %v292
    %v652 = vunpack.c.l.b16 %v293
    %v653 = vunpack.c.h.b16 %v293
    %v654 = vunpack.c.l.b16 %v294
    %v655 = vunpack.c.h.b16 %v294
    %v656 = vunpack.c.l.b16 %v295
    %v657 = vunpack.c.h.b16 %v295
    %v658 = vunpack.c.l.b16 %v296
    %v659 = vunpack.c.h.b16 %v296
    %v660 = vunpack.c.l.b16 %v297
    %v661 = vunpack.c.h.b16 %v297
    %v662 = vunpack.c.l.b16 %v298
    %v663 = vunpack.c.h.b16 %v298
    %v664 = vunpack.c.l.b16 %v299
    %v665 = vunpack.c.h.b16 %v299
    %v666 = vunpack.c.l.b16 %v300
    %v667 = vunpack.c.h.b16 %v300
    %v668 = vunpack.c.l.b16 %v301
    %v669 = vunpack.c.h.b16 %v301
    %v670 = vunpack.c.l.b16 %v302
    %v671 = vunpack.c.h.b16 %v302
    %v672 = vunpack.c.l.b16 %v303
    %v673 = vunpack.c.h.b16 %v303
    %v674 = vpack.c.b16 %v612, %v610
    %v675 = vpack.c.b16 %v613, %v611
    %v676 = vpack.c.b16 %v616, %v614
    %v677 = vpack.c.b16 %v617, %v615
    %v678 = vpack.c.b16 %v620, %v618
    %v679 = vpack.c.b16 %v621, %v619
    %v680 = vpack.c.b16 %v624, %v622
    %v681 = vpack.c.b16 %v625, %v623
    %v682 = vpack.c.b16 %v628, %v626
    %v683 = vpack.c.b16 %v629, %v627
    %v684 = vpack.c.b16 %v632, %v630
    %v685 = vpack.c.b16 %v633, %v631
    %v686 = vpack.c.b16 %v636, %v634
    %v687 = vpack.c.b16 %v637, %v635
    %v688 = vpack.c.b16 %v640, %v638
    %v689 = vpack.c.b16 %v641, %v639
    %v690 = vpack.c.b16 %v644, %v642
    %v691 = vpack.c.b16 %v645, %v643
    %v692 = vpack.c.b16 %v648, %v646
    %v693 = vpack.c.b16 %v649, %v647
    %v694 = vpack.c.b16 %v652, %v650
    %v695 = vpack.c.b16 %v653, %v651
    %v696 = vpack.c.b16 %v656, %v654
    %v697 = vpack.c.b16 %v657, %v655
    %v698 = vpack.c.b16 %v660, %v658
    %v699 = vpack.c.b16 %v661, %v659
    %v700 = vpack.c.b16 %v664, %v662
    %v701 = vpack.c.b16 %v665, %v663
    %v702 = vpack.c.b16 %v668, %v666
    %v703 = vpack.c.b16 %v669, %v667
    %v704 = vpack.c.b16 %v672, %v670
    %v705 = vpack.c.b16 %v673, %v671
    %738 = vmatprep.subr.bf16.mxu0 %v675
    %739 = vmatpush1.bf16.msra.mxu0 %v674
    %740 = vmatprep.subr.bf16.mxu0 %v677
    %741 = vmatpush1.bf16.msra.mxu0 %v676
    %742 = vmatprep.subr.bf16.mxu0 %v679
    %743 = vmatpush1.bf16.msra.mxu0 %v678
    %744 = vmatprep.subr.bf16.mxu0 %v681
    %745 = vmatpush1.bf16.msra.mxu0 %v680
    %746 = vmatprep.subr.bf16.mxu0 %v683
    %747 = vmatpush1.bf16.msra.mxu0 %v682
    %748 = vmatprep.subr.bf16.mxu0 %v685
    %749 = vmatpush1.bf16.msra.mxu0 %v684
    %750 = vmatprep.subr.bf16.mxu0 %v687
    %751 = vmatpush1.bf16.msra.mxu0 %v686
    %752 = vmatprep.subr.bf16.mxu0 %v689
    %753 = vmatpush1.bf16.msra.mxu0 %v688
    %754 = vmatprep.subr.bf16.mxu0 %v691
    %755 = vmatpush1.bf16.msra.mxu0 %v690
    %756 = vmatprep.subr.bf16.mxu0 %v693
    %757 = vmatpush1.bf16.msra.mxu0 %v692
    %758 = vmatprep.subr.bf16.mxu0 %v695
    %759 = vmatpush1.bf16.msra.mxu0 %v694
    %760 = vmatprep.subr.bf16.mxu0 %v697
    %761 = vmatpush1.bf16.msra.mxu0 %v696
    %762 = vmatprep.subr.bf16.mxu0 %v699
    %763 = vmatpush1.bf16.msra.mxu0 %v698
    %764 = vmatprep.subr.bf16.mxu0 %v701
    %765 = vmatpush1.bf16.msra.mxu0 %v700
    %766 = vmatprep.subr.bf16.mxu0 %v703
    %767 = vmatpush1.bf16.msra.mxu0 %v702
    %768 = vmatprep.subr.bf16.mxu0 %v705
    %769 = vmatpush1.bf16.msra.mxu0 %v704
    %770 = vmatprep.mubr.bf16.mxu0 %v265
    %771 = vmatmul.mubr.bf16.gmra.mrb[0].mxu0 %v264
    %v772 = vpop.f32.mrb[0].mxu0
    %v773 = vadd.f32 %v540, %v772
    %v774 = vpop.f32.mrb[0].mxu0
    %v775 = vadd.f32 %v542, %v774
    %v776 = vpop.f32.mrb[0].mxu0
    %v777 = vadd.f32 %v544, %v776
    %v778 = vpop.f32.mrb[0].mxu0
    %v779 = vadd.f32 %v546, %v778
    %780 = vmatprep.mubr.bf16.mxu0 %v267
    %781 = vmatmul.mubr.bf16.gmra.mrb[0].mxu0 %v266
    %v782 = vpop.f32.mrb[0].mxu0
    %v783 = vadd.f32 %v550, %v782
    %v784 = vpop.f32.mrb[0].mxu0
    %v785 = vadd.f32 %v552, %v784
    %v786 = vpop.f32.mrb[0].mxu0
    %v787 = vadd.f32 %v554, %v786
    %v788 = vpop.f32.mrb[0].mxu0
    %v789 = vadd.f32 %v556, %v788
    %790 = vmatprep.mubr.bf16.mxu0 %v269
    %791 = vmatmul.mubr.bf16.gmra.mrb[0].mxu0 %v268
    %v792 = vpop.f32.mrb[0].mxu0
    %v793 = vadd.f32 %v560, %v792
    %v794 = vpop.f32.mrb[0].mxu0
    %v795 = vadd.f32 %v562, %v794
    %v796 = vpop.f32.mrb[0].mxu0
    %v797 = vadd.f32 %v564, %v796
    %v798 = vpop.f32.mrb[0].mxu0
    %v799 = vadd.f32 %v566, %v798
    %800 = vmatprep.mubr.bf16.mxu0 %v271
    %801 = vmatmul.mubr.bf16.gmra.mrb[0].mxu0 %v270
    %v802 = vpop.f32.mrb[0].mxu0
    %v803 = vadd.f32 %v570, %v802
    %v804 = vpop.f32.mrb[0].mxu0
    %v805 = vadd.f32 %v572, %v804
    %v806 = vpop.f32.mrb[0].mxu0
    %v807 = vadd.f32 %v574, %v806
    %v808 = vpop.f32.mrb[0].mxu0
    %v809 = vadd.f32 %v576, %v808
    %810 = vdwg.mxu0
    %vm811 = vcmask 1046528
    %v812 = vrot.slane 0.0, 1
    %v813 = vsel %vm811, %v812, %v812
    %v814 = vrot.slane %v131, 1
    %v815 = vsel %vm811, %v814, %v812
    %v816 = vrot.slane %v132, 1
    %v817 = vsel %vm811, %v816, %v812
    %v818 = vrot.slane %v133, 1
    %v819 = vsel %vm811, %v818, %v812
    %v820 = vrot.slane %v134, 1
    %v821 = vsel %vm811, %v820, %v812
    %v822 = vrot.slane %v135, 1
    %v823 = vsel %vm811, %v822, %v812
    %v824 = vrot.slane %v136, 1
    %v825 = vsel %vm811, %v824, %v812
    %v826 = vrot.slane %v139, 1
    %v827 = vsel %vm811, %v826, %v812
    %v828 = vrot.slane %v140, 1
    %v829 = vsel %vm811, %v828, %v812
    %v830 = vrot.slane %v141, 1
    %v831 = vsel %vm811, %v830, %v812
    %v832 = vrot.slane %v142, 1
    %v833 = vsel %vm811, %v832, %v812
    %v834 = vrot.slane %v143, 1
    %v835 = vsel %vm811, %v834, %v812
    %v836 = vrot.slane %v144, 1
    %v837 = vsel %vm811, %v836, %v812
    %v851 = vpack.c.bf16 %v815, %v813
    %v852 = vpack.c.bf16 %v817, %v813
    %v853 = vpack.c.bf16 %v823, %v819
    %v854 = vpack.c.bf16 %v825, %v821
    %v855 = vpack.c.bf16 %v827, %v813
    %v856 = vpack.c.bf16 %v829, %v813
    %v857 = vpack.c.bf16 %v835, %v831
    %v858 = vpack.c.bf16 %v837, %v833
    %s859 = scalar_lea.vmem [#allocation5], 512
    %v860 = vld [vmem:[%s859] sm:$0xff]
    %v861 = vld [vmem:[%s859 + $0x8] sm:$0xff]
    %v862 = vld [vmem:[%s859 + $0x10] sm:$0xff]
    %v863 = vld [vmem:[%s859 + $0x18] sm:$0xff]
    %v864 = vld [vmem:[%s859 + $0x20] sm:$0xff]
    %v865 = vld [vmem:[%s859 + $0x28] sm:$0xff]
    %v866 = vld [vmem:[%s859 + $0x30] sm:$0xff]
    %v867 = vld [vmem:[%s859 + $0x38] sm:$0xff]
    %v868 = vld [vmem:[%s859 + $0x40] sm:$0xff]
    %v869 = vld [vmem:[%s859 + $0x48] sm:$0xff]
    %v870 = vld [vmem:[%s859 + $0x50] sm:$0xff]
    %v871 = vld [vmem:[%s859 + $0x58] sm:$0xff]
    %v872 = vld [vmem:[%s859 + $0x60] sm:$0xff]
    %v873 = vld [vmem:[%s859 + $0x68] sm:$0xff]
    %v874 = vld [vmem:[%s859 + $0x70] sm:$0xff]
    %v875 = vld [vmem:[%s859 + $0x78] sm:$0xff]
    %v876 = vld [vmem:[%s859 + $0x80] sm:$0xff]
    %v877 = vld [vmem:[%s859 + $0x88] sm:$0xff]
    %v878 = vld [vmem:[%s859 + $0x90] sm:$0xff]
    %v879 = vld [vmem:[%s859 + $0x98] sm:$0xff]
    %v880 = vld [vmem:[%s859 + $0xa0] sm:$0xff]
    %v881 = vld [vmem:[%s859 + $0xa8] sm:$0xff]
    %v882 = vld [vmem:[%s859 + $0xb0] sm:$0xff]
    %v883 = vld [vmem:[%s859 + $0xb8] sm:$0xff]
    %v884 = vld [vmem:[%s859 + $0xc0] sm:$0xff]
    %v885 = vld [vmem:[%s859 + $0xc8] sm:$0xff]
    %v886 = vld [vmem:[%s859 + $0xd0] sm:$0xff]
    %v887 = vld [vmem:[%s859 + $0xd8] sm:$0xff]
    %v888 = vld [vmem:[%s859 + $0xe0] sm:$0xff]
    %v889 = vld [vmem:[%s859 + $0xe8] sm:$0xff]
    %v890 = vld [vmem:[%s859 + $0xf0] sm:$0xff]
    %v891 = vld [vmem:[%s859 + $0xf8] sm:$0xff]
    %v924 = vunpack.c.l.b16 %v860
    %v925 = vunpack.c.h.b16 %v860
    %v926 = vunpack.c.l.b16 %v861
    %v927 = vunpack.c.h.b16 %v861
    %v928 = vunpack.c.l.b16 %v862
    %v929 = vunpack.c.h.b16 %v862
    %v930 = vunpack.c.l.b16 %v863
    %v931 = vunpack.c.h.b16 %v863
    %v932 = vunpack.c.l.b16 %v864
    %v933 = vunpack.c.h.b16 %v864
    %v934 = vunpack.c.l.b16 %v865
    %v935 = vunpack.c.h.b16 %v865
    %v936 = vunpack.c.l.b16 %v866
    %v937 = vunpack.c.h.b16 %v866
    %v938 = vunpack.c.l.b16 %v867
    %v939 = vunpack.c.h.b16 %v867
    %v940 = vunpack.c.l.b16 %v868
    %v941 = vunpack.c.h.b16 %v868
    %v942 = vunpack.c.l.b16 %v869
    %v943 = vunpack.c.h.b16 %v869
    %v944 = vunpack.c.l.b16 %v870
    %v945 = vunpack.c.h.b16 %v870
    %v946 = vunpack.c.l.b16 %v871
    %v947 = vunpack.c.h.b16 %v871
    %v948 = vunpack.c.l.b16 %v872
    %v949 = vunpack.c.h.b16 %v872
    %v950 = vunpack.c.l.b16 %v873
    %v951 = vunpack.c.h.b16 %v873
    %v952 = vunpack.c.l.b16 %v874
    %v953 = vunpack.c.h.b16 %v874
    %v954 = vunpack.c.l.b16 %v875
    %v955 = vunpack.c.h.b16 %v875
    %v956 = vunpack.c.l.b16 %v876
    %v957 = vunpack.c.h.b16 %v876
    %v958 = vunpack.c.l.b16 %v877
    %v959 = vunpack.c.h.b16 %v877
    %v960 = vunpack.c.l.b16 %v878
    %v961 = vunpack.c.h.b16 %v878
    %v962 = vunpack.c.l.b16 %v879
    %v963 = vunpack.c.h.b16 %v879
    %v964 = vunpack.c.l.b16 %v880
    %v965 = vunpack.c.h.b16 %v880
    %v966 = vunpack.c.l.b16 %v881
    %v967 = vunpack.c.h.b16 %v881
    %v968 = vunpack.c.l.b16 %v882
    %v969 = vunpack.c.h.b16 %v882
    %v970 = vunpack.c.l.b16 %v883
    %v971 = vunpack.c.h.b16 %v883
    %v972 = vunpack.c.l.b16 %v884
    %v973 = vunpack.c.h.b16 %v884
    %v974 = vunpack.c.l.b16 %v885
    %v975 = vunpack.c.h.b16 %v885
    %v976 = vunpack.c.l.b16 %v886
    %v977 = vunpack.c.h.b16 %v886
    %v978 = vunpack.c.l.b16 %v887
    %v979 = vunpack.c.h.b16 %v887
    %v980 = vunpack.c.l.b16 %v888
    %v981 = vunpack.c.h.b16 %v888
    %v982 = vunpack.c.l.b16 %v889
    %v983 = vunpack.c.h.b16 %v889
    %v984 = vunpack.c.l.b16 %v890
    %v985 = vunpack.c.h.b16 %v890
    %v986 = vunpack.c.l.b16 %v891
    %v987 = vunpack.c.h.b16 %v891
    %v988 = vpack.c.b16 %v926, %v924
    %v989 = vpack.c.b16 %v927, %v925
    %v990 = vpack.c.b16 %v930, %v928
    %v991 = vpack.c.b16 %v931, %v929
    %v992 = vpack.c.b16 %v934, %v932
    %v993 = vpack.c.b16 %v935, %v933
    %v994 = vpack.c.b16 %v938, %v936
    %v995 = vpack.c.b16 %v939, %v937
    %v996 = vpack.c.b16 %v942, %v940
    %v997 = vpack.c.b16 %v943, %v941
    %v998 = vpack.c.b16 %v946, %v944
    %v999 = vpack.c.b16 %v947, %v945
    %v1000 = vpack.c.b16 %v950, %v948
    %v1001 = vpack.c.b16 %v951, %v949
    %v1002 = vpack.c.b16 %v954, %v952
    %v1003 = vpack.c.b16 %v955, %v953
    %v1004 = vpack.c.b16 %v958, %v956
    %v1005 = vpack.c.b16 %v959, %v957
    %v1006 = vpack.c.b16 %v962, %v960
    %v1007 = vpack.c.b16 %v963, %v961
    %v1008 = vpack.c.b16 %v966, %v964
    %v1009 = vpack.c.b16 %v967, %v965
    %v1010 = vpack.c.b16 %v970, %v968
    %v1011 = vpack.c.b16 %v971, %v969
    %v1012 = vpack.c.b16 %v974, %v972
    %v1013 = vpack.c.b16 %v975, %v973
    %v1014 = vpack.c.b16 %v978, %v976
    %v1015 = vpack.c.b16 %v979, %v977
    %v1016 = vpack.c.b16 %v982, %v980
    %v1017 = vpack.c.b16 %v983, %v981
    %v1018 = vpack.c.b16 %v986, %v984
    %v1019 = vpack.c.b16 %v987, %v985
    %1052 = vmatprep.subr.bf16.mxu0 %v989
    %1053 = vmatpush1.bf16.msra.mxu0 %v988
    %1054 = vmatprep.subr.bf16.mxu0 %v991
    %1055 = vmatpush1.bf16.msra.mxu0 %v990
    %1056 = vmatprep.subr.bf16.mxu0 %v993
    %1057 = vmatpush1.bf16.msra.mxu0 %v992
    %1058 = vmatprep.subr.bf16.mxu0 %v995
    %1059 = vmatpush1.bf16.msra.mxu0 %v994
    %1060 = vmatprep.subr.bf16.mxu0 %v997
    %1061 = vmatpush1.bf16.msra.mxu0 %v996
    %1062 = vmatprep.subr.bf16.mxu0 %v999
    %1063 = vmatpush1.bf16.msra.mxu0 %v998
    %1064 = vmatprep.subr.bf16.mxu0 %v1001
    %1065 = vmatpush1.bf16.msra.mxu0 %v1000
    %1066 = vmatprep.subr.bf16.mxu0 %v1003
    %1067 = vmatpush1.bf16.msra.mxu0 %v1002
    %1068 = vmatprep.subr.bf16.mxu0 %v1005
    %1069 = vmatpush1.bf16.msra.mxu0 %v1004
    %1070 = vmatprep.subr.bf16.mxu0 %v1007
    %1071 = vmatpush1.bf16.msra.mxu0 %v1006
    %1072 = vmatprep.subr.bf16.mxu0 %v1009
    %1073 = vmatpush1.bf16.msra.mxu0 %v1008
    %1074 = vmatprep.subr.bf16.mxu0 %v1011
    %1075 = vmatpush1.bf16.msra.mxu0 %v1010
    %1076 = vmatprep.subr.bf16.mxu0 %v1013
    %1077 = vmatpush1.bf16.msra.mxu0 %v1012
    %1078 = vmatprep.subr.bf16.mxu0 %v1015
    %1079 = vmatpush1.bf16.msra.mxu0 %v1014
    %1080 = vmatprep.subr.bf16.mxu0 %v1017
    %1081 = vmatpush1.bf16.msra.mxu0 %v1016
    %1082 = vmatprep.subr.bf16.mxu0 %v1019
    %1083 = vmatpush1.bf16.msra.mxu0 %v1018
    %1084 = vmatprep.mubr.bf16.mxu0 %v852
    %1085 = vmatmul.mubr.bf16.gmra.mrb[0].mxu0 %v851
    %v1086 = vpop.f32.mrb[0].mxu0
    %v1087 = vadd.f32 0.0, %v1086
    %v1088 = vpop.f32.mrb[0].mxu0
    %v1089 = vadd.f32 0.0, %v1088
    %v1090 = vpop.f32.mrb[0].mxu0
    %v1091 = vadd.f32 0.0, %v1090
    %v1092 = vpop.f32.mrb[0].mxu0
    %v1093 = vadd.f32 0.0, %v1092
    %1094 = vmatprep.mubr.bf16.mxu0 %v854
    %1095 = vmatmul.mubr.bf16.gmra.mrb[0].mxu0 %v853
    %v1096 = vpop.f32.mrb[0].mxu0
    %v1097 = vadd.f32 0.0, %v1096
    %v1098 = vpop.f32.mrb[0].mxu0
    %v1099 = vadd.f32 0.0, %v1098
    %v1100 = vpop.f32.mrb[0].mxu0
    %v1101 = vadd.f32 0.0, %v1100
    %v1102 = vpop.f32.mrb[0].mxu0
    %v1103 = vadd.f32 0.0, %v1102
    %1104 = vmatprep.mubr.bf16.mxu0 %v856
    %1105 = vmatmul.mubr.bf16.gmra.mrb[0].mxu0 %v855
    %v1106 = vpop.f32.mrb[0].mxu0
    %v1107 = vadd.f32 0.0, %v1106
    %v1108 = vpop.f32.mrb[0].mxu0
    %v1109 = vadd.f32 0.0, %v1108
    %v1110 = vpop.f32.mrb[0].mxu0
    %v1111 = vadd.f32 0.0, %v1110
    %v1112 = vpop.f32.mrb[0].mxu0
    %v1113 = vadd.f32 0.0, %v1112
    %1114 = vmatprep.mubr.bf16.mxu0 %v858
    %1115 = vmatmul.mubr.bf16.gmra.mrb[0].mxu0 %v857
    %v1116 = vpop.f32.mrb[0].mxu0
    %v1117 = vadd.f32 0.0, %v1116
    %v1118 = vpop.f32.mrb[0].mxu0
    %v1119 = vadd.f32 0.0, %v1118
    %v1120 = vpop.f32.mrb[0].mxu0
    %v1121 = vadd.f32 0.0, %v1120
    %v1122 = vpop.f32.mrb[0].mxu0
    %v1123 = vadd.f32 0.0, %v1122
    %1124 = vdwg.mxu0
    %v1125 = vadd.f32 %v773, %v1087
    %v1126 = vadd.f32 %v775, %v1089
    %v1127 = vadd.f32 %v777, %v1091
    %v1128 = vadd.f32 %v779, %v1093
    %v1129 = vadd.f32 %v783, %v1097
    %v1130 = vadd.f32 %v785, %v1099
    %v1131 = vadd.f32 %v787, %v1101
    %v1132 = vadd.f32 %v789, %v1103
    %v1133 = vadd.f32 %v793, %v1107
    %v1134 = vadd.f32 %v795, %v1109
    %v1135 = vadd.f32 %v797, %v1111
    %v1136 = vadd.f32 %v799, %v1113
    %v1137 = vadd.f32 %v803, %v1117
    %v1138 = vadd.f32 %v805, %v1119
    %v1139 = vadd.f32 %v807, %v1121
    %v1140 = vadd.f32 %v809, %v1123
    %v1145 = vrot.slane %v137, 7
    %v1146 = vsel %vm224, %v225, %v1145
    %v1147 = vrot.slane %v138, 7
    %v1148 = vsel %vm224, %v225, %v1147
    %v1149 = vrot.slane %v145, 7
    %v1150 = vsel %vm224, %v225, %v1149
    %v1151 = vrot.slane %v146, 7
    %v1152 = vsel %vm224, %v225, %v1151
    %v1157 = vpack.c.bf16 %v232, %v228
    %v1158 = vpack.c.bf16 %v234, %v230
    %v1159 = vpack.c.bf16 %v1146, %v236
    %v1160 = vpack.c.bf16 %v1148, %v238
    %v1161 = vpack.c.bf16 %v244, %v240
    %v1162 = vpack.c.bf16 %v246, %v242
    %v1163 = vpack.c.bf16 %v1150, %v248
    %v1164 = vpack.c.bf16 %v1152, %v250
    %s1165 = scalar_lea.vmem [#allocation5], 768
    %v1166 = vld [vmem:[%s1165] sm:$0xff]
    %v1167 = vld [vmem:[%s1165 + $0x8] sm:$0xff]
    %v1168 = vld [vmem:[%s1165 + $0x10] sm:$0xff]
    %v1169 = vld [vmem:[%s1165 + $0x18] sm:$0xff]
    %v1170 = vld [vmem:[%s1165 + $0x20] sm:$0xff]
    %v1171 = vld [vmem:[%s1165 + $0x28] sm:$0xff]
    %v1172 = vld [vmem:[%s1165 + $0x30] sm:$0xff]
    %v1173 = vld [vmem:[%s1165 + $0x38] sm:$0xff]
    %v1174 = vld [vmem:[%s1165 + $0x40] sm:$0xff]
    %v1175 = vld [vmem:[%s1165 + $0x48] sm:$0xff]
    %v1176 = vld [vmem:[%s1165 + $0x50] sm:$0xff]
    %v1177 = vld [vmem:[%s1165 + $0x58] sm:$0xff]
    %v1178 = vld [vmem:[%s1165 + $0x60] sm:$0xff]
    %v1179 = vld [vmem:[%s1165 + $0x68] sm:$0xff]
    %v1180 = vld [vmem:[%s1165 + $0x70] sm:$0xff]
    %v1181 = vld [vmem:[%s1165 + $0x78] sm:$0xff]
    %v1182 = vld [vmem:[%s1165 + $0x80] sm:$0xff]
    %v1183 = vld [vmem:[%s1165 + $0x88] sm:$0xff]
    %v1184 = vld [vmem:[%s1165 + $0x90] sm:$0xff]
    %v1185 = vld [vmem:[%s1165 + $0x98] sm:$0xff]
    %v1186 = vld [vmem:[%s1165 + $0xa0] sm:$0xff]
    %v1187 = vld [vmem:[%s1165 + $0xa8] sm:$0xff]
    %v1188 = vld [vmem:[%s1165 + $0xb0] sm:$0xff]
    %v1189 = vld [vmem:[%s1165 + $0xb8] sm:$0xff]
    %v1190 = vld [vmem:[%s1165 + $0xc0] sm:$0xff]
    %v1191 = vld [vmem:[%s1165 + $0xc8] sm:$0xff]
    %v1192 = vld [vmem:[%s1165 + $0xd0] sm:$0xff]
    %v1193 = vld [vmem:[%s1165 + $0xd8] sm:$0xff]
    %v1194 = vld [vmem:[%s1165 + $0xe0] sm:$0xff]
    %v1195 = vld [vmem:[%s1165 + $0xe8] sm:$0xff]
    %v1196 = vld [vmem:[%s1165 + $0xf0] sm:$0xff]
    %v1197 = vld [vmem:[%s1165 + $0xf8] sm:$0xff]
    %v1230 = vunpack.c.l.b16 %v1166
    %v1231 = vunpack.c.h.b16 %v1166
    %v1232 = vunpack.c.l.b16 %v1167
    %v1233 = vunpack.c.h.b16 %v1167
    %v1234 = vunpack.c.l.b16 %v1168
    %v1235 = vunpack.c.h.b16 %v1168
    %v1236 = vunpack.c.l.b16 %v1169
    %v1237 = vunpack.c.h.b16 %v1169
    %v1238 = vunpack.c.l.b16 %v1170
    %v1239 = vunpack.c.h.b16 %v1170
    %v1240 = vunpack.c.l.b16 %v1171
    %v1241 = vunpack.c.h.b16 %v1171
    %v1242 = vunpack.c.l.b16 %v1172
    %v1243 = vunpack.c.h.b16 %v1172
    %v1244 = vunpack.c.l.b16 %v1173
    %v1245 = vunpack.c.h.b16 %v1173
    %v1246 = vunpack.c.l.b16 %v1174
    %v1247 = vunpack.c.h.b16 %v1174
    %v1248 = vunpack.c.l.b16 %v1175
    %v1249 = vunpack.c.h.b16 %v1175
    %v1250 = vunpack.c.l.b16 %v1176
    %v1251 = vunpack.c.h.b16 %v1176
    %v1252 = vunpack.c.l.b16 %v1177
    %v1253 = vunpack.c.h.b16 %v1177
    %v1254 = vunpack.c.l.b16 %v1178
    %v1255 = vunpack.c.h.b16 %v1178
    %v1256 = vunpack.c.l.b16 %v1179
    %v1257 = vunpack.c.h.b16 %v1179
    %v1258 = vunpack.c.l.b16 %v1180
    %v1259 = vunpack.c.h.b16 %v1180
    %v1260 = vunpack.c.l.b16 %v1181
    %v1261 = vunpack.c.h.b16 %v1181
    %v1262 = vunpack.c.l.b16 %v1182
    %v1263 = vunpack.c.h.b16 %v1182
    %v1264 = vunpack.c.l.b16 %v1183
    %v1265 = vunpack.c.h.b16 %v1183
    %v1266 = vunpack.c.l.b16 %v1184
    %v1267 = vunpack.c.h.b16 %v1184
    %v1268 = vunpack.c.l.b16 %v1185
    %v1269 = vunpack.c.h.b16 %v1185
    %v1270 = vunpack.c.l.b16 %v1186
    %v1271 = vunpack.c.h.b16 %v1186
    %v1272 = vunpack.c.l.b16 %v1187
    %v1273 = vunpack.c.h.b16 %v1187
    %v1274 = vunpack.c.l.b16 %v1188
    %v1275 = vunpack.c.h.b16 %v1188
    %v1276 = vunpack.c.l.b16 %v1189
    %v1277 = vunpack.c.h.b16 %v1189
    %v1278 = vunpack.c.l.b16 %v1190
    %v1279 = vunpack.c.h.b16 %v1190
    %v1280 = vunpack.c.l.b16 %v1191
    %v1281 = vunpack.c.h.b16 %v1191
    %v1282 = vunpack.c.l.b16 %v1192
    %v1283 = vunpack.c.h.b16 %v1192
    %v1284 = vunpack.c.l.b16 %v1193
    %v1285 = vunpack.c.h.b16 %v1193
    %v1286 = vunpack.c.l.b16 %v1194
    %v1287 = vunpack.c.h.b16 %v1194
    %v1288 = vunpack.c.l.b16 %v1195
    %v1289 = vunpack.c.h.b16 %v1195
    %v1290 = vunpack.c.l.b16 %v1196
    %v1291 = vunpack.c.h.b16 %v1196
    %v1292 = vunpack.c.l.b16 %v1197
    %v1293 = vunpack.c.h.b16 %v1197
    %v1294 = vpack.c.b16 %v1232, %v1230
    %v1295 = vpack.c.b16 %v1233, %v1231
    %v1296 = vpack.c.b16 %v1236, %v1234
    %v1297 = vpack.c.b16 %v1237, %v1235
    %v1298 = vpack.c.b16 %v1240, %v1238
    %v1299 = vpack.c.b16 %v1241, %v1239
    %v1300 = vpack.c.b16 %v1244, %v1242
    %v1301 = vpack.c.b16 %v1245, %v1243
    %v1302 = vpack.c.b16 %v1248, %v1246
    %v1303 = vpack.c.b16 %v1249, %v1247
    %v1304 = vpack.c.b16 %v1252, %v1250
    %v1305 = vpack.c.b16 %v1253, %v1251
    %v1306 = vpack.c.b16 %v1256, %v1254
    %v1307 = vpack.c.b16 %v1257, %v1255
    %v1308 = vpack.c.b16 %v1260, %v1258
    %v1309 = vpack.c.b16 %v1261, %v1259
    %v1310 = vpack.c.b16 %v1264, %v1262
    %v1311 = vpack.c.b16 %v1265, %v1263
    %v1312 = vpack.c.b16 %v1268, %v1266
    %v1313 = vpack.c.b16 %v1269, %v1267
    %v1314 = vpack.c.b16 %v1272, %v1270
    %v1315 = vpack.c.b16 %v1273, %v1271
    %v1316 = vpack.c.b16 %v1276, %v1274
    %v1317 = vpack.c.b16 %v1277, %v1275
    %v1318 = vpack.c.b16 %v1280, %v1278
    %v1319 = vpack.c.b16 %v1281, %v1279
    %v1320 = vpack.c.b16 %v1284, %v1282
    %v1321 = vpack.c.b16 %v1285, %v1283
    %v1322 = vpack.c.b16 %v1288, %v1286
    %v1323 = vpack.c.b16 %v1289, %v1287
    %v1324 = vpack.c.b16 %v1292, %v1290
    %v1325 = vpack.c.b16 %v1293, %v1291
    %1358 = vmatprep.subr.bf16.mxu0 %v1295
    %1359 = vmatpush1.bf16.msra.mxu0 %v1294
    %1360 = vmatprep.subr.bf16.mxu0 %v1297
    %1361 = vmatpush1.bf16.msra.mxu0 %v1296
    %1362 = vmatprep.subr.bf16.mxu0 %v1299
    %1363 = vmatpush1.bf16.msra.mxu0 %v1298
    %1364 = vmatprep.subr.bf16.mxu0 %v1301
    %1365 = vmatpush1.bf16.msra.mxu0 %v1300
    %1366 = vmatprep.subr.bf16.mxu0 %v1303
    %1367 = vmatpush1.bf16.msra.mxu0 %v1302
    %1368 = vmatprep.subr.bf16.mxu0 %v1305
    %1369 = vmatpush1.bf16.msra.mxu0 %v1304
    %1370 = vmatprep.subr.bf16.mxu0 %v1307
    %1371 = vmatpush1.bf16.msra.mxu0 %v1306
    %1372 = vmatprep.subr.bf16.mxu0 %v1309
    %1373 = vmatpush1.bf16.msra.mxu0 %v1308
    %1374 = vmatprep.subr.bf16.mxu0 %v1311
    %1375 = vmatpush1.bf16.msra.mxu0 %v1310
    %1376 = vmatprep.subr.bf16.mxu0 %v1313
    %1377 = vmatpush1.bf16.msra.mxu0 %v1312
    %1378 = vmatprep.subr.bf16.mxu0 %v1315
    %1379 = vmatpush1.bf16.msra.mxu0 %v1314
    %1380 = vmatprep.subr.bf16.mxu0 %v1317
    %1381 = vmatpush1.bf16.msra.mxu0 %v1316
    %1382 = vmatprep.subr.bf16.mxu0 %v1319
    %1383 = vmatpush1.bf16.msra.mxu0 %v1318
    %1384 = vmatprep.subr.bf16.mxu0 %v1321
    %1385 = vmatpush1.bf16.msra.mxu0 %v1320
    %1386 = vmatprep.subr.bf16.mxu0 %v1323
    %1387 = vmatpush1.bf16.msra.mxu0 %v1322
    %1388 = vmatprep.subr.bf16.mxu0 %v1325
    %1389 = vmatpush1.bf16.msra.mxu0 %v1324
    %1390 = vmatprep.mubr.bf16.mxu0 %v1158
    %1391 = vmatmul.mubr.bf16.gmra.mrb[0].mxu0 %v1157
    %v1392 = vpop.f32.mrb[0].mxu0
    %v1393 = vadd.f32 0.0, %v1392
    %v1394 = vpop.f32.mrb[0].mxu0
    %v1395 = vadd.f32 0.0, %v1394
    %v1396 = vpop.f32.mrb[0].mxu0
    %v1397 = vadd.f32 0.0, %v1396
    %v1398 = vpop.f32.mrb[0].mxu0
    %v1399 = vadd.f32 0.0, %v1398
    %1400 = vmatprep.mubr.bf16.mxu0 %v1160
    %1401 = vmatmul.mubr.bf16.gmra.mrb[0].mxu0 %v1159
    %v1402 = vpop.f32.mrb[0].mxu0
    %v1403 = vadd.f32 0.0, %v1402
    %v1404 = vpop.f32.mrb[0].mxu0
    %v1405 = vadd.f32 0.0, %v1404
    %v1406 = vpop.f32.mrb[0].mxu0
    %v1407 = vadd.f32 0.0, %v1406
    %v1408 = vpop.f32.mrb[0].mxu0
    %v1409 = vadd.f32 0.0, %v1408
    %1410 = vmatprep.mubr.bf16.mxu0 %v1162
    %1411 = vmatmul.mubr.bf16.gmra.mrb[0].mxu0 %v1161
    %v1412 = vpop.f32.mrb[0].mxu0
    %v1413 = vadd.f32 0.0, %v1412
    %v1414 = vpop.f32.mrb[0].mxu0
    %v1415 = vadd.f32 0.0, %v1414
    %v1416 = vpop.f32.mrb[0].mxu0
    %v1417 = vadd.f32 0.0, %v1416
    %v1418 = vpop.f32.mrb[0].mxu0
    %v1419 = vadd.f32 0.0, %v1418
    %1420 = vmatprep.mubr.bf16.mxu0 %v1164
    %1421 = vmatmul.mubr.bf16.gmra.mrb[0].mxu0 %v1163
    %v1422 = vpop.f32.mrb[0].mxu0
    %v1423 = vadd.f32 0.0, %v1422
    %v1424 = vpop.f32.mrb[0].mxu0
    %v1425 = vadd.f32 0.0, %v1424
    %v1426 = vpop.f32.mrb[0].mxu0
    %v1427 = vadd.f32 0.0, %v1426
    %v1428 = vpop.f32.mrb[0].mxu0
    %v1429 = vadd.f32 0.0, %v1428
    %1430 = vdwg.mxu0
    %v1431 = vadd.f32 %v1125, %v1393
    %v1432 = vadd.f32 %v1126, %v1395
    %v1433 = vadd.f32 %v1127, %v1397
    %v1434 = vadd.f32 %v1128, %v1399
    %v1435 = vadd.f32 %v1129, %v1403
    %v1436 = vadd.f32 %v1130, %v1405
    %v1437 = vadd.f32 %v1131, %v1407
    %v1438 = vadd.f32 %v1132, %v1409
    %v1439 = vadd.f32 %v1133, %v1413
    %v1440 = vadd.f32 %v1134, %v1415
    %v1441 = vadd.f32 %v1135, %v1417
    %v1442 = vadd.f32 %v1136, %v1419
    %v1443 = vadd.f32 %v1137, %v1423
    %v1444 = vadd.f32 %v1138, %v1425
    %v1445 = vadd.f32 %v1139, %v1427
    %v1446 = vadd.f32 %v1140, %v1429
    %v1447 = vpack.c.bf16 %v133, %v131
    %v1448 = vpack.c.bf16 %v134, %v132
    %v1449 = vpack.c.bf16 %v137, %v135
    %v1450 = vpack.c.bf16 %v138, %v136
    %v1451 = vpack.c.bf16 %v141, %v139
    %v1452 = vpack.c.bf16 %v142, %v140
    %v1453 = vpack.c.bf16 %v145, %v143
    %v1454 = vpack.c.bf16 %v146, %v144
    %s1455 = scalar_lea.vmem [#allocation5], 1024
    %v1456 = vld [vmem:[%s1455] sm:$0xff]
    %v1457 = vld [vmem:[%s1455 + $0x8] sm:$0xff]
    %v1458 = vld [vmem:[%s1455 + $0x10] sm:$0xff]
    %v1459 = vld [vmem:[%s1455 + $0x18] sm:$0xff]
    %v1460 = vld [vmem:[%s1455 + $0x20] sm:$0xff]
    %v1461 = vld [vmem:[%s1455 + $0x28] sm:$0xff]
    %v1462 = vld [vmem:[%s1455 + $0x30] sm:$0xff]
    %v1463 = vld [vmem:[%s1455 + $0x38] sm:$0xff]
    %v1464 = vld [vmem:[%s1455 + $0x40] sm:$0xff]
    %v1465 = vld [vmem:[%s1455 + $0x48] sm:$0xff]
    %v1466 = vld [vmem:[%s1455 + $0x50] sm:$0xff]
    %v1467 = vld [vmem:[%s1455 + $0x58] sm:$0xff]
    %v1468 = vld [vmem:[%s1455 + $0x60] sm:$0xff]
    %v1469 = vld [vmem:[%s1455 + $0x68] sm:$0xff]
    %v1470 = vld [vmem:[%s1455 + $0x70] sm:$0xff]
    %v1471 = vld [vmem:[%s1455 + $0x78] sm:$0xff]
    %v1472 = vld [vmem:[%s1455 + $0x80] sm:$0xff]
    %v1473 = vld [vmem:[%s1455 + $0x88] sm:$0xff]
    %v1474 = vld [vmem:[%s1455 + $0x90] sm:$0xff]
    %v1475 = vld [vmem:[%s1455 + $0x98] sm:$0xff]
    %v1476 = vld [vmem:[%s1455 + $0xa0] sm:$0xff]
    %v1477 = vld [vmem:[%s1455 + $0xa8] sm:$0xff]
    %v1478 = vld [vmem:[%s1455 + $0xb0] sm:$0xff]
    %v1479 = vld [vmem:[%s1455 + $0xb8] sm:$0xff]
    %v1480 = vld [vmem:[%s1455 + $0xc0] sm:$0xff]
    %v1481 = vld [vmem:[%s1455 + $0xc8] sm:$0xff]
    %v1482 = vld [vmem:[%s1455 + $0xd0] sm:$0xff]
    %v1483 = vld [vmem:[%s1455 + $0xd8] sm:$0xff]
    %v1484 = vld [vmem:[%s1455 + $0xe0] sm:$0xff]
    %v1485 = vld [vmem:[%s1455 + $0xe8] sm:$0xff]
    %v1486 = vld [vmem:[%s1455 + $0xf0] sm:$0xff]
    %v1487 = vld [vmem:[%s1455 + $0xf8] sm:$0xff]
    %v1520 = vunpack.c.l.b16 %v1456
    %v1521 = vunpack.c.h.b16 %v1456
    %v1522 = vunpack.c.l.b16 %v1457
    %v1523 = vunpack.c.h.b16 %v1457
    %v1524 = vunpack.c.l.b16 %v1458
    %v1525 = vunpack.c.h.b16 %v1458
    %v1526 = vunpack.c.l.b16 %v1459
    %v1527 = vunpack.c.h.b16 %v1459
    %v1528 = vunpack.c.l.b16 %v1460
    %v1529 = vunpack.c.h.b16 %v1460
    %v1530 = vunpack.c.l.b16 %v1461
    %v1531 = vunpack.c.h.b16 %v1461
    %v1532 = vunpack.c.l.b16 %v1462
    %v1533 = vunpack.c.h.b16 %v1462
    %v1534 = vunpack.c.l.b16 %v1463
    %v1535 = vunpack.c.h.b16 %v1463
    %v1536 = vunpack.c.l.b16 %v1464
    %v1537 = vunpack.c.h.b16 %v1464
    %v1538 = vunpack.c.l.b16 %v1465
    %v1539 = vunpack.c.h.b16 %v1465
    %v1540 = vunpack.c.l.b16 %v1466
    %v1541 = vunpack.c.h.b16 %v1466
    %v1542 = vunpack.c.l.b16 %v1467
    %v1543 = vunpack.c.h.b16 %v1467
    %v1544 = vunpack.c.l.b16 %v1468
    %v1545 = vunpack.c.h.b16 %v1468
    %v1546 = vunpack.c.l.b16 %v1469
    %v1547 = vunpack.c.h.b16 %v1469
    %v1548 = vunpack.c.l.b16 %v1470
    %v1549 = vunpack.c.h.b16 %v1470
    %v1550 = vunpack.c.l.b16 %v1471
    %v1551 = vunpack.c.h.b16 %v1471
    %v1552 = vunpack.c.l.b16 %v1472
    %v1553 = vunpack.c.h.b16 %v1472
    %v1554 = vunpack.c.l.b16 %v1473
    %v1555 = vunpack.c.h.b16 %v1473
    %v1556 = vunpack.c.l.b16 %v1474
    %v1557 = vunpack.c.h.b16 %v1474
    %v1558 = vunpack.c.l.b16 %v1475
    %v1559 = vunpack.c.h.b16 %v1475
    %v1560 = vunpack.c.l.b16 %v1476
    %v1561 = vunpack.c.h.b16 %v1476
    %v1562 = vunpack.c.l.b16 %v1477
    %v1563 = vunpack.c.h.b16 %v1477
    %v1564 = vunpack.c.l.b16 %v1478
    %v1565 = vunpack.c.h.b16 %v1478
    %v1566 = vunpack.c.l.b16 %v1479
    %v1567 = vunpack.c.h.b16 %v1479
    %v1568 = vunpack.c.l.b16 %v1480
    %v1569 = vunpack.c.h.b16 %v1480
    %v1570 = vunpack.c.l.b16 %v1481
    %v1571 = vunpack.c.h.b16 %v1481
    %v1572 = vunpack.c.l.b16 %v1482
    %v1573 = vunpack.c.h.b16 %v1482
    %v1574 = vunpack.c.l.b16 %v1483
    %v1575 = vunpack.c.h.b16 %v1483
    %v1576 = vunpack.c.l.b16 %v1484
    %v1577 = vunpack.c.h.b16 %v1484
    %v1578 = vunpack.c.l.b16 %v1485
    %v1579 = vunpack.c.h.b16 %v1485
    %v1580 = vunpack.c.l.b16 %v1486
    %v1581 = vunpack.c.h.b16 %v1486
    %v1582 = vunpack.c.l.b16 %v1487
    %v1583 = vunpack.c.h.b16 %v1487
    %v1584 = vpack.c.b16 %v1522, %v1520
    %v1585 = vpack.c.b16 %v1523, %v1521
    %v1586 = vpack.c.b16 %v1526, %v1524
    %v1587 = vpack.c.b16 %v1527, %v1525
    %v1588 = vpack.c.b16 %v1530, %v1528
    %v1589 = vpack.c.b16 %v1531, %v1529
    %v1590 = vpack.c.b16 %v1534, %v1532
    %v1591 = vpack.c.b16 %v1535, %v1533
    %v1592 = vpack.c.b16 %v1538, %v1536
    %v1593 = vpack.c.b16 %v1539, %v1537
    %v1594 = vpack.c.b16 %v1542, %v1540
    %v1595 = vpack.c.b16 %v1543, %v1541
    %v1596 = vpack.c.b16 %v1546, %v1544
    %v1597 = vpack.c.b16 %v1547, %v1545
    %v1598 = vpack.c.b16 %v1550, %v1548
    %v1599 = vpack.c.b16 %v1551, %v1549
    %v1600 = vpack.c.b16 %v1554, %v1552
    %v1601 = vpack.c.b16 %v1555, %v1553
    %v1602 = vpack.c.b16 %v1558, %v1556
    %v1603 = vpack.c.b16 %v1559, %v1557
    %v1604 = vpack.c.b16 %v1562, %v1560
    %v1605 = vpack.c.b16 %v1563, %v1561
    %v1606 = vpack.c.b16 %v1566, %v1564
    %v1607 = vpack.c.b16 %v1567, %v1565
    %v1608 = vpack.c.b16 %v1570, %v1568
    %v1609 = vpack.c.b16 %v1571, %v1569
    %v1610 = vpack.c.b16 %v1574, %v1572
    %v1611 = vpack.c.b16 %v1575, %v1573
    %v1612 = vpack.c.b16 %v1578, %v1576
    %v1613 = vpack.c.b16 %v1579, %v1577
    %v1614 = vpack.c.b16 %v1582, %v1580
    %v1615 = vpack.c.b16 %v1583, %v1581
    %1648 = vmatprep.subr.bf16.mxu0 %v1585
    %1649 = vmatpush1.bf16.msra.mxu0 %v1584
    %1650 = vmatprep.subr.bf16.mxu0 %v1587
    %1651 = vmatpush1.bf16.msra.mxu0 %v1586
    %1652 = vmatprep.subr.bf16.mxu0 %v1589
    %1653 = vmatpush1.bf16.msra.mxu0 %v1588
    %1654 = vmatprep.subr.bf16.mxu0 %v1591
    %1655 = vmatpush1.bf16.msra.mxu0 %v1590
    %1656 = vmatprep.subr.bf16.mxu0 %v1593
    %1657 = vmatpush1.bf16.msra.mxu0 %v1592
    %1658 = vmatprep.subr.bf16.mxu0 %v1595
    %1659 = vmatpush1.bf16.msra.mxu0 %v1594
    %1660 = vmatprep.subr.bf16.mxu0 %v1597
    %1661 = vmatpush1.bf16.msra.mxu0 %v1596
    %1662 = vmatprep.subr.bf16.mxu0 %v1599
    %1663 = vmatpush1.bf16.msra.mxu0 %v1598
    %1664 = vmatprep.subr.bf16.mxu0 %v1601
    %1665 = vmatpush1.bf16.msra.mxu0 %v1600
    %1666 = vmatprep.subr.bf16.mxu0 %v1603
    %1667 = vmatpush1.bf16.msra.mxu0 %v1602
    %1668 = vmatprep.subr.bf16.mxu0 %v1605
    %1669 = vmatpush1.bf16.msra.mxu0 %v1604
    %1670 = vmatprep.subr.bf16.mxu0 %v1607
    %1671 = vmatpush1.bf16.msra.mxu0 %v1606
    %1672 = vmatprep.subr.bf16.mxu0 %v1609
    %1673 = vmatpush1.bf16.msra.mxu0 %v1608
    %1674 = vmatprep.subr.bf16.mxu0 %v1611
    %1675 = vmatpush1.bf16.msra.mxu0 %v1610
    %1676 = vmatprep.subr.bf16.mxu0 %v1613
    %1677 = vmatpush1.bf16.msra.mxu0 %v1612
    %1678 = vmatprep.subr.bf16.mxu0 %v1615
    %1679 = vmatpush1.bf16.msra.mxu0 %v1614
    %1680 = vmatprep.mubr.bf16.mxu0 %v1448
    %1681 = vmatmul.mubr.bf16.gmra.mrb[0].mxu0 %v1447
    %v1682 = vpop.f32.mrb[0].mxu0
    %v1683 = vadd.f32 0.0, %v1682
    %v1684 = vpop.f32.mrb[0].mxu0
    %v1685 = vadd.f32 0.0, %v1684
    %v1686 = vpop.f32.mrb[0].mxu0
    %v1687 = vadd.f32 0.0, %v1686
    %v1688 = vpop.f32.mrb[0].mxu0
    %v1689 = vadd.f32 0.0, %v1688
    %1690 = vmatprep.mubr.bf16.mxu0 %v1450
    %1691 = vmatmul.mubr.bf16.gmra.mrb[0].mxu0 %v1449
    %v1692 = vpop.f32.mrb[0].mxu0
    %v1693 = vadd.f32 0.0, %v1692
    %v1694 = vpop.f32.mrb[0].mxu0
    %v1695 = vadd.f32 0.0, %v1694
    %v1696 = vpop.f32.mrb[0].mxu0
    %v1697 = vadd.f32 0.0, %v1696
    %v1698 = vpop.f32.mrb[0].mxu0
    %v1699 = vadd.f32 0.0, %v1698
    %1700 = vmatprep.mubr.bf16.mxu0 %v1452
    %1701 = vmatmul.mubr.bf16.gmra.mrb[0].mxu0 %v1451
    %v1702 = vpop.f32.mrb[0].mxu0
    %v1703 = vadd.f32 0.0, %v1702
    %v1704 = vpop.f32.mrb[0].mxu0
    %v1705 = vadd.f32 0.0, %v1704
    %v1706 = vpop.f32.mrb[0].mxu0
    %v1707 = vadd.f32 0.0, %v1706
    %v1708 = vpop.f32.mrb[0].mxu0
    %v1709 = vadd.f32 0.0, %v1708
    %1710 = vmatprep.mubr.bf16.mxu0 %v1454
    %1711 = vmatmul.mubr.bf16.gmra.mrb[0].mxu0 %v1453
    %v1712 = vpop.f32.mrb[0].mxu0
    %v1713 = vadd.f32 0.0, %v1712
    %v1714 = vpop.f32.mrb[0].mxu0
    %v1715 = vadd.f32 0.0, %v1714
    %v1716 = vpop.f32.mrb[0].mxu0
    %v1717 = vadd.f32 0.0, %v1716
    %v1718 = vpop.f32.mrb[0].mxu0
    %v1719 = vadd.f32 0.0, %v1718
    %1720 = vdwg.mxu0
    %v1721 = vadd.f32 %v1431, %v1683
    %v1722 = vadd.f32 %v1432, %v1685
    %v1723 = vadd.f32 %v1433, %v1687
    %v1724 = vadd.f32 %v1434, %v1689
    %v1725 = vadd.f32 %v1435, %v1693
    %v1726 = vadd.f32 %v1436, %v1695
    %v1727 = vadd.f32 %v1437, %v1697
    %v1728 = vadd.f32 %v1438, %v1699
    %v1729 = vadd.f32 %v1439, %v1703
    %v1730 = vadd.f32 %v1440, %v1705
    %v1731 = vadd.f32 %v1441, %v1707
    %v1732 = vadd.f32 %v1442, %v1709
    %v1733 = vadd.f32 %v1443, %v1713
    %v1734 = vadd.f32 %v1444, %v1715
    %v1735 = vadd.f32 %v1445, %v1717
    %v1736 = vadd.f32 %v1446, %v1719
    %v1737 = vrot.slane %v137, 1
    %v1738 = vsel %vm811, %v1737, %v812
    %v1739 = vrot.slane %v138, 1
    %v1740 = vsel %vm811, %v1739, %v812
    %v1741 = vrot.slane %v145, 1
    %v1742 = vsel %vm811, %v1741, %v812
    %v1743 = vrot.slane %v146, 1
    %v1744 = vsel %vm811, %v1743, %v812
    %v1749 = vpack.c.bf16 %v819, %v815
    %v1750 = vpack.c.bf16 %v821, %v817
    %v1751 = vpack.c.bf16 %v1738, %v823
    %v1752 = vpack.c.bf16 %v1740, %v825
    %v1753 = vpack.c.bf16 %v831, %v827
    %v1754 = vpack.c.bf16 %v833, %v829
    %v1755 = vpack.c.bf16 %v1742, %v835
    %v1756 = vpack.c.bf16 %v1744, %v837
    %s1757 = scalar_lea.vmem [#allocation5], 1280
    %v1758 = vld [vmem:[%s1757] sm:$0xff]
    %v1759 = vld [vmem:[%s1757 + $0x8] sm:$0xff]
    %v1760 = vld [vmem:[%s1757 + $0x10] sm:$0xff]
    %v1761 = vld [vmem:[%s1757 + $0x18] sm:$0xff]
    %v1762 = vld [vmem:[%s1757 + $0x20] sm:$0xff]
    %v1763 = vld [vmem:[%s1757 + $0x28] sm:$0xff]
    %v1764 = vld [vmem:[%s1757 + $0x30] sm:$0xff]
    %v1765 = vld [vmem:[%s1757 + $0x38] sm:$0xff]
    %v1766 = vld [vmem:[%s1757 + $0x40] sm:$0xff]
    %v1767 = vld [vmem:[%s1757 + $0x48] sm:$0xff]
    %v1768 = vld [vmem:[%s1757 + $0x50] sm:$0xff]
    %v1769 = vld [vmem:[%s1757 + $0x58] sm:$0xff]
    %v1770 = vld [vmem:[%s1757 + $0x60] sm:$0xff]
    %v1771 = vld [vmem:[%s1757 + $0x68] sm:$0xff]
    %v1772 = vld [vmem:[%s1757 + $0x70] sm:$0xff]
    %v1773 = vld [vmem:[%s1757 + $0x78] sm:$0xff]
    %v1774 = vld [vmem:[%s1757 + $0x80] sm:$0xff]
    %v1775 = vld [vmem:[%s1757 + $0x88] sm:$0xff]
    %v1776 = vld [vmem:[%s1757 + $0x90] sm:$0xff]
    %v1777 = vld [vmem:[%s1757 + $0x98] sm:$0xff]
    %v1778 = vld [vmem:[%s1757 + $0xa0] sm:$0xff]
    %v1779 = vld [vmem:[%s1757 + $0xa8] sm:$0xff]
    %v1780 = vld [vmem:[%s1757 + $0xb0] sm:$0xff]
    %v1781 = vld [vmem:[%s1757 + $0xb8] sm:$0xff]
    %v1782 = vld [vmem:[%s1757 + $0xc0] sm:$0xff]
    %v1783 = vld [vmem:[%s1757 + $0xc8] sm:$0xff]
    %v1784 = vld [vmem:[%s1757 + $0xd0] sm:$0xff]
    %v1785 = vld [vmem:[%s1757 + $0xd8] sm:$0xff]
    %v1786 = vld [vmem:[%s1757 + $0xe0] sm:$0xff]
    %v1787 = vld [vmem:[%s1757 + $0xe8] sm:$0xff]
    %v1788 = vld [vmem:[%s1757 + $0xf0] sm:$0xff]
    %v1789 = vld [vmem:[%s1757 + $0xf8] sm:$0xff]
    %v1822 = vunpack.c.l.b16 %v1758
    %v1823 = vunpack.c.h.b16 %v1758
    %v1824 = vunpack.c.l.b16 %v1759
    %v1825 = vunpack.c.h.b16 %v1759
    %v1826 = vunpack.c.l.b16 %v1760
    %v1827 = vunpack.c.h.b16 %v1760
    %v1828 = vunpack.c.l.b16 %v1761
    %v1829 = vunpack.c.h.b16 %v1761
    %v1830 = vunpack.c.l.b16 %v1762
    %v1831 = vunpack.c.h.b16 %v1762
    %v1832 = vunpack.c.l.b16 %v1763
    %v1833 = vunpack.c.h.b16 %v1763
    %v1834 = vunpack.c.l.b16 %v1764
    %v1835 = vunpack.c.h.b16 %v1764
    %v1836 = vunpack.c.l.b16 %v1765
    %v1837 = vunpack.c.h.b16 %v1765
    %v1838 = vunpack.c.l.b16 %v1766
    %v1839 = vunpack.c.h.b16 %v1766
    %v1840 = vunpack.c.l.b16 %v1767
    %v1841 = vunpack.c.h.b16 %v1767
    %v1842 = vunpack.c.l.b16 %v1768
    %v1843 = vunpack.c.h.b16 %v1768
    %v1844 = vunpack.c.l.b16 %v1769
    %v1845 = vunpack.c.h.b16 %v1769
    %v1846 = vunpack.c.l.b16 %v1770
    %v1847 = vunpack.c.h.b16 %v1770
    %v1848 = vunpack.c.l.b16 %v1771
    %v1849 = vunpack.c.h.b16 %v1771
    %v1850 = vunpack.c.l.b16 %v1772
    %v1851 = vunpack.c.h.b16 %v1772
    %v1852 = vunpack.c.l.b16 %v1773
    %v1853 = vunpack.c.h.b16 %v1773
    %v1854 = vunpack.c.l.b16 %v1774
    %v1855 = vunpack.c.h.b16 %v1774
    %v1856 = vunpack.c.l.b16 %v1775
    %v1857 = vunpack.c.h.b16 %v1775
    %v1858 = vunpack.c.l.b16 %v1776
    %v1859 = vunpack.c.h.b16 %v1776
    %v1860 = vunpack.c.l.b16 %v1777
    %v1861 = vunpack.c.h.b16 %v1777
    %v1862 = vunpack.c.l.b16 %v1778
    %v1863 = vunpack.c.h.b16 %v1778
    %v1864 = vunpack.c.l.b16 %v1779
    %v1865 = vunpack.c.h.b16 %v1779
    %v1866 = vunpack.c.l.b16 %v1780
    %v1867 = vunpack.c.h.b16 %v1780
    %v1868 = vunpack.c.l.b16 %v1781
    %v1869 = vunpack.c.h.b16 %v1781
    %v1870 = vunpack.c.l.b16 %v1782
    %v1871 = vunpack.c.h.b16 %v1782
    %v1872 = vunpack.c.l.b16 %v1783
    %v1873 = vunpack.c.h.b16 %v1783
    %v1874 = vunpack.c.l.b16 %v1784
    %v1875 = vunpack.c.h.b16 %v1784
    %v1876 = vunpack.c.l.b16 %v1785
    %v1877 = vunpack.c.h.b16 %v1785
    %v1878 = vunpack.c.l.b16 %v1786
    %v1879 = vunpack.c.h.b16 %v1786
    %v1880 = vunpack.c.l.b16 %v1787
    %v1881 = vunpack.c.h.b16 %v1787
    %v1882 = vunpack.c.l.b16 %v1788
    %v1883 = vunpack.c.h.b16 %v1788
    %v1884 = vunpack.c.l.b16 %v1789
    %v1885 = vunpack.c.h.b16 %v1789
    %v1886 = vpack.c.b16 %v1824, %v1822
    %v1887 = vpack.c.b16 %v1825, %v1823
    %v1888 = vpack.c.b16 %v1828, %v1826
    %v1889 = vpack.c.b16 %v1829, %v1827
    %v1890 = vpack.c.b16 %v1832, %v1830
    %v1891 = vpack.c.b16 %v1833, %v1831
    %v1892 = vpack.c.b16 %v1836, %v1834
    %v1893 = vpack.c.b16 %v1837, %v1835
    %v1894 = vpack.c.b16 %v1840, %v1838
    %v1895 = vpack.c.b16 %v1841, %v1839
    %v1896 = vpack.c.b16 %v1844, %v1842
    %v1897 = vpack.c.b16 %v1845, %v1843
    %v1898 = vpack.c.b16 %v1848, %v1846
    %v1899 = vpack.c.b16 %v1849, %v1847
    %v1900 = vpack.c.b16 %v1852, %v1850
    %v1901 = vpack.c.b16 %v1853, %v1851
    %v1902 = vpack.c.b16 %v1856, %v1854
    %v1903 = vpack.c.b16 %v1857, %v1855
    %v1904 = vpack.c.b16 %v1860, %v1858
    %v1905 = vpack.c.b16 %v1861, %v1859
    %v1906 = vpack.c.b16 %v1864, %v1862
    %v1907 = vpack.c.b16 %v1865, %v1863
    %v1908 = vpack.c.b16 %v1868, %v1866
    %v1909 = vpack.c.b16 %v1869, %v1867
    %v1910 = vpack.c.b16 %v1872, %v1870
    %v1911 = vpack.c.b16 %v1873, %v1871
    %v1912 = vpack.c.b16 %v1876, %v1874
    %v1913 = vpack.c.b16 %v1877, %v1875
    %v1914 = vpack.c.b16 %v1880, %v1878
    %v1915 = vpack.c.b16 %v1881, %v1879
    %v1916 = vpack.c.b16 %v1884, %v1882
    %v1917 = vpack.c.b16 %v1885, %v1883
    %1950 = vmatprep.subr.bf16.mxu0 %v1887
    %1951 = vmatpush1.bf16.msra.mxu0 %v1886
    %1952 = vmatprep.subr.bf16.mxu0 %v1889
    %1953 = vmatpush1.bf16.msra.mxu0 %v1888
    %1954 = vmatprep.subr.bf16.mxu0 %v1891
    %1955 = vmatpush1.bf16.msra.mxu0 %v1890
    %1956 = vmatprep.subr.bf16.mxu0 %v1893
    %1957 = vmatpush1.bf16.msra.mxu0 %v1892
    %1958 = vmatprep.subr.bf16.mxu0 %v1895
    %1959 = vmatpush1.bf16.msra.mxu0 %v1894
    %1960 = vmatprep.subr.bf16.mxu0 %v1897
    %1961 = vmatpush1.bf16.msra.mxu0 %v1896
    %1962 = vmatprep.subr.bf16.mxu0 %v1899
    %1963 = vmatpush1.bf16.msra.mxu0 %v1898
    %1964 = vmatprep.subr.bf16.mxu0 %v1901
    %1965 = vmatpush1.bf16.msra.mxu0 %v1900
    %1966 = vmatprep.subr.bf16.mxu0 %v1903
    %1967 = vmatpush1.bf16.msra.mxu0 %v1902
    %1968 = vmatprep.subr.bf16.mxu0 %v1905
    %1969 = vmatpush1.bf16.msra.mxu0 %v1904
    %1970 = vmatprep.subr.bf16.mxu0 %v1907
    %1971 = vmatpush1.bf16.msra.mxu0 %v1906
    %1972 = vmatprep.subr.bf16.mxu0 %v1909
    %1973 = vmatpush1.bf16.msra.mxu0 %v1908
    %1974 = vmatprep.subr.bf16.mxu0 %v1911
    %1975 = vmatpush1.bf16.msra.mxu0 %v1910
    %1976 = vmatprep.subr.bf16.mxu0 %v1913
    %1977 = vmatpush1.bf16.msra.mxu0 %v1912
    %1978 = vmatprep.subr.bf16.mxu0 %v1915
    %1979 = vmatpush1.bf16.msra.mxu0 %v1914
    %1980 = vmatprep.subr.bf16.mxu0 %v1917
    %1981 = vmatpush1.bf16.msra.mxu0 %v1916
    %1982 = vmatprep.mubr.bf16.mxu0 %v1750
    %1983 = vmatmul.mubr.bf16.gmra.mrb[0].mxu0 %v1749
    %v1984 = vpop.f32.mrb[0].mxu0
    %v1985 = vadd.f32 0.0, %v1984
    %v1986 = vpop.f32.mrb[0].mxu0
    %v1987 = vadd.f32 0.0, %v1986
    %v1988 = vpop.f32.mrb[0].mxu0
    %v1989 = vadd.f32 0.0, %v1988
    %v1990 = vpop.f32.mrb[0].mxu0
    %v1991 = vadd.f32 0.0, %v1990
    %1992 = vmatprep.mubr.bf16.mxu0 %v1752
    %1993 = vmatmul.mubr.bf16.gmra.mrb[0].mxu0 %v1751
    %v1994 = vpop.f32.mrb[0].mxu0
    %v1995 = vadd.f32 0.0, %v1994
    %v1996 = vpop.f32.mrb[0].mxu0
    %v1997 = vadd.f32 0.0, %v1996
    %v1998 = vpop.f32.mrb[0].mxu0
    %v1999 = vadd.f32 0.0, %v1998
    %v2000 = vpop.f32.mrb[0].mxu0
    %v2001 = vadd.f32 0.0, %v2000
    %2002 = vmatprep.mubr.bf16.mxu0 %v1754
    %2003 = vmatmul.mubr.bf16.gmra.mrb[0].mxu0 %v1753
    %v2004 = vpop.f32.mrb[0].mxu0
    %v2005 = vadd.f32 0.0, %v2004
    %v2006 = vpop.f32.mrb[0].mxu0
    %v2007 = vadd.f32 0.0, %v2006
    %v2008 = vpop.f32.mrb[0].mxu0
    %v2009 = vadd.f32 0.0, %v2008
    %v2010 = vpop.f32.mrb[0].mxu0
    %v2011 = vadd.f32 0.0, %v2010
    %2012 = vmatprep.mubr.bf16.mxu0 %v1756
    %2013 = vmatmul.mubr.bf16.gmra.mrb[0].mxu0 %v1755
    %v2014 = vpop.f32.mrb[0].mxu0
    %v2015 = vadd.f32 0.0, %v2014
    %v2016 = vpop.f32.mrb[0].mxu0
    %v2017 = vadd.f32 0.0, %v2016
    %v2018 = vpop.f32.mrb[0].mxu0
    %v2019 = vadd.f32 0.0, %v2018
    %v2020 = vpop.f32.mrb[0].mxu0
    %v2021 = vadd.f32 0.0, %v2020
    %2022 = vdwg.mxu0
    %v2023 = vadd.f32 %v1721, %v1985
    %v2024 = vadd.f32 %v1722, %v1987
    %v2025 = vadd.f32 %v1723, %v1989
    %v2026 = vadd.f32 %v1724, %v1991
    %v2027 = vadd.f32 %v1725, %v1995
    %v2028 = vadd.f32 %v1726, %v1997
    %v2029 = vadd.f32 %v1727, %v1999
    %v2030 = vadd.f32 %v1728, %v2001
    %v2031 = vadd.f32 %v1729, %v2005
    %v2032 = vadd.f32 %v1730, %v2007
    %v2033 = vadd.f32 %v1731, %v2009
    %v2034 = vadd.f32 %v1732, %v2011
    %v2035 = vadd.f32 %v1733, %v2015
    %v2036 = vadd.f32 %v1734, %v2017
    %v2037 = vadd.f32 %v1735, %v2019
    %v2038 = vadd.f32 %v1736, %v2021
    %v2039 = vpack.c.bf16 %v226, %v1146
    %v2040 = vpack.c.bf16 %v226, %v1148
    %v2041 = vpack.c.bf16 %v226, %v1150
    %v2042 = vpack.c.bf16 %v226, %v1152
    %s2043 = scalar_lea.vmem [#allocation5], 1536
    %v2044 = vld [vmem:[%s2043] sm:$0xff]
    %v2045 = vld [vmem:[%s2043 + $0x8] sm:$0xff]
    %v2046 = vld [vmem:[%s2043 + $0x10] sm:$0xff]
    %v2047 = vld [vmem:[%s2043 + $0x18] sm:$0xff]
    %v2048 = vld [vmem:[%s2043 + $0x20] sm:$0xff]
    %v2049 = vld [vmem:[%s2043 + $0x28] sm:$0xff]
    %v2050 = vld [vmem:[%s2043 + $0x30] sm:$0xff]
    %v2051 = vld [vmem:[%s2043 + $0x38] sm:$0xff]
    %v2052 = vld [vmem:[%s2043 + $0x40] sm:$0xff]
    %v2053 = vld [vmem:[%s2043 + $0x48] sm:$0xff]
    %v2054 = vld [vmem:[%s2043 + $0x50] sm:$0xff]
    %v2055 = vld [vmem:[%s2043 + $0x58] sm:$0xff]
    %v2056 = vld [vmem:[%s2043 + $0x60] sm:$0xff]
    %v2057 = vld [vmem:[%s2043 + $0x68] sm:$0xff]
    %v2058 = vld [vmem:[%s2043 + $0x70] sm:$0xff]
    %v2059 = vld [vmem:[%s2043 + $0x78] sm:$0xff]
    %v2060 = vld [vmem:[%s2043 + $0x80] sm:$0xff]
    %v2061 = vld [vmem:[%s2043 + $0x88] sm:$0xff]
    %v2062 = vld [vmem:[%s2043 + $0x90] sm:$0xff]
    %v2063 = vld [vmem:[%s2043 + $0x98] sm:$0xff]
    %v2064 = vld [vmem:[%s2043 + $0xa0] sm:$0xff]
    %v2065 = vld [vmem:[%s2043 + $0xa8] sm:$0xff]
    %v2066 = vld [vmem:[%s2043 + $0xb0] sm:$0xff]
    %v2067 = vld [vmem:[%s2043 + $0xb8] sm:$0xff]
    %v2068 = vld [vmem:[%s2043 + $0xc0] sm:$0xff]
    %v2069 = vld [vmem:[%s2043 + $0xc8] sm:$0xff]
    %v2070 = vld [vmem:[%s2043 + $0xd0] sm:$0xff]
    %v2071 = vld [vmem:[%s2043 + $0xd8] sm:$0xff]
    %v2072 = vld [vmem:[%s2043 + $0xe0] sm:$0xff]
    %v2073 = vld [vmem:[%s2043 + $0xe8] sm:$0xff]
    %v2074 = vld [vmem:[%s2043 + $0xf0] sm:$0xff]
    %v2075 = vld [vmem:[%s2043 + $0xf8] sm:$0xff]
    %v2108 = vunpack.c.l.b16 %v2044
    %v2109 = vunpack.c.h.b16 %v2044
    %v2110 = vunpack.c.l.b16 %v2045
    %v2111 = vunpack.c.h.b16 %v2045
    %v2112 = vunpack.c.l.b16 %v2046
    %v2113 = vunpack.c.h.b16 %v2046
    %v2114 = vunpack.c.l.b16 %v2047
    %v2115 = vunpack.c.h.b16 %v2047
    %v2116 = vunpack.c.l.b16 %v2048
    %v2117 = vunpack.c.h.b16 %v2048
    %v2118 = vunpack.c.l.b16 %v2049
    %v2119 = vunpack.c.h.b16 %v2049
    %v2120 = vunpack.c.l.b16 %v2050
    %v2121 = vunpack.c.h.b16 %v2050
    %v2122 = vunpack.c.l.b16 %v2051
    %v2123 = vunpack.c.h.b16 %v2051
    %v2124 = vunpack.c.l.b16 %v2052
    %v2125 = vunpack.c.h.b16 %v2052
    %v2126 = vunpack.c.l.b16 %v2053
    %v2127 = vunpack.c.h.b16 %v2053
    %v2128 = vunpack.c.l.b16 %v2054
    %v2129 = vunpack.c.h.b16 %v2054
    %v2130 = vunpack.c.l.b16 %v2055
    %v2131 = vunpack.c.h.b16 %v2055
    %v2132 = vunpack.c.l.b16 %v2056
    %v2133 = vunpack.c.h.b16 %v2056
    %v2134 = vunpack.c.l.b16 %v2057
    %v2135 = vunpack.c.h.b16 %v2057
    %v2136 = vunpack.c.l.b16 %v2058
    %v2137 = vunpack.c.h.b16 %v2058
    %v2138 = vunpack.c.l.b16 %v2059
    %v2139 = vunpack.c.h.b16 %v2059
    %v2140 = vunpack.c.l.b16 %v2060
    %v2141 = vunpack.c.h.b16 %v2060
    %v2142 = vunpack.c.l.b16 %v2061
    %v2143 = vunpack.c.h.b16 %v2061
    %v2144 = vunpack.c.l.b16 %v2062
    %v2145 = vunpack.c.h.b16 %v2062
    %v2146 = vunpack.c.l.b16 %v2063
    %v2147 = vunpack.c.h.b16 %v2063
    %v2148 = vunpack.c.l.b16 %v2064
    %v2149 = vunpack.c.h.b16 %v2064
    %v2150 = vunpack.c.l.b16 %v2065
    %v2151 = vunpack.c.h.b16 %v2065
    %v2152 = vunpack.c.l.b16 %v2066
    %v2153 = vunpack.c.h.b16 %v2066
    %v2154 = vunpack.c.l.b16 %v2067
    %v2155 = vunpack.c.h.b16 %v2067
    %v2156 = vunpack.c.l.b16 %v2068
    %v2157 = vunpack.c.h.b16 %v2068
    %v2158 = vunpack.c.l.b16 %v2069
    %v2159 = vunpack.c.h.b16 %v2069
    %v2160 = vunpack.c.l.b16 %v2070
    %v2161 = vunpack.c.h.b16 %v2070
    %v2162 = vunpack.c.l.b16 %v2071
    %v2163 = vunpack.c.h.b16 %v2071
    %v2164 = vunpack.c.l.b16 %v2072
    %v2165 = vunpack.c.h.b16 %v2072
    %v2166 = vunpack.c.l.b16 %v2073
    %v2167 = vunpack.c.h.b16 %v2073
    %v2168 = vunpack.c.l.b16 %v2074
    %v2169 = vunpack.c.h.b16 %v2074
    %v2170 = vunpack.c.l.b16 %v2075
    %v2171 = vunpack.c.h.b16 %v2075
    %v2172 = vpack.c.b16 %v2110, %v2108
    %v2173 = vpack.c.b16 %v2111, %v2109
    %v2174 = vpack.c.b16 %v2114, %v2112
    %v2175 = vpack.c.b16 %v2115, %v2113
    %v2176 = vpack.c.b16 %v2118, %v2116
    %v2177 = vpack.c.b16 %v2119, %v2117
    %v2178 = vpack.c.b16 %v2122, %v2120
    %v2179 = vpack.c.b16 %v2123, %v2121
    %v2180 = vpack.c.b16 %v2126, %v2124
    %v2181 = vpack.c.b16 %v2127, %v2125
    %v2182 = vpack.c.b16 %v2130, %v2128
    %v2183 = vpack.c.b16 %v2131, %v2129
    %v2184 = vpack.c.b16 %v2134, %v2132
    %v2185 = vpack.c.b16 %v2135, %v2133
    %v2186 = vpack.c.b16 %v2138, %v2136
    %v2187 = vpack.c.b16 %v2139, %v2137
    %v2188 = vpack.c.b16 %v2142, %v2140
    %v2189 = vpack.c.b16 %v2143, %v2141
    %v2190 = vpack.c.b16 %v2146, %v2144
    %v2191 = vpack.c.b16 %v2147, %v2145
    %v2192 = vpack.c.b16 %v2150, %v2148
    %v2193 = vpack.c.b16 %v2151, %v2149
    %v2194 = vpack.c.b16 %v2154, %v2152
    %v2195 = vpack.c.b16 %v2155, %v2153
    %v2196 = vpack.c.b16 %v2158, %v2156
    %v2197 = vpack.c.b16 %v2159, %v2157
    %v2198 = vpack.c.b16 %v2162, %v2160
    %v2199 = vpack.c.b16 %v2163, %v2161
    %v2200 = vpack.c.b16 %v2166, %v2164
    %v2201 = vpack.c.b16 %v2167, %v2165
    %v2202 = vpack.c.b16 %v2170, %v2168
    %v2203 = vpack.c.b16 %v2171, %v2169
    %2236 = vmatprep.subr.bf16.mxu0 %v2173
    %2237 = vmatpush1.bf16.msra.mxu0 %v2172
    %2238 = vmatprep.subr.bf16.mxu0 %v2175
    %2239 = vmatpush1.bf16.msra.mxu0 %v2174
    %2240 = vmatprep.subr.bf16.mxu0 %v2177
    %2241 = vmatpush1.bf16.msra.mxu0 %v2176
    %2242 = vmatprep.subr.bf16.mxu0 %v2179
    %2243 = vmatpush1.bf16.msra.mxu0 %v2178
    %2244 = vmatprep.subr.bf16.mxu0 %v2181
    %2245 = vmatpush1.bf16.msra.mxu0 %v2180
    %2246 = vmatprep.subr.bf16.mxu0 %v2183
    %2247 = vmatpush1.bf16.msra.mxu0 %v2182
    %2248 = vmatprep.subr.bf16.mxu0 %v2185
    %2249 = vmatpush1.bf16.msra.mxu0 %v2184
    %2250 = vmatprep.subr.bf16.mxu0 %v2187
    %2251 = vmatpush1.bf16.msra.mxu0 %v2186
    %2252 = vmatprep.subr.bf16.mxu0 %v2189
    %2253 = vmatpush1.bf16.msra.mxu0 %v2188
    %2254 = vmatprep.subr.bf16.mxu0 %v2191
    %2255 = vmatpush1.bf16.msra.mxu0 %v2190
    %2256 = vmatprep.subr.bf16.mxu0 %v2193
    %2257 = vmatpush1.bf16.msra.mxu0 %v2192
    %2258 = vmatprep.subr.bf16.mxu0 %v2195
    %2259 = vmatpush1.bf16.msra.mxu0 %v2194
    %2260 = vmatprep.subr.bf16.mxu0 %v2197
    %2261 = vmatpush1.bf16.msra.mxu0 %v2196
    %2262 = vmatprep.subr.bf16.mxu0 %v2199
    %2263 = vmatpush1.bf16.msra.mxu0 %v2198
    %2264 = vmatprep.subr.bf16.mxu0 %v2201
    %2265 = vmatpush1.bf16.msra.mxu0 %v2200
    %2266 = vmatprep.subr.bf16.mxu0 %v2203
    %2267 = vmatpush1.bf16.msra.mxu0 %v2202
    %2268 = vmatprep.mubr.bf16.mxu0 %v267
    %2269 = vmatmul.mubr.bf16.gmra.mrb[0].mxu0 %v266
    %v2270 = vpop.f32.mrb[0].mxu0
    %v2271 = vadd.f32 0.0, %v2270
    %v2272 = vpop.f32.mrb[0].mxu0
    %v2273 = vadd.f32 0.0, %v2272
    %v2274 = vpop.f32.mrb[0].mxu0
    %v2275 = vadd.f32 0.0, %v2274
    %v2276 = vpop.f32.mrb[0].mxu0
    %v2277 = vadd.f32 0.0, %v2276
    %2278 = vmatprep.mubr.bf16.mxu0 %v2040
    %2279 = vmatmul.mubr.bf16.gmra.mrb[0].mxu0 %v2039
    %v2280 = vpop.f32.mrb[0].mxu0
    %v2281 = vadd.f32 0.0, %v2280
    %v2282 = vpop.f32.mrb[0].mxu0
    %v2283 = vadd.f32 0.0, %v2282
    %v2284 = vpop.f32.mrb[0].mxu0
    %v2285 = vadd.f32 0.0, %v2284
    %v2286 = vpop.f32.mrb[0].mxu0
    %v2287 = vadd.f32 0.0, %v2286
    %2288 = vmatprep.mubr.bf16.mxu0 %v271
    %2289 = vmatmul.mubr.bf16.gmra.mrb[0].mxu0 %v270
    %v2290 = vpop.f32.mrb[0].mxu0
    %v2291 = vadd.f32 0.0, %v2290
    %v2292 = vpop.f32.mrb[0].mxu0
    %v2293 = vadd.f32 0.0, %v2292
    %v2294 = vpop.f32.mrb[0].mxu0
    %v2295 = vadd.f32 0.0, %v2294
    %v2296 = vpop.f32.mrb[0].mxu0
    %v2297 = vadd.f32 0.0, %v2296
    %2298 = vmatprep.mubr.bf16.mxu0 %v2042
    %2299 = vmatmul.mubr.bf16.gmra.mrb[0].mxu0 %v2041
    %v2300 = vpop.f32.mrb[0].mxu0
    %v2301 = vadd.f32 0.0, %v2300
    %v2302 = vpop.f32.mrb[0].mxu0
    %v2303 = vadd.f32 0.0, %v2302
    %v2304 = vpop.f32.mrb[0].mxu0
    %v2305 = vadd.f32 0.0, %v2304
    %v2306 = vpop.f32.mrb[0].mxu0
    %v2307 = vadd.f32 0.0, %v2306
    %2308 = vdwg.mxu0
    %v2309 = vadd.f32 %v2023, %v2271
    %v2310 = vadd.f32 %v2024, %v2273
    %v2311 = vadd.f32 %v2025, %v2275
    %v2312 = vadd.f32 %v2026, %v2277
    %v2313 = vadd.f32 %v2027, %v2281
    %v2314 = vadd.f32 %v2028, %v2283
    %v2315 = vadd.f32 %v2029, %v2285
    %v2316 = vadd.f32 %v2030, %v2287
    %v2317 = vadd.f32 %v2031, %v2291
    %v2318 = vadd.f32 %v2032, %v2293
    %v2319 = vadd.f32 %v2033, %v2295
    %v2320 = vadd.f32 %v2034, %v2297
    %v2321 = vadd.f32 %v2035, %v2301
    %v2322 = vadd.f32 %v2036, %v2303
    %v2323 = vadd.f32 %v2037, %v2305
    %v2324 = vadd.f32 %v2038, %v2307
    %v2325 = vpack.c.bf16 0.0, %v137
    %v2326 = vpack.c.bf16 0.0, %v138
    %v2327 = vpack.c.bf16 0.0, %v145
    %v2328 = vpack.c.bf16 0.0, %v146
    %s2329 = scalar_lea.vmem [#allocation5], 1792
    %v2330 = vld [vmem:[%s2329] sm:$0xff]
    %v2331 = vld [vmem:[%s2329 + $0x8] sm:$0xff]
    %v2332 = vld [vmem:[%s2329 + $0x10] sm:$0xff]
    %v2333 = vld [vmem:[%s2329 + $0x18] sm:$0xff]
    %v2334 = vld [vmem:[%s2329 + $0x20] sm:$0xff]
    %v2335 = vld [vmem:[%s2329 + $0x28] sm:$0xff]
    %v2336 = vld [vmem:[%s2329 + $0x30] sm:$0xff]
    %v2337 = vld [vmem:[%s2329 + $0x38] sm:$0xff]
    %v2338 = vld [vmem:[%s2329 + $0x40] sm:$0xff]
    %v2339 = vld [vmem:[%s2329 + $0x48] sm:$0xff]
    %v2340 = vld [vmem:[%s2329 + $0x50] sm:$0xff]
    %v2341 = vld [vmem:[%s2329 + $0x58] sm:$0xff]
    %v2342 = vld [vmem:[%s2329 + $0x60] sm:$0xff]
    %v2343 = vld [vmem:[%s2329 + $0x68] sm:$0xff]
    %v2344 = vld [vmem:[%s2329 + $0x70] sm:$0xff]
    %v2345 = vld [vmem:[%s2329 + $0x78] sm:$0xff]
    %v2346 = vld [vmem:[%s2329 + $0x80] sm:$0xff]
    %v2347 = vld [vmem:[%s2329 + $0x88] sm:$0xff]
    %v2348 = vld [vmem:[%s2329 + $0x90] sm:$0xff]
    %v2349 = vld [vmem:[%s2329 + $0x98] sm:$0xff]
    %v2350 = vld [vmem:[%s2329 + $0xa0] sm:$0xff]
    %v2351 = vld [vmem:[%s2329 + $0xa8] sm:$0xff]
    %v2352 = vld [vmem:[%s2329 + $0xb0] sm:$0xff]
    %v2353 = vld [vmem:[%s2329 + $0xb8] sm:$0xff]
    %v2354 = vld [vmem:[%s2329 + $0xc0] sm:$0xff]
    %v2355 = vld [vmem:[%s2329 + $0xc8] sm:$0xff]
    %v2356 = vld [vmem:[%s2329 + $0xd0] sm:$0xff]
    %v2357 = vld [vmem:[%s2329 + $0xd8] sm:$0xff]
    %v2358 = vld [vmem:[%s2329 + $0xe0] sm:$0xff]
    %v2359 = vld [vmem:[%s2329 + $0xe8] sm:$0xff]
    %v2360 = vld [vmem:[%s2329 + $0xf0] sm:$0xff]
    %v2361 = vld [vmem:[%s2329 + $0xf8] sm:$0xff]
    %v2394 = vunpack.c.l.b16 %v2330
    %v2395 = vunpack.c.h.b16 %v2330
    %v2396 = vunpack.c.l.b16 %v2331
    %v2397 = vunpack.c.h.b16 %v2331
    %v2398 = vunpack.c.l.b16 %v2332
    %v2399 = vunpack.c.h.b16 %v2332
    %v2400 = vunpack.c.l.b16 %v2333
    %v2401 = vunpack.c.h.b16 %v2333
    %v2402 = vunpack.c.l.b16 %v2334
    %v2403 = vunpack.c.h.b16 %v2334
    %v2404 = vunpack.c.l.b16 %v2335
    %v2405 = vunpack.c.h.b16 %v2335
    %v2406 = vunpack.c.l.b16 %v2336
    %v2407 = vunpack.c.h.b16 %v2336
    %v2408 = vunpack.c.l.b16 %v2337
    %v2409 = vunpack.c.h.b16 %v2337
    %v2410 = vunpack.c.l.b16 %v2338
    %v2411 = vunpack.c.h.b16 %v2338
    %v2412 = vunpack.c.l.b16 %v2339
    %v2413 = vunpack.c.h.b16 %v2339
    %v2414 = vunpack.c.l.b16 %v2340
    %v2415 = vunpack.c.h.b16 %v2340
    %v2416 = vunpack.c.l.b16 %v2341
    %v2417 = vunpack.c.h.b16 %v2341
    %v2418 = vunpack.c.l.b16 %v2342
    %v2419 = vunpack.c.h.b16 %v2342
    %v2420 = vunpack.c.l.b16 %v2343
    %v2421 = vunpack.c.h.b16 %v2343
    %v2422 = vunpack.c.l.b16 %v2344
    %v2423 = vunpack.c.h.b16 %v2344
    %v2424 = vunpack.c.l.b16 %v2345
    %v2425 = vunpack.c.h.b16 %v2345
    %v2426 = vunpack.c.l.b16 %v2346
    %v2427 = vunpack.c.h.b16 %v2346
    %v2428 = vunpack.c.l.b16 %v2347
    %v2429 = vunpack.c.h.b16 %v2347
    %v2430 = vunpack.c.l.b16 %v2348
    %v2431 = vunpack.c.h.b16 %v2348
    %v2432 = vunpack.c.l.b16 %v2349
    %v2433 = vunpack.c.h.b16 %v2349
    %v2434 = vunpack.c.l.b16 %v2350
    %v2435 = vunpack.c.h.b16 %v2350
    %v2436 = vunpack.c.l.b16 %v2351
    %v2437 = vunpack.c.h.b16 %v2351
    %v2438 = vunpack.c.l.b16 %v2352
    %v2439 = vunpack.c.h.b16 %v2352
    %v2440 = vunpack.c.l.b16 %v2353
    %v2441 = vunpack.c.h.b16 %v2353
    %v2442 = vunpack.c.l.b16 %v2354
    %v2443 = vunpack.c.h.b16 %v2354
    %v2444 = vunpack.c.l.b16 %v2355
    %v2445 = vunpack.c.h.b16 %v2355
    %v2446 = vunpack.c.l.b16 %v2356
    %v2447 = vunpack.c.h.b16 %v2356
    %v2448 = vunpack.c.l.b16 %v2357
    %v2449 = vunpack.c.h.b16 %v2357
    %v2450 = vunpack.c.l.b16 %v2358
    %v2451 = vunpack.c.h.b16 %v2358
    %v2452 = vunpack.c.l.b16 %v2359
    %v2453 = vunpack.c.h.b16 %v2359
    %v2454 = vunpack.c.l.b16 %v2360
    %v2455 = vunpack.c.h.b16 %v2360
    %v2456 = vunpack.c.l.b16 %v2361
    %v2457 = vunpack.c.h.b16 %v2361
    %v2458 = vpack.c.b16 %v2396, %v2394
    %v2459 = vpack.c.b16 %v2397, %v2395
    %v2460 = vpack.c.b16 %v2400, %v2398
    %v2461 = vpack.c.b16 %v2401, %v2399
    %v2462 = vpack.c.b16 %v2404, %v2402
    %v2463 = vpack.c.b16 %v2405, %v2403
    %v2464 = vpack.c.b16 %v2408, %v2406
    %v2465 = vpack.c.b16 %v2409, %v2407
    %v2466 = vpack.c.b16 %v2412, %v2410
    %v2467 = vpack.c.b16 %v2413, %v2411
    %v2468 = vpack.c.b16 %v2416, %v2414
    %v2469 = vpack.c.b16 %v2417, %v2415
    %v2470 = vpack.c.b16 %v2420, %v2418
    %v2471 = vpack.c.b16 %v2421, %v2419
    %v2472 = vpack.c.b16 %v2424, %v2422
    %v2473 = vpack.c.b16 %v2425, %v2423
    %v2474 = vpack.c.b16 %v2428, %v2426
    %v2475 = vpack.c.b16 %v2429, %v2427
    %v2476 = vpack.c.b16 %v2432, %v2430
    %v2477 = vpack.c.b16 %v2433, %v2431
    %v2478 = vpack.c.b16 %v2436, %v2434
    %v2479 = vpack.c.b16 %v2437, %v2435
    %v2480 = vpack.c.b16 %v2440, %v2438
    %v2481 = vpack.c.b16 %v2441, %v2439
    %v2482 = vpack.c.b16 %v2444, %v2442
    %v2483 = vpack.c.b16 %v2445, %v2443
    %v2484 = vpack.c.b16 %v2448, %v2446
    %v2485 = vpack.c.b16 %v2449, %v2447
    %v2486 = vpack.c.b16 %v2452, %v2450
    %v2487 = vpack.c.b16 %v2453, %v2451
    %v2488 = vpack.c.b16 %v2456, %v2454
    %v2489 = vpack.c.b16 %v2457, %v2455
    %2522 = vmatprep.subr.bf16.mxu0 %v2459
    %2523 = vmatpush1.bf16.msra.mxu0 %v2458
    %2524 = vmatprep.subr.bf16.mxu0 %v2461
    %2525 = vmatpush1.bf16.msra.mxu0 %v2460
    %2526 = vmatprep.subr.bf16.mxu0 %v2463
    %2527 = vmatpush1.bf16.msra.mxu0 %v2462
    %2528 = vmatprep.subr.bf16.mxu0 %v2465
    %2529 = vmatpush1.bf16.msra.mxu0 %v2464
    %2530 = vmatprep.subr.bf16.mxu0 %v2467
    %2531 = vmatpush1.bf16.msra.mxu0 %v2466
    %2532 = vmatprep.subr.bf16.mxu0 %v2469
    %2533 = vmatpush1.bf16.msra.mxu0 %v2468
    %2534 = vmatprep.subr.bf16.mxu0 %v2471
    %2535 = vmatpush1.bf16.msra.mxu0 %v2470
    %2536 = vmatprep.subr.bf16.mxu0 %v2473
    %2537 = vmatpush1.bf16.msra.mxu0 %v2472
    %2538 = vmatprep.subr.bf16.mxu0 %v2475
    %2539 = vmatpush1.bf16.msra.mxu0 %v2474
    %2540 = vmatprep.subr.bf16.mxu0 %v2477
    %2541 = vmatpush1.bf16.msra.mxu0 %v2476
    %2542 = vmatprep.subr.bf16.mxu0 %v2479
    %2543 = vmatpush1.bf16.msra.mxu0 %v2478
    %2544 = vmatprep.subr.bf16.mxu0 %v2481
    %2545 = vmatpush1.bf16.msra.mxu0 %v2480
    %2546 = vmatprep.subr.bf16.mxu0 %v2483
    %2547 = vmatpush1.bf16.msra.mxu0 %v2482
    %2548 = vmatprep.subr.bf16.mxu0 %v2485
    %2549 = vmatpush1.bf16.msra.mxu0 %v2484
    %2550 = vmatprep.subr.bf16.mxu0 %v2487
    %2551 = vmatpush1.bf16.msra.mxu0 %v2486
    %2552 = vmatprep.subr.bf16.mxu0 %v2489
    %2553 = vmatpush1.bf16.msra.mxu0 %v2488
    %2554 = vmatprep.mubr.bf16.mxu0 %v307
    %2555 = vmatmul.mubr.bf16.gmra.mrb[0].mxu0 %v306
    %v2556 = vpop.f32.mrb[0].mxu0
    %v2557 = vadd.f32 0.0, %v2556
    %v2558 = vpop.f32.mrb[0].mxu0
    %v2559 = vadd.f32 0.0, %v2558
    %v2560 = vpop.f32.mrb[0].mxu0
    %v2561 = vadd.f32 0.0, %v2560
    %v2562 = vpop.f32.mrb[0].mxu0
    %v2563 = vadd.f32 0.0, %v2562
    %2564 = vmatprep.mubr.bf16.mxu0 %v2326
    %2565 = vmatmul.mubr.bf16.gmra.mrb[0].mxu0 %v2325
    %v2566 = vpop.f32.mrb[0].mxu0
    %v2567 = vadd.f32 0.0, %v2566
    %v2568 = vpop.f32.mrb[0].mxu0
    %v2569 = vadd.f32 0.0, %v2568
    %v2570 = vpop.f32.mrb[0].mxu0
    %v2571 = vadd.f32 0.0, %v2570
    %v2572 = vpop.f32.mrb[0].mxu0
    %v2573 = vadd.f32 0.0, %v2572
    %2574 = vmatprep.mubr.bf16.mxu0 %v311
    %2575 = vmatmul.mubr.bf16.gmra.mrb[0].mxu0 %v310
    %v2576 = vpop.f32.mrb[0].mxu0
    %v2577 = vadd.f32 0.0, %v2576
    %v2578 = vpop.f32.mrb[0].mxu0
    %v2579 = vadd.f32 0.0, %v2578
    %v2580 = vpop.f32.mrb[0].mxu0
    %v2581 = vadd.f32 0.0, %v2580
    %v2582 = vpop.f32.mrb[0].mxu0
    %v2583 = vadd.f32 0.0, %v2582
    %2584 = vmatprep.mubr.bf16.mxu0 %v2328
    %2585 = vmatmul.mubr.bf16.gmra.mrb[0].mxu0 %v2327
    %v2586 = vpop.f32.mrb[0].mxu0
    %v2587 = vadd.f32 0.0, %v2586
    %v2588 = vpop.f32.mrb[0].mxu0
    %v2589 = vadd.f32 0.0, %v2588
    %v2590 = vpop.f32.mrb[0].mxu0
    %v2591 = vadd.f32 0.0, %v2590
    %v2592 = vpop.f32.mrb[0].mxu0
    %v2593 = vadd.f32 0.0, %v2592
    %2594 = vdwg.mxu0
    %v2595 = vadd.f32 %v2309, %v2557
    %v2596 = vadd.f32 %v2310, %v2559
    %v2597 = vadd.f32 %v2311, %v2561
    %v2598 = vadd.f32 %v2312, %v2563
    %v2599 = vadd.f32 %v2313, %v2567
    %v2600 = vadd.f32 %v2314, %v2569
    %v2601 = vadd.f32 %v2315, %v2571
    %v2602 = vadd.f32 %v2316, %v2573
    %v2603 = vadd.f32 %v2317, %v2577
    %v2604 = vadd.f32 %v2318, %v2579
    %v2605 = vadd.f32 %v2319, %v2581
    %v2606 = vadd.f32 %v2320, %v2583
    %v2607 = vadd.f32 %v2321, %v2587
    %v2608 = vadd.f32 %v2322, %v2589
    %v2609 = vadd.f32 %v2323, %v2591
    %v2610 = vadd.f32 %v2324, %v2593
    %v2611 = vpack.c.bf16 %v813, %v1738
    %v2612 = vpack.c.bf16 %v813, %v1740
    %v2613 = vpack.c.bf16 %v813, %v1742
    %v2614 = vpack.c.bf16 %v813, %v1744
    %s2615 = scalar_lea.vmem [#allocation5], 2048
    %v2616 = vld [vmem:[%s2615] sm:$0xff]
    %v2617 = vld [vmem:[%s2615 + $0x8] sm:$0xff]
    %v2618 = vld [vmem:[%s2615 + $0x10] sm:$0xff]
    %v2619 = vld [vmem:[%s2615 + $0x18] sm:$0xff]
    %v2620 = vld [vmem:[%s2615 + $0x20] sm:$0xff]
    %v2621 = vld [vmem:[%s2615 + $0x28] sm:$0xff]
    %v2622 = vld [vmem:[%s2615 + $0x30] sm:$0xff]
    %v2623 = vld [vmem:[%s2615 + $0x38] sm:$0xff]
    %v2624 = vld [vmem:[%s2615 + $0x40] sm:$0xff]
    %v2625 = vld [vmem:[%s2615 + $0x48] sm:$0xff]
    %v2626 = vld [vmem:[%s2615 + $0x50] sm:$0xff]
    %v2627 = vld [vmem:[%s2615 + $0x58] sm:$0xff]
    %v2628 = vld [vmem:[%s2615 + $0x60] sm:$0xff]
    %v2629 = vld [vmem:[%s2615 + $0x68] sm:$0xff]
    %v2630 = vld [vmem:[%s2615 + $0x70] sm:$0xff]
    %v2631 = vld [vmem:[%s2615 + $0x78] sm:$0xff]
    %v2632 = vld [vmem:[%s2615 + $0x80] sm:$0xff]
    %v2633 = vld [vmem:[%s2615 + $0x88] sm:$0xff]
    %v2634 = vld [vmem:[%s2615 + $0x90] sm:$0xff]
    %v2635 = vld [vmem:[%s2615 + $0x98] sm:$0xff]
    %v2636 = vld [vmem:[%s2615 + $0xa0] sm:$0xff]
    %v2637 = vld [vmem:[%s2615 + $0xa8] sm:$0xff]
    %v2638 = vld [vmem:[%s2615 + $0xb0] sm:$0xff]
    %v2639 = vld [vmem:[%s2615 + $0xb8] sm:$0xff]
    %v2640 = vld [vmem:[%s2615 + $0xc0] sm:$0xff]
    %v2641 = vld [vmem:[%s2615 + $0xc8] sm:$0xff]
    %v2642 = vld [vmem:[%s2615 + $0xd0] sm:$0xff]
    %v2643 = vld [vmem:[%s2615 + $0xd8] sm:$0xff]
    %v2644 = vld [vmem:[%s2615 + $0xe0] sm:$0xff]
    %v2645 = vld [vmem:[%s2615 + $0xe8] sm:$0xff]
    %v2646 = vld [vmem:[%s2615 + $0xf0] sm:$0xff]
    %v2647 = vld [vmem:[%s2615 + $0xf8] sm:$0xff]
    %v2680 = vunpack.c.l.b16 %v2616
    %v2681 = vunpack.c.h.b16 %v2616
    %v2682 = vunpack.c.l.b16 %v2617
    %v2683 = vunpack.c.h.b16 %v2617
    %v2684 = vunpack.c.l.b16 %v2618
    %v2685 = vunpack.c.h.b16 %v2618
    %v2686 = vunpack.c.l.b16 %v2619
    %v2687 = vunpack.c.h.b16 %v2619
    %v2688 = vunpack.c.l.b16 %v2620
    %v2689 = vunpack.c.h.b16 %v2620
    %v2690 = vunpack.c.l.b16 %v2621
    %v2691 = vunpack.c.h.b16 %v2621
    %v2692 = vunpack.c.l.b16 %v2622
    %v2693 = vunpack.c.h.b16 %v2622
    %v2694 = vunpack.c.l.b16 %v2623
    %v2695 = vunpack.c.h.b16 %v2623
    %v2696 = vunpack.c.l.b16 %v2624
    %v2697 = vunpack.c.h.b16 %v2624
    %v2698 = vunpack.c.l.b16 %v2625
    %v2699 = vunpack.c.h.b16 %v2625
    %v2700 = vunpack.c.l.b16 %v2626
    %v2701 = vunpack.c.h.b16 %v2626
    %v2702 = vunpack.c.l.b16 %v2627
    %v2703 = vunpack.c.h.b16 %v2627
    %v2704 = vunpack.c.l.b16 %v2628
    %v2705 = vunpack.c.h.b16 %v2628
    %v2706 = vunpack.c.l.b16 %v2629
    %v2707 = vunpack.c.h.b16 %v2629
    %v2708 = vunpack.c.l.b16 %v2630
    %v2709 = vunpack.c.h.b16 %v2630
    %v2710 = vunpack.c.l.b16 %v2631
    %v2711 = vunpack.c.h.b16 %v2631
    %v2712 = vunpack.c.l.b16 %v2632
    %v2713 = vunpack.c.h.b16 %v2632
    %v2714 = vunpack.c.l.b16 %v2633
    %v2715 = vunpack.c.h.b16 %v2633
    %v2716 = vunpack.c.l.b16 %v2634
    %v2717 = vunpack.c.h.b16 %v2634
    %v2718 = vunpack.c.l.b16 %v2635
    %v2719 = vunpack.c.h.b16 %v2635
    %v2720 = vunpack.c.l.b16 %v2636
    %v2721 = vunpack.c.h.b16 %v2636
    %v2722 = vunpack.c.l.b16 %v2637
    %v2723 = vunpack.c.h.b16 %v2637
    %v2724 = vunpack.c.l.b16 %v2638
    %v2725 = vunpack.c.h.b16 %v2638
    %v2726 = vunpack.c.l.b16 %v2639
    %v2727 = vunpack.c.h.b16 %v2639
    %v2728 = vunpack.c.l.b16 %v2640
    %v2729 = vunpack.c.h.b16 %v2640
    %v2730 = vunpack.c.l.b16 %v2641
    %v2731 = vunpack.c.h.b16 %v2641
    %v2732 = vunpack.c.l.b16 %v2642
    %v2733 = vunpack.c.h.b16 %v2642
    %v2734 = vunpack.c.l.b16 %v2643
    %v2735 = vunpack.c.h.b16 %v2643
    %v2736 = vunpack.c.l.b16 %v2644
    %v2737 = vunpack.c.h.b16 %v2644
    %v2738 = vunpack.c.l.b16 %v2645
    %v2739 = vunpack.c.h.b16 %v2645
    %v2740 = vunpack.c.l.b16 %v2646
    %v2741 = vunpack.c.h.b16 %v2646
    %v2742 = vunpack.c.l.b16 %v2647
    %v2743 = vunpack.c.h.b16 %v2647
    %v2744 = vpack.c.b16 %v2682, %v2680
    %v2745 = vpack.c.b16 %v2683, %v2681
    %v2746 = vpack.c.b16 %v2686, %v2684
    %v2747 = vpack.c.b16 %v2687, %v2685
    %v2748 = vpack.c.b16 %v2690, %v2688
    %v2749 = vpack.c.b16 %v2691, %v2689
    %v2750 = vpack.c.b16 %v2694, %v2692
    %v2751 = vpack.c.b16 %v2695, %v2693
    %v2752 = vpack.c.b16 %v2698, %v2696
    %v2753 = vpack.c.b16 %v2699, %v2697
    %v2754 = vpack.c.b16 %v2702, %v2700
    %v2755 = vpack.c.b16 %v2703, %v2701
    %v2756 = vpack.c.b16 %v2706, %v2704
    %v2757 = vpack.c.b16 %v2707, %v2705
    %v2758 = vpack.c.b16 %v2710, %v2708
    %v2759 = vpack.c.b16 %v2711, %v2709
    %v2760 = vpack.c.b16 %v2714, %v2712
    %v2761 = vpack.c.b16 %v2715, %v2713
    %v2762 = vpack.c.b16 %v2718, %v2716
    %v2763 = vpack.c.b16 %v2719, %v2717
    %v2764 = vpack.c.b16 %v2722, %v2720
    %v2765 = vpack.c.b16 %v2723, %v2721
    %v2766 = vpack.c.b16 %v2726, %v2724
    %v2767 = vpack.c.b16 %v2727, %v2725
    %v2768 = vpack.c.b16 %v2730, %v2728
    %v2769 = vpack.c.b16 %v2731, %v2729
    %v2770 = vpack.c.b16 %v2734, %v2732
    %v2771 = vpack.c.b16 %v2735, %v2733
    %v2772 = vpack.c.b16 %v2738, %v2736
    %v2773 = vpack.c.b16 %v2739, %v2737
    %v2774 = vpack.c.b16 %v2742, %v2740
    %v2775 = vpack.c.b16 %v2743, %v2741
    %2808 = vmatprep.subr.bf16.mxu0 %v2745
    %2809 = vmatpush1.bf16.msra.mxu0 %v2744
    %2810 = vmatprep.subr.bf16.mxu0 %v2747
    %2811 = vmatpush1.bf16.msra.mxu0 %v2746
    %2812 = vmatprep.subr.bf16.mxu0 %v2749
    %2813 = vmatpush1.bf16.msra.mxu0 %v2748
    %2814 = vmatprep.subr.bf16.mxu0 %v2751
    %2815 = vmatpush1.bf16.msra.mxu0 %v2750
    %2816 = vmatprep.subr.bf16.mxu0 %v2753
    %2817 = vmatpush1.bf16.msra.mxu0 %v2752
    %2818 = vmatprep.subr.bf16.mxu0 %v2755
    %2819 = vmatpush1.bf16.msra.mxu0 %v2754
    %2820 = vmatprep.subr.bf16.mxu0 %v2757
    %2821 = vmatpush1.bf16.msra.mxu0 %v2756
    %2822 = vmatprep.subr.bf16.mxu0 %v2759
    %2823 = vmatpush1.bf16.msra.mxu0 %v2758
    %2824 = vmatprep.subr.bf16.mxu0 %v2761
    %2825 = vmatpush1.bf16.msra.mxu0 %v2760
    %2826 = vmatprep.subr.bf16.mxu0 %v2763
    %2827 = vmatpush1.bf16.msra.mxu0 %v2762
    %2828 = vmatprep.subr.bf16.mxu0 %v2765
    %2829 = vmatpush1.bf16.msra.mxu0 %v2764
    %2830 = vmatprep.subr.bf16.mxu0 %v2767
    %2831 = vmatpush1.bf16.msra.mxu0 %v2766
    %2832 = vmatprep.subr.bf16.mxu0 %v2769
    %2833 = vmatpush1.bf16.msra.mxu0 %v2768
    %2834 = vmatprep.subr.bf16.mxu0 %v2771
    %2835 = vmatpush1.bf16.msra.mxu0 %v2770
    %2836 = vmatprep.subr.bf16.mxu0 %v2773
    %2837 = vmatpush1.bf16.msra.mxu0 %v2772
    %2838 = vmatprep.subr.bf16.mxu0 %v2775
    %2839 = vmatpush1.bf16.msra.mxu0 %v2774
    %2840 = vmatprep.mubr.bf16.mxu0 %v854
    %2841 = vmatmul.mubr.bf16.gmra.mrb[0].mxu0 %v853
    %v2842 = vpop.f32.mrb[0].mxu0
    %v2843 = vadd.f32 0.0, %v2842
    %v2844 = vpop.f32.mrb[0].mxu0
    %v2845 = vadd.f32 0.0, %v2844
    %v2846 = vpop.f32.mrb[0].mxu0
    %v2847 = vadd.f32 0.0, %v2846
    %v2848 = vpop.f32.mrb[0].mxu0
    %v2849 = vadd.f32 0.0, %v2848
    %2850 = vmatprep.mubr.bf16.mxu0 %v2612
    %2851 = vmatmul.mubr.bf16.gmra.mrb[0].mxu0 %v2611
    %v2852 = vpop.f32.mrb[0].mxu0
    %v2853 = vadd.f32 0.0, %v2852
    %v2854 = vpop.f32.mrb[0].mxu0
    %v2855 = vadd.f32 0.0, %v2854
    %v2856 = vpop.f32.mrb[0].mxu0
    %v2857 = vadd.f32 0.0, %v2856
    %v2858 = vpop.f32.mrb[0].mxu0
    %v2859 = vadd.f32 0.0, %v2858
    %2860 = vmatprep.mubr.bf16.mxu0 %v858
    %2861 = vmatmul.mubr.bf16.gmra.mrb[0].mxu0 %v857
    %v2862 = vpop.f32.mrb[0].mxu0
    %v2863 = vadd.f32 0.0, %v2862
    %v2864 = vpop.f32.mrb[0].mxu0
    %v2865 = vadd.f32 0.0, %v2864
    %v2866 = vpop.f32.mrb[0].mxu0
    %v2867 = vadd.f32 0.0, %v2866
    %v2868 = vpop.f32.mrb[0].mxu0
    %v2869 = vadd.f32 0.0, %v2868
    %2870 = vmatprep.mubr.bf16.mxu0 %v2614
    %2871 = vmatmul.mubr.bf16.gmra.mrb[0].mxu0 %v2613
    %v2872 = vpop.f32.mrb[0].mxu0
    %v2873 = vadd.f32 0.0, %v2872
    %v2874 = vpop.f32.mrb[0].mxu0
    %v2875 = vadd.f32 0.0, %v2874
    %v2876 = vpop.f32.mrb[0].mxu0
    %v2877 = vadd.f32 0.0, %v2876
    %v2878 = vpop.f32.mrb[0].mxu0
    %v2879 = vadd.f32 0.0, %v2878
    %2880 = vdwg.mxu0
    %v2881 = vadd.f32 %v2595, %v2843
    %v2882 = vadd.f32 %v2596, %v2845
    %v2883 = vadd.f32 %v2597, %v2847
    %v2884 = vadd.f32 %v2598, %v2849
    %v2885 = vadd.f32 %v2599, %v2853
    %v2886 = vadd.f32 %v2600, %v2855
    %v2887 = vadd.f32 %v2601, %v2857
    %v2888 = vadd.f32 %v2602, %v2859
    %v2889 = vadd.f32 %v2603, %v2863
    %v2890 = vadd.f32 %v2604, %v2865
    %v2891 = vadd.f32 %v2605, %v2867
    %v2892 = vadd.f32 %v2606, %v2869
    %v2893 = vadd.f32 %v2607, %v2873
    %v2894 = vadd.f32 %v2608, %v2875
    %v2895 = vadd.f32 %v2609, %v2877
    %v2896 = vadd.f32 %v2610, %v2879
    %v2897 = vld [vmem:[#allocation10] sm:$0x3]
    %v2898 = vld [vmem:[#allocation11] sm:$0x3]
    %v2899 = vadd.f32 %v2881, %v2883
    %v2900 = vadd.f32 %v2899, %v2885
    %v2901 = vadd.f32 %v2900, %v2887
    %v2902 = vadd.f32 %v2901, %v2889
    %v2903 = vadd.f32 %v2902, %v2891
    %v2904 = vadd.f32 %v2903, %v2893
    %v2905 = vadd.f32 %v2904, %v2895
    %v2906 = vrot.slane %v2905, 4
    %v2907 = vadd.f32 %v2905, %v2906
    %v2908 = vrot.slane %v2907, 2
    %v2909 = vadd.f32 %v2907, %v2908
    %v2910 = vrot.slane %v2909, 1
    %v2911 = vadd.f32 %v2909, %v2910
    %v2912 = vadd.f32 %v2882, %v2884
    %v2913 = vadd.f32 %v2912, %v2886
    %v2914 = vadd.f32 %v2913, %v2888
    %v2915 = vadd.f32 %v2914, %v2890
    %v2916 = vadd.f32 %v2915, %v2892
    %v2917 = vadd.f32 %v2916, %v2894
    %v2918 = vadd.f32 %v2917, %v2896
    %v2919 = vrot.slane %v2918, 4
    %v2920 = vadd.f32 %v2918, %v2919
    %v2921 = vrot.slane %v2920, 2
    %v2922 = vadd.f32 %v2920, %v2921
    %v2923 = vrot.slane %v2922, 1
    %v2924 = vadd.f32 %v2922, %v2923
    %v2925 = vmul.f32 %v2881, %v2881
    %v2926 = vmul.f32 %v2882, %v2882
    %v2927 = vmul.f32 %v2883, %v2883
    %v2928 = vmul.f32 %v2884, %v2884
    %v2929 = vmul.f32 %v2885, %v2885
    %v2930 = vmul.f32 %v2886, %v2886
    %v2931 = vmul.f32 %v2887, %v2887
    %v2932 = vmul.f32 %v2888, %v2888
    %v2933 = vmul.f32 %v2889, %v2889
    %v2934 = vmul.f32 %v2890, %v2890
    %v2935 = vmul.f32 %v2891, %v2891
    %v2936 = vmul.f32 %v2892, %v2892
    %v2937 = vmul.f32 %v2893, %v2893
    %v2938 = vmul.f32 %v2894, %v2894
    %v2939 = vmul.f32 %v2895, %v2895
    %v2940 = vmul.f32 %v2896, %v2896
    %v2941 = vadd.f32 %v2925, %v2927
    %v2942 = vadd.f32 %v2941, %v2929
    %v2943 = vadd.f32 %v2942, %v2931
    %v2944 = vadd.f32 %v2943, %v2933
    %v2945 = vadd.f32 %v2944, %v2935
    %v2946 = vadd.f32 %v2945, %v2937
    %v2947 = vadd.f32 %v2946, %v2939
    %v2948 = vrot.slane %v2947, 4
    %v2949 = vadd.f32 %v2947, %v2948
    %v2950 = vrot.slane %v2949, 2
    %v2951 = vadd.f32 %v2949, %v2950
    %v2952 = vrot.slane %v2951, 1
    %v2953 = vadd.f32 %v2951, %v2952
    %v2954 = vadd.f32 %v2926, %v2928
    %v2955 = vadd.f32 %v2954, %v2930
    %v2956 = vadd.f32 %v2955, %v2932
    %v2957 = vadd.f32 %v2956, %v2934
    %v2958 = vadd.f32 %v2957, %v2936
    %v2959 = vadd.f32 %v2958, %v2938
    %v2960 = vadd.f32 %v2959, %v2940
    %v2961 = vrot.slane %v2960, 4
    %v2962 = vadd.f32 %v2960, %v2961
    %v2963 = vrot.slane %v2962, 2
    %v2964 = vadd.f32 %v2962, %v2963
    %v2965 = vrot.slane %v2964, 1
    %v2966 = vadd.f32 %v2964, %v2965
    %2967 = vmatprep.subr.mxu0 %v148
    %2968 = vmatpush1.msra.mxu0 %v147
    %2969 = vmatprep.subr.mxu0 %v150
    %2970 = vmatpush1.msra.mxu0 %v149
    %2971 = vmatprep.subr.mxu0 %v152
    %2972 = vmatpush1.msra.mxu0 %v151
    %2973 = vmatprep.subr.mxu0 %v154
    %2974 = vmatpush1.msra.mxu0 %v153
    %2975 = vmatprep.subr.mxu0 %v156
    %2976 = vmatpush1.msra.mxu0 %v155
    %2977 = vmatprep.subr.mxu0 %v158
    %2978 = vmatpush1.msra.mxu0 %v157
    %2979 = vmatprep.subr.mxu0 %v160
    %2980 = vmatpush1.msra.mxu0 %v159
    %2981 = vmatprep.subr.mxu0 %v162
    %2982 = vmatpush1.msra.mxu0 %v161
    %2983 = vmatprep.subr.mxu0 %v164
    %2984 = vmatpush1.msra.mxu0 %v163
    %2985 = vmatprep.subr.mxu0 %v166
    %2986 = vmatpush1.msra.mxu0 %v165
    %2987 = vmatprep.subr.mxu0 %v168
    %2988 = vmatpush1.msra.mxu0 %v167
    %2989 = vmatprep.subr.mxu0 %v170
    %2990 = vmatpush1.msra.mxu0 %v169
    %2991 = vmatprep.subr.mxu0 %v172
    %2992 = vmatpush1.msra.mxu0 %v171
    %2993 = vmatprep.subr.mxu0 %v174
    %2994 = vmatpush1.msra.mxu0 %v173
    %2995 = vmatprep.subr.mxu0 %v176
    %2996 = vmatpush1.msra.mxu0 %v175
    %2997 = vmatprep.subr.mxu0 %v178
    %2998 = vmatpush1.msra.mxu0 %v177
    %2999 = vmatprep.subr.mxu0 %v180
    %3000 = vmatpush1.msra.mxu0 %v179
    %3001 = vmatprep.subr.mxu0 %v182
    %3002 = vmatpush1.msra.mxu0 %v181
    %3003 = vmatprep.subr.mxu0 %v184
    %3004 = vmatpush1.msra.mxu0 %v183
    %3005 = vmatprep.subr.mxu0 %v186
    %3006 = vmatpush1.msra.mxu0 %v185
    %3007 = vmatprep.subr.mxu0 %v188
    %3008 = vmatpush1.msra.mxu0 %v187
    %3009 = vmatprep.subr.mxu0 %v190
    %3010 = vmatpush1.msra.mxu0 %v189
    %3011 = vmatprep.subr.mxu0 %v192
    %3012 = vmatpush1.msra.mxu0 %v191
    %3013 = vmatprep.subr.mxu0 %v194
    %3014 = vmatpush1.msra.mxu0 %v193
    %3015 = vmatprep.subr.mxu0 %v196
    %3016 = vmatpush1.msra.mxu0 %v195
    %3017 = vmatprep.subr.mxu0 %v198
    %3018 = vmatpush1.msra.mxu0 %v197
    %3019 = vmatprep.subr.mxu0 %v200
    %3020 = vmatpush1.msra.mxu0 %v199
    %3021 = vmatprep.subr.mxu0 %v202
    %3022 = vmatpush1.msra.mxu0 %v201
    %3023 = vmatprep.subr.mxu0 %v204
    %3024 = vmatpush1.msra.mxu0 %v203
    %3025 = vmatprep.subr.mxu0 %v206
    %3026 = vmatpush1.msra.mxu0 %v205
    %3027 = vmatprep.subr.mxu0 %v208
    %3028 = vmatpush1.msra.mxu0 %v207
    %3029 = vmatprep.subr.mxu0 %v210
    %3030 = vmatpush1.msra.mxu0 %v209
    %3031 = vmatprep.mubr.f32.mxu0 %v2924
    %3032 = vmatmul.mubr.f32.gmra.mrb[0].mxu0 %v2911
    %v3033 = vpop.f32.mrb[0].mxu0
    %v3034 = vadd.f32 0.0, %v3033
    %v3035 = vpop.f32.mrb[0].mxu0
    %v3036 = vadd.f32 0.0, %v3035
    %3037 = vdwg.mxu0
    %3038 = vmatprep.subr.mxu0 %v148
    %3039 = vmatpush1.msra.mxu0 %v147
    %3040 = vmatprep.subr.mxu0 %v150
    %3041 = vmatpush1.msra.mxu0 %v149
    %3042 = vmatprep.subr.mxu0 %v152
    %3043 = vmatpush1.msra.mxu0 %v151
    %3044 = vmatprep.subr.mxu0 %v154
    %3045 = vmatpush1.msra.mxu0 %v153
    %3046 = vmatprep.subr.mxu0 %v156
    %3047 = vmatpush1.msra.mxu0 %v155
    %3048 = vmatprep.subr.mxu0 %v158
    %3049 = vmatpush1.msra.mxu0 %v157
    %3050 = vmatprep.subr.mxu0 %v160
    %3051 = vmatpush1.msra.mxu0 %v159
    %3052 = vmatprep.subr.mxu0 %v162
    %3053 = vmatpush1.msra.mxu0 %v161
    %3054 = vmatprep.subr.mxu0 %v164
    %3055 = vmatpush1.msra.mxu0 %v163
    %3056 = vmatprep.subr.mxu0 %v166
    %3057 = vmatpush1.msra.mxu0 %v165
    %3058 = vmatprep.subr.mxu0 %v168
    %3059 = vmatpush1.msra.mxu0 %v167
    %3060 = vmatprep.subr.mxu0 %v170
    %3061 = vmatpush1.msra.mxu0 %v169
    %3062 = vmatprep.subr.mxu0 %v172
    %3063 = vmatpush1.msra.mxu0 %v171
    %3064 = vmatprep.subr.mxu0 %v174
    %3065 = vmatpush1.msra.mxu0 %v173
    %3066 = vmatprep.subr.mxu0 %v176
    %3067 = vmatpush1.msra.mxu0 %v175
    %3068 = vmatprep.subr.mxu0 %v178
    %3069 = vmatpush1.msra.mxu0 %v177
    %3070 = vmatprep.subr.mxu0 %v180
    %3071 = vmatpush1.msra.mxu0 %v179
    %3072 = vmatprep.subr.mxu0 %v182
    %3073 = vmatpush1.msra.mxu0 %v181
    %3074 = vmatprep.subr.mxu0 %v184
    %3075 = vmatpush1.msra.mxu0 %v183
    %3076 = vmatprep.subr.mxu0 %v186
    %3077 = vmatpush1.msra.mxu0 %v185
    %3078 = vmatprep.subr.mxu0 %v188
    %3079 = vmatpush1.msra.mxu0 %v187
    %3080 = vmatprep.subr.mxu0 %v190
    %3081 = vmatpush1.msra.mxu0 %v189
    %3082 = vmatprep.subr.mxu0 %v192
    %3083 = vmatpush1.msra.mxu0 %v191
    %3084 = vmatprep.subr.mxu0 %v194
    %3085 = vmatpush1.msra.mxu0 %v193
    %3086 = vmatprep.subr.mxu0 %v196
    %3087 = vmatpush1.msra.mxu0 %v195
    %3088 = vmatprep.subr.mxu0 %v198
    %3089 = vmatpush1.msra.mxu0 %v197
    %3090 = vmatprep.subr.mxu0 %v200
    %3091 = vmatpush1.msra.mxu0 %v199
    %3092 = vmatprep.subr.mxu0 %v202
    %3093 = vmatpush1.msra.mxu0 %v201
    %3094 = vmatprep.subr.mxu0 %v204
    %3095 = vmatpush1.msra.mxu0 %v203
    %3096 = vmatprep.subr.mxu0 %v206
    %3097 = vmatpush1.msra.mxu0 %v205
    %3098 = vmatprep.subr.mxu0 %v208
    %3099 = vmatpush1.msra.mxu0 %v207
    %3100 = vmatprep.subr.mxu0 %v210
    %3101 = vmatpush1.msra.mxu0 %v209
    %3102 = vmatprep.mubr.f32.mxu0 %v2966
    %3103 = vmatmul.mubr.f32.gmra.mrb[0].mxu0 %v2953
    %v3104 = vpop.f32.mrb[0].mxu0
    %v3105 = vadd.f32 0.0, %v3104
    %v3106 = vpop.f32.mrb[0].mxu0
    %v3107 = vadd.f32 0.0, %v3106
    %3108 = vdwg.mxu0
    %v3109 = vmul.f32 %v3034, %v3034
    %v3110 = vmul.f32 %v3036, %v3036
    %v3111 = vsub.f32 %v3105, %v3109
    %v3112 = vsub.f32 %v3107, %v3110
    %v3113 = vadd.f32 %v3111, 1e-05
    %v3114 = vadd.f32 %v3112, 1e-05
    %v3115 = vrsqrt.pop %v3113
    %v3116 = vrsqrt.pop %v3114
    %v3119 = vcombine.low %v3115, %v3116
    %v3121 = vunpack.c.l.s4 1966171168
    %v3122 = vunpack.c.0.s8 %v3121
    %v3123 = vlaneseq
    %v3124 = vshrl.u32 %v3123, 7
    %v3125 = vsub.s32 %v3122, %v3124
    %v3126 = vrot.slane %v3119, %v3125
    %v3128 = vunpack.c.l.s4 1966171168
    %v3129 = vunpack.c.0.s8 %v3128
    %v3130 = vlaneseq
    %v3131 = vshrl.u32 %v3130, 7
    %v3132 = vsub.s32 %v3129, %v3131
    %v3133 = vrot.slane %v3126, %v3132
    %v3135 = vmul.f32 %v2897, %v3133
    %v3137 = vlaneseq
    %v3138 = vshrl.u32 %v3137, 7
    %v3139 = vsub.s32 0, %v3138
    %v3140 = vrot.slane %v3135, %v3139
    %v3141 = vlaneseq
    %v3142 = vshrl.u32 %v3141, 7
    %v3143 = vsub.s32 1, %v3142
    %v3144 = vrot.slane %v3135, %v3143
    %v3147 = vmul.f32 %v3034, %v3140
    %v3148 = vmul.f32 %v3036, %v3144
    %v3151 = vcombine.low %v3147, %v3148
    %v3153 = vunpack.c.l.s4 1966171168
    %v3154 = vunpack.c.0.s8 %v3153
    %v3155 = vlaneseq
    %v3156 = vshrl.u32 %v3155, 7
    %v3157 = vsub.s32 %v3154, %v3156
    %v3158 = vrot.slane %v3151, %v3157
    %v3160 = vunpack.c.l.s4 1966171168
    %v3161 = vunpack.c.0.s8 %v3160
    %v3162 = vlaneseq
    %v3163 = vshrl.u32 %v3162, 7
    %v3164 = vsub.s32 %v3161, %v3163
    %v3165 = vrot.slane %v3158, %v3164
    %v3167 = vsub.f32 %v2898, %v3165
    %v3168 = vmul.f32 %v2881, %v3140
    %v3169 = vmul.f32 %v2882, %v3144
    %v3170 = vmul.f32 %v2883, %v3140
    %v3171 = vmul.f32 %v2884, %v3144
    %v3172 = vmul.f32 %v2885, %v3140
    %v3173 = vmul.f32 %v2886, %v3144
    %v3174 = vmul.f32 %v2887, %v3140
    %v3175 = vmul.f32 %v2888, %v3144
    %v3176 = vmul.f32 %v2889, %v3140
    %v3177 = vmul.f32 %v2890, %v3144
    %v3178 = vmul.f32 %v2891, %v3140
    %v3179 = vmul.f32 %v2892, %v3144
    %v3180 = vmul.f32 %v2893, %v3140
    %v3181 = vmul.f32 %v2894, %v3144
    %v3182 = vmul.f32 %v2895, %v3140
    %v3183 = vmul.f32 %v2896, %v3144
    %v3185 = vlaneseq
    %v3186 = vshrl.u32 %v3185, 7
    %v3187 = vsub.s32 0, %v3186
    %v3188 = vrot.slane %v3167, %v3187
    %v3189 = vlaneseq
    %v3190 = vshrl.u32 %v3189, 7
    %v3191 = vsub.s32 1, %v3190
    %v3192 = vrot.slane %v3167, %v3191
    %v3195 = vadd.f32 %v3168, %v3188
    %v3196 = vadd.f32 %v3169, %v3192
    %v3197 = vadd.f32 %v3170, %v3188
    %v3198 = vadd.f32 %v3171, %v3192
    %v3199 = vadd.f32 %v3172, %v3188
    %v3200 = vadd.f32 %v3173, %v3192
    %v3201 = vadd.f32 %v3174, %v3188
    %v3202 = vadd.f32 %v3175, %v3192
    %v3203 = vadd.f32 %v3176, %v3188
    %v3204 = vadd.f32 %v3177, %v3192
    %v3205 = vadd.f32 %v3178, %v3188
    %v3206 = vadd.f32 %v3179, %v3192
    %v3207 = vadd.f32 %v3180, %v3188
    %v3208 = vadd.f32 %v3181, %v3192
    %v3209 = vadd.f32 %v3182, %v3188
    %v3210 = vadd.f32 %v3183, %v3192
    %v3211 = vmax.f32 %v3195, 0.0
    %v3212 = vmax.f32 %v3196, 0.0
    %v3213 = vmax.f32 %v3197, 0.0
    %v3214 = vmax.f32 %v3198, 0.0
    %v3215 = vmax.f32 %v3199, 0.0
    %v3216 = vmax.f32 %v3200, 0.0
    %v3217 = vmax.f32 %v3201, 0.0
    %v3218 = vmax.f32 %v3202, 0.0
    %v3219 = vmax.f32 %v3203, 0.0
    %v3220 = vmax.f32 %v3204, 0.0
    %v3221 = vmax.f32 %v3205, 0.0
    %v3222 = vmax.f32 %v3206, 0.0
    %v3223 = vmax.f32 %v3207, 0.0
    %v3224 = vmax.f32 %v3208, 0.0
    %v3225 = vmax.f32 %v3209, 0.0
    %v3226 = vmax.f32 %v3210, 0.0
    %v3239 = vrot.slane %v3211, 7
    %v3240 = vsel %vm224, %v225, %v3239
    %v3241 = vrot.slane %v3212, 7
    %v3242 = vsel %vm224, %v225, %v3241
    %v3243 = vrot.slane %v3213, 7
    %v3244 = vsel %vm224, %v225, %v3243
    %v3245 = vrot.slane %v3214, 7
    %v3246 = vsel %vm224, %v225, %v3245
    %v3247 = vrot.slane %v3215, 7
    %v3248 = vsel %vm224, %v225, %v3247
    %v3249 = vrot.slane %v3216, 7
    %v3250 = vsel %vm224, %v225, %v3249
    %v3251 = vrot.slane %v3219, 7
    %v3252 = vsel %vm224, %v225, %v3251
    %v3253 = vrot.slane %v3220, 7
    %v3254 = vsel %vm224, %v225, %v3253
    %v3255 = vrot.slane %v3221, 7
    %v3256 = vsel %vm224, %v225, %v3255
    %v3257 = vrot.slane %v3222, 7
    %v3258 = vsel %vm224, %v225, %v3257
    %v3259 = vrot.slane %v3223, 7
    %v3260 = vsel %vm224, %v225, %v3259
    %v3261 = vrot.slane %v3224, 7
    %v3262 = vsel %vm224, %v225, %v3261
    %v3275 = vpack.c.bf16 %v3240, %v226
    %v3276 = vpack.c.bf16 %v3242, %v226
    %v3277 = vpack.c.bf16 %v3248, %v3244
    %v3278 = vpack.c.bf16 %v3250, %v3246
    %v3279 = vpack.c.bf16 %v3252, %v226
    %v3280 = vpack.c.bf16 %v3254, %v226
    %v3281 = vpack.c.bf16 %v3260, %v3256
    %v3282 = vpack.c.bf16 %v3262, %v3258
    %v3283 = vld [vmem:[#allocation7] sm:$0xff]
    %v3284 = vld [vmem:[#allocation7 + $0x8] sm:$0xff]
    %v3285 = vld [vmem:[#allocation7 + $0x10] sm:$0xff]
    %v3286 = vld [vmem:[#allocation7 + $0x18] sm:$0xff]
    %v3287 = vld [vmem:[#allocation7 + $0x20] sm:$0xff]
    %v3288 = vld [vmem:[#allocation7 + $0x28] sm:$0xff]
    %v3289 = vld [vmem:[#allocation7 + $0x30] sm:$0xff]
    %v3290 = vld [vmem:[#allocation7 + $0x38] sm:$0xff]
    %v3291 = vld [vmem:[#allocation7 + $0x40] sm:$0xff]
    %v3292 = vld [vmem:[#allocation7 + $0x48] sm:$0xff]
    %v3293 = vld [vmem:[#allocation7 + $0x50] sm:$0xff]
    %v3294 = vld [vmem:[#allocation7 + $0x58] sm:$0xff]
    %v3295 = vld [vmem:[#allocation7 + $0x60] sm:$0xff]
    %v3296 = vld [vmem:[#allocation7 + $0x68] sm:$0xff]
    %v3297 = vld [vmem:[#allocation7 + $0x70] sm:$0xff]
    %v3298 = vld [vmem:[#allocation7 + $0x78] sm:$0xff]
    %v3299 = vld [vmem:[#allocation7 + $0x80] sm:$0xff]
    %v3300 = vld [vmem:[#allocation7 + $0x88] sm:$0xff]
    %v3301 = vld [vmem:[#allocation7 + $0x90] sm:$0xff]
    %v3302 = vld [vmem:[#allocation7 + $0x98] sm:$0xff]
    %v3303 = vld [vmem:[#allocation7 + $0xa0] sm:$0xff]
    %v3304 = vld [vmem:[#allocation7 + $0xa8] sm:$0xff]
    %v3305 = vld [vmem:[#allocation7 + $0xb0] sm:$0xff]
    %v3306 = vld [vmem:[#allocation7 + $0xb8] sm:$0xff]
    %v3307 = vld [vmem:[#allocation7 + $0xc0] sm:$0xff]
    %v3308 = vld [vmem:[#allocation7 + $0xc8] sm:$0xff]
    %v3309 = vld [vmem:[#allocation7 + $0xd0] sm:$0xff]
    %v3310 = vld [vmem:[#allocation7 + $0xd8] sm:$0xff]
    %v3311 = vld [vmem:[#allocation7 + $0xe0] sm:$0xff]
    %v3312 = vld [vmem:[#allocation7 + $0xe8] sm:$0xff]
    %v3313 = vld [vmem:[#allocation7 + $0xf0] sm:$0xff]
    %v3314 = vld [vmem:[#allocation7 + $0xf8] sm:$0xff]
    %v3315 = vpack.c.bf16 %v3211, 0.0
    %v3316 = vpack.c.bf16 %v3212, 0.0
    %v3317 = vpack.c.bf16 %v3215, %v3213
    %v3318 = vpack.c.bf16 %v3216, %v3214
    %v3319 = vpack.c.bf16 %v3219, 0.0
    %v3320 = vpack.c.bf16 %v3220, 0.0
    %v3321 = vpack.c.bf16 %v3223, %v3221
    %v3322 = vpack.c.bf16 %v3224, %v3222
    %s3323 = scalar_lea.vmem [#allocation7], 256
    %v3324 = vld [vmem:[%s3323] sm:$0xff]
    %v3325 = vld [vmem:[%s3323 + $0x8] sm:$0xff]
    %v3326 = vld [vmem:[%s3323 + $0x10] sm:$0xff]
    %v3327 = vld [vmem:[%s3323 + $0x18] sm:$0xff]
    %v3328 = vld [vmem:[%s3323 + $0x20] sm:$0xff]
    %v3329 = vld [vmem:[%s3323 + $0x28] sm:$0xff]
    %v3330 = vld [vmem:[%s3323 + $0x30] sm:$0xff]
    %v3331 = vld [vmem:[%s3323 + $0x38] sm:$0xff]
    %v3332 = vld [vmem:[%s3323 + $0x40] sm:$0xff]
    %v3333 = vld [vmem:[%s3323 + $0x48] sm:$0xff]
    %v3334 = vld [vmem:[%s3323 + $0x50] sm:$0xff]
    %v3335 = vld [vmem:[%s3323 + $0x58] sm:$0xff]
    %v3336 = vld [vmem:[%s3323 + $0x60] sm:$0xff]
    %v3337 = vld [vmem:[%s3323 + $0x68] sm:$0xff]
    %v3338 = vld [vmem:[%s3323 + $0x70] sm:$0xff]
    %v3339 = vld [vmem:[%s3323 + $0x78] sm:$0xff]
    %v3340 = vld [vmem:[%s3323 + $0x80] sm:$0xff]
    %v3341 = vld [vmem:[%s3323 + $0x88] sm:$0xff]
    %v3342 = vld [vmem:[%s3323 + $0x90] sm:$0xff]
    %v3343 = vld [vmem:[%s3323 + $0x98] sm:$0xff]
    %v3344 = vld [vmem:[%s3323 + $0xa0] sm:$0xff]
    %v3345 = vld [vmem:[%s3323 + $0xa8] sm:$0xff]
    %v3346 = vld [vmem:[%s3323 + $0xb0] sm:$0xff]
    %v3347 = vld [vmem:[%s3323 + $0xb8] sm:$0xff]
    %v3348 = vld [vmem:[%s3323 + $0xc0] sm:$0xff]
    %v3349 = vld [vmem:[%s3323 + $0xc8] sm:$0xff]
    %v3350 = vld [vmem:[%s3323 + $0xd0] sm:$0xff]
    %v3351 = vld [vmem:[%s3323 + $0xd8] sm:$0xff]
    %v3352 = vld [vmem:[%s3323 + $0xe0] sm:$0xff]
    %v3353 = vld [vmem:[%s3323 + $0xe8] sm:$0xff]
    %v3354 = vld [vmem:[%s3323 + $0xf0] sm:$0xff]
    %v3355 = vld [vmem:[%s3323 + $0xf8] sm:$0xff]
    %v3388 = vunpack.c.l.b16 %v3324
    %v3389 = vunpack.c.h.b16 %v3324
    %v3390 = vunpack.c.l.b16 %v3325
    %v3391 = vunpack.c.h.b16 %v3325
    %v3392 = vunpack.c.l.b16 %v3326
    %v3393 = vunpack.c.h.b16 %v3326
    %v3394 = vunpack.c.l.b16 %v3327
    %v3395 = vunpack.c.h.b16 %v3327
    %v3396 = vunpack.c.l.b16 %v3328
    %v3397 = vunpack.c.h.b16 %v3328
    %v3398 = vunpack.c.l.b16 %v3329
    %v3399 = vunpack.c.h.b16 %v3329
    %v3400 = vunpack.c.l.b16 %v3330
    %v3401 = vunpack.c.h.b16 %v3330
    %v3402 = vunpack.c.l.b16 %v3331
    %v3403 = vunpack.c.h.b16 %v3331
    %v3404 = vunpack.c.l.b16 %v3332
    %v3405 = vunpack.c.h.b16 %v3332
    %v3406 = vunpack.c.l.b16 %v3333
    %v3407 = vunpack.c.h.b16 %v3333
    %v3408 = vunpack.c.l.b16 %v3334
    %v3409 = vunpack.c.h.b16 %v3334
    %v3410 = vunpack.c.l.b16 %v3335
    %v3411 = vunpack.c.h.b16 %v3335
    %v3412 = vunpack.c.l.b16 %v3336
    %v3413 = vunpack.c.h.b16 %v3336
    %v3414 = vunpack.c.l.b16 %v3337
    %v3415 = vunpack.c.h.b16 %v3337
    %v3416 = vunpack.c.l.b16 %v3338
    %v3417 = vunpack.c.h.b16 %v3338
    %v3418 = vunpack.c.l.b16 %v3339
    %v3419 = vunpack.c.h.b16 %v3339
    %v3420 = vunpack.c.l.b16 %v3340
    %v3421 = vunpack.c.h.b16 %v3340
    %v3422 = vunpack.c.l.b16 %v3341
    %v3423 = vunpack.c.h.b16 %v3341
    %v3424 = vunpack.c.l.b16 %v3342
    %v3425 = vunpack.c.h.b16 %v3342
    %v3426 = vunpack.c.l.b16 %v3343
    %v3427 = vunpack.c.h.b16 %v3343
    %v3428 = vunpack.c.l.b16 %v3344
    %v3429 = vunpack.c.h.b16 %v3344
    %v3430 = vunpack.c.l.b16 %v3345
    %v3431 = vunpack.c.h.b16 %v3345
    %v3432 = vunpack.c.l.b16 %v3346
    %v3433 = vunpack.c.h.b16 %v3346
    %v3434 = vunpack.c.l.b16 %v3347
    %v3435 = vunpack.c.h.b16 %v3347
    %v3436 = vunpack.c.l.b16 %v3348
    %v3437 = vunpack.c.h.b16 %v3348
    %v3438 = vunpack.c.l.b16 %v3349
    %v3439 = vunpack.c.h.b16 %v3349
    %v3440 = vunpack.c.l.b16 %v3350
    %v3441 = vunpack.c.h.b16 %v3350
    %v3442 = vunpack.c.l.b16 %v3351
    %v3443 = vunpack.c.h.b16 %v3351
    %v3444 = vunpack.c.l.b16 %v3352
    %v3445 = vunpack.c.h.b16 %v3352
    %v3446 = vunpack.c.l.b16 %v3353
    %v3447 = vunpack.c.h.b16 %v3353
    %v3448 = vunpack.c.l.b16 %v3354
    %v3449 = vunpack.c.h.b16 %v3354
    %v3450 = vunpack.c.l.b16 %v3355
    %v3451 = vunpack.c.h.b16 %v3355
    %v3452 = vpack.c.b16 %v3390, %v3388
    %v3453 = vpack.c.b16 %v3391, %v3389
    %v3454 = vpack.c.b16 %v3394, %v3392
    %v3455 = vpack.c.b16 %v3395, %v3393
    %v3456 = vpack.c.b16 %v3398, %v3396
    %v3457 = vpack.c.b16 %v3399, %v3397
    %v3458 = vpack.c.b16 %v3402, %v3400
    %v3459 = vpack.c.b16 %v3403, %v3401
    %v3460 = vpack.c.b16 %v3406, %v3404
    %v3461 = vpack.c.b16 %v3407, %v3405
    %v3462 = vpack.c.b16 %v3410, %v3408
    %v3463 = vpack.c.b16 %v3411, %v3409
    %v3464 = vpack.c.b16 %v3414, %v3412
    %v3465 = vpack.c.b16 %v3415, %v3413
    %v3466 = vpack.c.b16 %v3418, %v3416
    %v3467 = vpack.c.b16 %v3419, %v3417
    %v3468 = vpack.c.b16 %v3422, %v3420
    %v3469 = vpack.c.b16 %v3423, %v3421
    %v3470 = vpack.c.b16 %v3426, %v3424
    %v3471 = vpack.c.b16 %v3427, %v3425
    %v3472 = vpack.c.b16 %v3430, %v3428
    %v3473 = vpack.c.b16 %v3431, %v3429
    %v3474 = vpack.c.b16 %v3434, %v3432
    %v3475 = vpack.c.b16 %v3435, %v3433
    %v3476 = vpack.c.b16 %v3438, %v3436
    %v3477 = vpack.c.b16 %v3439, %v3437
    %v3478 = vpack.c.b16 %v3442, %v3440
    %v3479 = vpack.c.b16 %v3443, %v3441
    %v3480 = vpack.c.b16 %v3446, %v3444
    %v3481 = vpack.c.b16 %v3447, %v3445
    %v3482 = vpack.c.b16 %v3450, %v3448
    %v3483 = vpack.c.b16 %v3451, %v3449
    %3516 = vmatprep.subr.bf16.mxu0 %v3453
    %3517 = vmatpush1.bf16.msra.mxu0 %v3452
    %3518 = vmatprep.subr.bf16.mxu0 %v3455
    %3519 = vmatpush1.bf16.msra.mxu0 %v3454
    %3520 = vmatprep.subr.bf16.mxu0 %v3457
    %3521 = vmatpush1.bf16.msra.mxu0 %v3456
    %3522 = vmatprep.subr.bf16.mxu0 %v3459
    %3523 = vmatpush1.bf16.msra.mxu0 %v3458
    %3524 = vmatprep.subr.bf16.mxu0 %v3461
    %3525 = vmatpush1.bf16.msra.mxu0 %v3460
    %3526 = vmatprep.subr.bf16.mxu0 %v3463
    %3527 = vmatpush1.bf16.msra.mxu0 %v3462
    %3528 = vmatprep.subr.bf16.mxu0 %v3465
    %3529 = vmatpush1.bf16.msra.mxu0 %v3464
    %3530 = vmatprep.subr.bf16.mxu0 %v3467
    %3531 = vmatpush1.bf16.msra.mxu0 %v3466
    %3532 = vmatprep.subr.bf16.mxu0 %v3469
    %3533 = vmatpush1.bf16.msra.mxu0 %v3468
    %3534 = vmatprep.subr.bf16.mxu0 %v3471
    %3535 = vmatpush1.bf16.msra.mxu0 %v3470
    %3536 = vmatprep.subr.bf16.mxu0 %v3473
    %3537 = vmatpush1.bf16.msra.mxu0 %v3472
    %3538 = vmatprep.subr.bf16.mxu0 %v3475
    %3539 = vmatpush1.bf16.msra.mxu0 %v3474
    %3540 = vmatprep.subr.bf16.mxu0 %v3477
    %3541 = vmatpush1.bf16.msra.mxu0 %v3476
    %3542 = vmatprep.subr.bf16.mxu0 %v3479
    %3543 = vmatpush1.bf16.msra.mxu0 %v3478
    %3544 = vmatprep.subr.bf16.mxu0 %v3481
    %3545 = vmatpush1.bf16.msra.mxu0 %v3480
    %3546 = vmatprep.subr.bf16.mxu0 %v3483
    %3547 = vmatpush1.bf16.msra.mxu0 %v3482
    %3548 = vmatprep.mubr.bf16.mxu0 %v3316
    %3549 = vmatmul.mubr.bf16.gmra.mrb[0].mxu0 %v3315
    %v3550 = vpop.f32.mrb[0].mxu0
    %v3551 = vadd.f32 0.0, %v3550
    %v3552 = vpop.f32.mrb[0].mxu0
    %v3553 = vadd.f32 0.0, %v3552
    %v3554 = vpop.f32.mrb[0].mxu0
    %v3555 = vadd.f32 0.0, %v3554
    %v3556 = vpop.f32.mrb[0].mxu0
    %v3557 = vadd.f32 0.0, %v3556
    %3558 = vmatprep.mubr.bf16.mxu0 %v3318
    %3559 = vmatmul.mubr.bf16.gmra.mrb[0].mxu0 %v3317
    %v3560 = vpop.f32.mrb[0].mxu0
    %v3561 = vadd.f32 0.0, %v3560
    %v3562 = vpop.f32.mrb[0].mxu0
    %v3563 = vadd.f32 0.0, %v3562
    %v3564 = vpop.f32.mrb[0].mxu0
    %v3565 = vadd.f32 0.0, %v3564
    %v3566 = vpop.f32.mrb[0].mxu0
    %v3567 = vadd.f32 0.0, %v3566
    %3568 = vmatprep.mubr.bf16.mxu0 %v3320
    %3569 = vmatmul.mubr.bf16.gmra.mrb[0].mxu0 %v3319
    %v3570 = vpop.f32.mrb[0].mxu0
    %v3571 = vadd.f32 0.0, %v3570
    %v3572 = vpop.f32.mrb[0].mxu0
    %v3573 = vadd.f32 0.0, %v3572
    %v3574 = vpop.f32.mrb[0].mxu0
    %v3575 = vadd.f32 0.0, %v3574
    %v3576 = vpop.f32.mrb[0].mxu0
    %v3577 = vadd.f32 0.0, %v3576
    %3578 = vmatprep.mubr.bf16.mxu0 %v3322
    %3579 = vmatmul.mubr.bf16.gmra.mrb[0].mxu0 %v3321
    %v3580 = vpop.f32.mrb[0].mxu0
    %v3581 = vadd.f32 0.0, %v3580
    %v3582 = vpop.f32.mrb[0].mxu0
    %v3583 = vadd.f32 0.0, %v3582
    %v3584 = vpop.f32.mrb[0].mxu0
    %v3585 = vadd.f32 0.0, %v3584
    %v3586 = vpop.f32.mrb[0].mxu0
    %v3587 = vadd.f32 0.0, %v3586
    %3588 = vdwg.mxu0
    %v3621 = vunpack.c.l.b16 %v3283
    %v3622 = vunpack.c.h.b16 %v3283
    %v3623 = vunpack.c.l.b16 %v3284
    %v3624 = vunpack.c.h.b16 %v3284
    %v3625 = vunpack.c.l.b16 %v3285
    %v3626 = vunpack.c.h.b16 %v3285
    %v3627 = vunpack.c.l.b16 %v3286
    %v3628 = vunpack.c.h.b16 %v3286
    %v3629 = vunpack.c.l.b16 %v3287
    %v3630 = vunpack.c.h.b16 %v3287
    %v3631 = vunpack.c.l.b16 %v3288
    %v3632 = vunpack.c.h.b16 %v3288
    %v3633 = vunpack.c.l.b16 %v3289
    %v3634 = vunpack.c.h.b16 %v3289
    %v3635 = vunpack.c.l.b16 %v3290
    %v3636 = vunpack.c.h.b16 %v3290
    %v3637 = vunpack.c.l.b16 %v3291
    %v3638 = vunpack.c.h.b16 %v3291
    %v3639 = vunpack.c.l.b16 %v3292
    %v3640 = vunpack.c.h.b16 %v3292
    %v3641 = vunpack.c.l.b16 %v3293
    %v3642 = vunpack.c.h.b16 %v3293
    %v3643 = vunpack.c.l.b16 %v3294
    %v3644 = vunpack.c.h.b16 %v3294
    %v3645 = vunpack.c.l.b16 %v3295
    %v3646 = vunpack.c.h.b16 %v3295
    %v3647 = vunpack.c.l.b16 %v3296
    %v3648 = vunpack.c.h.b16 %v3296
    %v3649 = vunpack.c.l.b16 %v3297
    %v3650 = vunpack.c.h.b16 %v3297
    %v3651 = vunpack.c.l.b16 %v3298
    %v3652 = vunpack.c.h.b16 %v3298
    %v3653 = vunpack.c.l.b16 %v3299
    %v3654 = vunpack.c.h.b16 %v3299
    %v3655 = vunpack.c.l.b16 %v3300
    %v3656 = vunpack.c.h.b16 %v3300
    %v3657 = vunpack.c.l.b16 %v3301
    %v3658 = vunpack.c.h.b16 %v3301
    %v3659 = vunpack.c.l.b16 %v3302
    %v3660 = vunpack.c.h.b16 %v3302
    %v3661 = vunpack.c.l.b16 %v3303
    %v3662 = vunpack.c.h.b16 %v3303
    %v3663 = vunpack.c.l.b16 %v3304
    %v3664 = vunpack.c.h.b16 %v3304
    %v3665 = vunpack.c.l.b16 %v3305
    %v3666 = vunpack.c.h.b16 %v3305
    %v3667 = vunpack.c.l.b16 %v3306
    %v3668 = vunpack.c.h.b16 %v3306
    %v3669 = vunpack.c.l.b16 %v3307
    %v3670 = vunpack.c.h.b16 %v3307
    %v3671 = vunpack.c.l.b16 %v3308
    %v3672 = vunpack.c.h.b16 %v3308
    %v3673 = vunpack.c.l.b16 %v3309
    %v3674 = vunpack.c.h.b16 %v3309
    %v3675 = vunpack.c.l.b16 %v3310
    %v3676 = vunpack.c.h.b16 %v3310
    %v3677 = vunpack.c.l.b16 %v3311
    %v3678 = vunpack.c.h.b16 %v3311
    %v3679 = vunpack.c.l.b16 %v3312
    %v3680 = vunpack.c.h.b16 %v3312
    %v3681 = vunpack.c.l.b16 %v3313
    %v3682 = vunpack.c.h.b16 %v3313
    %v3683 = vunpack.c.l.b16 %v3314
    %v3684 = vunpack.c.h.b16 %v3314
    %v3685 = vpack.c.b16 %v3623, %v3621
    %v3686 = vpack.c.b16 %v3624, %v3622
    %v3687 = vpack.c.b16 %v3627, %v3625
    %v3688 = vpack.c.b16 %v3628, %v3626
    %v3689 = vpack.c.b16 %v3631, %v3629
    %v3690 = vpack.c.b16 %v3632, %v3630
    %v3691 = vpack.c.b16 %v3635, %v3633
    %v3692 = vpack.c.b16 %v3636, %v3634
    %v3693 = vpack.c.b16 %v3639, %v3637
    %v3694 = vpack.c.b16 %v3640, %v3638
    %v3695 = vpack.c.b16 %v3643, %v3641
    %v3696 = vpack.c.b16 %v3644, %v3642
    %v3697 = vpack.c.b16 %v3647, %v3645
    %v3698 = vpack.c.b16 %v3648, %v3646
    %v3699 = vpack.c.b16 %v3651, %v3649
    %v3700 = vpack.c.b16 %v3652, %v3650
    %v3701 = vpack.c.b16 %v3655, %v3653
    %v3702 = vpack.c.b16 %v3656, %v3654
    %v3703 = vpack.c.b16 %v3659, %v3657
    %v3704 = vpack.c.b16 %v3660, %v3658
    %v3705 = vpack.c.b16 %v3663, %v3661
    %v3706 = vpack.c.b16 %v3664, %v3662
    %v3707 = vpack.c.b16 %v3667, %v3665
    %v3708 = vpack.c.b16 %v3668, %v3666
    %v3709 = vpack.c.b16 %v3671, %v3669
    %v3710 = vpack.c.b16 %v3672, %v3670
    %v3711 = vpack.c.b16 %v3675, %v3673
    %v3712 = vpack.c.b16 %v3676, %v3674
    %v3713 = vpack.c.b16 %v3679, %v3677
    %v3714 = vpack.c.b16 %v3680, %v3678
    %v3715 = vpack.c.b16 %v3683, %v3681
    %v3716 = vpack.c.b16 %v3684, %v3682
    %3749 = vmatprep.subr.bf16.mxu0 %v3686
    %3750 = vmatpush1.bf16.msra.mxu0 %v3685
    %3751 = vmatprep.subr.bf16.mxu0 %v3688
    %3752 = vmatpush1.bf16.msra.mxu0 %v3687
    %3753 = vmatprep.subr.bf16.mxu0 %v3690
    %3754 = vmatpush1.bf16.msra.mxu0 %v3689
    %3755 = vmatprep.subr.bf16.mxu0 %v3692
    %3756 = vmatpush1.bf16.msra.mxu0 %v3691
    %3757 = vmatprep.subr.bf16.mxu0 %v3694
    %3758 = vmatpush1.bf16.msra.mxu0 %v3693
    %3759 = vmatprep.subr.bf16.mxu0 %v3696
    %3760 = vmatpush1.bf16.msra.mxu0 %v3695
    %3761 = vmatprep.subr.bf16.mxu0 %v3698
    %3762 = vmatpush1.bf16.msra.mxu0 %v3697
    %3763 = vmatprep.subr.bf16.mxu0 %v3700
    %3764 = vmatpush1.bf16.msra.mxu0 %v3699
    %3765 = vmatprep.subr.bf16.mxu0 %v3702
    %3766 = vmatpush1.bf16.msra.mxu0 %v3701
    %3767 = vmatprep.subr.bf16.mxu0 %v3704
    %3768 = vmatpush1.bf16.msra.mxu0 %v3703
    %3769 = vmatprep.subr.bf16.mxu0 %v3706
    %3770 = vmatpush1.bf16.msra.mxu0 %v3705
    %3771 = vmatprep.subr.bf16.mxu0 %v3708
    %3772 = vmatpush1.bf16.msra.mxu0 %v3707
    %3773 = vmatprep.subr.bf16.mxu0 %v3710
    %3774 = vmatpush1.bf16.msra.mxu0 %v3709
    %3775 = vmatprep.subr.bf16.mxu0 %v3712
    %3776 = vmatpush1.bf16.msra.mxu0 %v3711
    %3777 = vmatprep.subr.bf16.mxu0 %v3714
    %3778 = vmatpush1.bf16.msra.mxu0 %v3713
    %3779 = vmatprep.subr.bf16.mxu0 %v3716
    %3780 = vmatpush1.bf16.msra.mxu0 %v3715
    %3781 = vmatprep.mubr.bf16.mxu0 %v3276
    %3782 = vmatmul.mubr.bf16.gmra.mrb[0].mxu0 %v3275
    %v3783 = vpop.f32.mrb[0].mxu0
    %v3784 = vadd.f32 %v3551, %v3783
    %v3785 = vpop.f32.mrb[0].mxu0
    %v3786 = vadd.f32 %v3553, %v3785
    %v3787 = vpop.f32.mrb[0].mxu0
    %v3788 = vadd.f32 %v3555, %v3787
    %v3789 = vpop.f32.mrb[0].mxu0
    %v3790 = vadd.f32 %v3557, %v3789
    %3791 = vmatprep.mubr.bf16.mxu0 %v3278
    %3792 = vmatmul.mubr.bf16.gmra.mrb[0].mxu0 %v3277
    %v3793 = vpop.f32.mrb[0].mxu0
    %v3794 = vadd.f32 %v3561, %v3793
    %v3795 = vpop.f32.mrb[0].mxu0
    %v3796 = vadd.f32 %v3563, %v3795
    %v3797 = vpop.f32.mrb[0].mxu0
    %v3798 = vadd.f32 %v3565, %v3797
    %v3799 = vpop.f32.mrb[0].mxu0
    %v3800 = vadd.f32 %v3567, %v3799
    %3801 = vmatprep.mubr.bf16.mxu0 %v3280
    %3802 = vmatmul.mubr.bf16.gmra.mrb[0].mxu0 %v3279
    %v3803 = vpop.f32.mrb[0].mxu0
    %v3804 = vadd.f32 %v3571, %v3803
    %v3805 = vpop.f32.mrb[0].mxu0
    %v3806 = vadd.f32 %v3573, %v3805
    %v3807 = vpop.f32.mrb[0].mxu0
    %v3808 = vadd.f32 %v3575, %v3807
    %v3809 = vpop.f32.mrb[0].mxu0
    %v3810 = vadd.f32 %v3577, %v3809
    %3811 = vmatprep.mubr.bf16.mxu0 %v3282
    %3812 = vmatmul.mubr.bf16.gmra.mrb[0].mxu0 %v3281
    %v3813 = vpop.f32.mrb[0].mxu0
    %v3814 = vadd.f32 %v3581, %v3813
    %v3815 = vpop.f32.mrb[0].mxu0
    %v3816 = vadd.f32 %v3583, %v3815
    %v3817 = vpop.f32.mrb[0].mxu0
    %v3818 = vadd.f32 %v3585, %v3817
    %v3819 = vpop.f32.mrb[0].mxu0
    %v3820 = vadd.f32 %v3587, %v3819
    %3821 = vdwg.mxu0
    %v3822 = vrot.slane %v3211, 1
    %v3823 = vsel %vm811, %v3822, %v812
    %v3824 = vrot.slane %v3212, 1
    %v3825 = vsel %vm811, %v3824, %v812
    %v3826 = vrot.slane %v3213, 1
    %v3827 = vsel %vm811, %v3826, %v812
    %v3828 = vrot.slane %v3214, 1
    %v3829 = vsel %vm811, %v3828, %v812
    %v3830 = vrot.slane %v3215, 1
    %v3831 = vsel %vm811, %v3830, %v812
    %v3832 = vrot.slane %v3216, 1
    %v3833 = vsel %vm811, %v3832, %v812
    %v3834 = vrot.slane %v3219, 1
    %v3835 = vsel %vm811, %v3834, %v812
    %v3836 = vrot.slane %v3220, 1
    %v3837 = vsel %vm811, %v3836, %v812
    %v3838 = vrot.slane %v3221, 1
    %v3839 = vsel %vm811, %v3838, %v812
    %v3840 = vrot.slane %v3222, 1
    %v3841 = vsel %vm811, %v3840, %v812
    %v3842 = vrot.slane %v3223, 1
    %v3843 = vsel %vm811, %v3842, %v812
    %v3844 = vrot.slane %v3224, 1
    %v3845 = vsel %vm811, %v3844, %v812
    %v3858 = vpack.c.bf16 %v3823, %v813
    %v3859 = vpack.c.bf16 %v3825, %v813
    %v3860 = vpack.c.bf16 %v3831, %v3827
    %v3861 = vpack.c.bf16 %v3833, %v3829
    %v3862 = vpack.c.bf16 %v3835, %v813
    %v3863 = vpack.c.bf16 %v3837, %v813
    %v3864 = vpack.c.bf16 %v3843, %v3839
    %v3865 = vpack.c.bf16 %v3845, %v3841
    %s3866 = scalar_lea.vmem [#allocation7], 512
    %v3867 = vld [vmem:[%s3866] sm:$0xff]
    %v3868 = vld [vmem:[%s3866 + $0x8] sm:$0xff]
    %v3869 = vld [vmem:[%s3866 + $0x10] sm:$0xff]
    %v3870 = vld [vmem:[%s3866 + $0x18] sm:$0xff]
    %v3871 = vld [vmem:[%s3866 + $0x20] sm:$0xff]
    %v3872 = vld [vmem:[%s3866 + $0x28] sm:$0xff]
    %v3873 = vld [vmem:[%s3866 + $0x30] sm:$0xff]
    %v3874 = vld [vmem:[%s3866 + $0x38] sm:$0xff]
    %v3875 = vld [vmem:[%s3866 + $0x40] sm:$0xff]
    %v3876 = vld [vmem:[%s3866 + $0x48] sm:$0xff]
    %v3877 = vld [vmem:[%s3866 + $0x50] sm:$0xff]
    %v3878 = vld [vmem:[%s3866 + $0x58] sm:$0xff]
    %v3879 = vld [vmem:[%s3866 + $0x60] sm:$0xff]
    %v3880 = vld [vmem:[%s3866 + $0x68] sm:$0xff]
    %v3881 = vld [vmem:[%s3866 + $0x70] sm:$0xff]
    %v3882 = vld [vmem:[%s3866 + $0x78] sm:$0xff]
    %v3883 = vld [vmem:[%s3866 + $0x80] sm:$0xff]
    %v3884 = vld [vmem:[%s3866 + $0x88] sm:$0xff]
    %v3885 = vld [vmem:[%s3866 + $0x90] sm:$0xff]
    %v3886 = vld [vmem:[%s3866 + $0x98] sm:$0xff]
    %v3887 = vld [vmem:[%s3866 + $0xa0] sm:$0xff]
    %v3888 = vld [vmem:[%s3866 + $0xa8] sm:$0xff]
    %v3889 = vld [vmem:[%s3866 + $0xb0] sm:$0xff]
    %v3890 = vld [vmem:[%s3866 + $0xb8] sm:$0xff]
    %v3891 = vld [vmem:[%s3866 + $0xc0] sm:$0xff]
    %v3892 = vld [vmem:[%s3866 + $0xc8] sm:$0xff]
    %v3893 = vld [vmem:[%s3866 + $0xd0] sm:$0xff]
    %v3894 = vld [vmem:[%s3866 + $0xd8] sm:$0xff]
    %v3895 = vld [vmem:[%s3866 + $0xe0] sm:$0xff]
    %v3896 = vld [vmem:[%s3866 + $0xe8] sm:$0xff]
    %v3897 = vld [vmem:[%s3866 + $0xf0] sm:$0xff]
    %v3898 = vld [vmem:[%s3866 + $0xf8] sm:$0xff]
    %v3931 = vunpack.c.l.b16 %v3867
    %v3932 = vunpack.c.h.b16 %v3867
    %v3933 = vunpack.c.l.b16 %v3868
    %v3934 = vunpack.c.h.b16 %v3868
    %v3935 = vunpack.c.l.b16 %v3869
    %v3936 = vunpack.c.h.b16 %v3869
    %v3937 = vunpack.c.l.b16 %v3870
    %v3938 = vunpack.c.h.b16 %v3870
    %v3939 = vunpack.c.l.b16 %v3871
    %v3940 = vunpack.c.h.b16 %v3871
    %v3941 = vunpack.c.l.b16 %v3872
    %v3942 = vunpack.c.h.b16 %v3872
    %v3943 = vunpack.c.l.b16 %v3873
    %v3944 = vunpack.c.h.b16 %v3873
    %v3945 = vunpack.c.l.b16 %v3874
    %v3946 = vunpack.c.h.b16 %v3874
    %v3947 = vunpack.c.l.b16 %v3875
    %v3948 = vunpack.c.h.b16 %v3875
    %v3949 = vunpack.c.l.b16 %v3876
    %v3950 = vunpack.c.h.b16 %v3876
    %v3951 = vunpack.c.l.b16 %v3877
    %v3952 = vunpack.c.h.b16 %v3877
    %v3953 = vunpack.c.l.b16 %v3878
    %v3954 = vunpack.c.h.b16 %v3878
    %v3955 = vunpack.c.l.b16 %v3879
    %v3956 = vunpack.c.h.b16 %v3879
    %v3957 = vunpack.c.l.b16 %v3880
    %v3958 = vunpack.c.h.b16 %v3880
    %v3959 = vunpack.c.l.b16 %v3881
    %v3960 = vunpack.c.h.b16 %v3881
    %v3961 = vunpack.c.l.b16 %v3882
    %v3962 = vunpack.c.h.b16 %v3882
    %v3963 = vunpack.c.l.b16 %v3883
    %v3964 = vunpack.c.h.b16 %v3883
    %v3965 = vunpack.c.l.b16 %v3884
    %v3966 = vunpack.c.h.b16 %v3884
    %v3967 = vunpack.c.l.b16 %v3885
    %v3968 = vunpack.c.h.b16 %v3885
    %v3969 = vunpack.c.l.b16 %v3886
    %v3970 = vunpack.c.h.b16 %v3886
    %v3971 = vunpack.c.l.b16 %v3887
    %v3972 = vunpack.c.h.b16 %v3887
    %v3973 = vunpack.c.l.b16 %v3888
    %v3974 = vunpack.c.h.b16 %v3888
    %v3975 = vunpack.c.l.b16 %v3889
    %v3976 = vunpack.c.h.b16 %v3889
    %v3977 = vunpack.c.l.b16 %v3890
    %v3978 = vunpack.c.h.b16 %v3890
    %v3979 = vunpack.c.l.b16 %v3891
    %v3980 = vunpack.c.h.b16 %v3891
    %v3981 = vunpack.c.l.b16 %v3892
    %v3982 = vunpack.c.h.b16 %v3892
    %v3983 = vunpack.c.l.b16 %v3893
    %v3984 = vunpack.c.h.b16 %v3893
    %v3985 = vunpack.c.l.b16 %v3894
    %v3986 = vunpack.c.h.b16 %v3894
    %v3987 = vunpack.c.l.b16 %v3895
    %v3988 = vunpack.c.h.b16 %v3895
    %v3989 = vunpack.c.l.b16 %v3896
    %v3990 = vunpack.c.h.b16 %v3896
    %v3991 = vunpack.c.l.b16 %v3897
    %v3992 = vunpack.c.h.b16 %v3897
    %v3993 = vunpack.c.l.b16 %v3898
    %v3994 = vunpack.c.h.b16 %v3898
    %v3995 = vpack.c.b16 %v3933, %v3931
    %v3996 = vpack.c.b16 %v3934, %v3932
    %v3997 = vpack.c.b16 %v3937, %v3935
    %v3998 = vpack.c.b16 %v3938, %v3936
    %v3999 = vpack.c.b16 %v3941, %v3939
    %v4000 = vpack.c.b16 %v3942, %v3940
    %v4001 = vpack.c.b16 %v3945, %v3943
    %v4002 = vpack.c.b16 %v3946, %v3944
    %v4003 = vpack.c.b16 %v3949, %v3947
    %v4004 = vpack.c.b16 %v3950, %v3948
    %v4005 = vpack.c.b16 %v3953, %v3951
    %v4006 = vpack.c.b16 %v3954, %v3952
    %v4007 = vpack.c.b16 %v3957, %v3955
    %v4008 = vpack.c.b16 %v3958, %v3956
    %v4009 = vpack.c.b16 %v3961, %v3959
    %v4010 = vpack.c.b16 %v3962, %v3960
    %v4011 = vpack.c.b16 %v3965, %v3963
    %v4012 = vpack.c.b16 %v3966, %v3964
    %v4013 = vpack.c.b16 %v3969, %v3967
    %v4014 = vpack.c.b16 %v3970, %v3968
    %v4015 = vpack.c.b16 %v3973, %v3971
    %v4016 = vpack.c.b16 %v3974, %v3972
    %v4017 = vpack.c.b16 %v3977, %v3975
    %v4018 = vpack.c.b16 %v3978, %v3976
    %v4019 = vpack.c.b16 %v3981, %v3979
    %v4020 = vpack.c.b16 %v3982, %v3980
    %v4021 = vpack.c.b16 %v3985, %v3983
    %v4022 = vpack.c.b16 %v3986, %v3984
    %v4023 = vpack.c.b16 %v3989, %v3987
    %v4024 = vpack.c.b16 %v3990, %v3988
    %v4025 = vpack.c.b16 %v3993, %v3991
    %v4026 = vpack.c.b16 %v3994, %v3992
    %4059 = vmatprep.subr.bf16.mxu0 %v3996
    %4060 = vmatpush1.bf16.msra.mxu0 %v3995
    %4061 = vmatprep.subr.bf16.mxu0 %v3998
    %4062 = vmatpush1.bf16.msra.mxu0 %v3997
    %4063 = vmatprep.subr.bf16.mxu0 %v4000
    %4064 = vmatpush1.bf16.msra.mxu0 %v3999
    %4065 = vmatprep.subr.bf16.mxu0 %v4002
    %4066 = vmatpush1.bf16.msra.mxu0 %v4001
    %4067 = vmatprep.subr.bf16.mxu0 %v4004
    %4068 = vmatpush1.bf16.msra.mxu0 %v4003
    %4069 = vmatprep.subr.bf16.mxu0 %v4006
    %4070 = vmatpush1.bf16.msra.mxu0 %v4005
    %4071 = vmatprep.subr.bf16.mxu0 %v4008
    %4072 = vmatpush1.bf16.msra.mxu0 %v4007
    %4073 = vmatprep.subr.bf16.mxu0 %v4010
    %4074 = vmatpush1.bf16.msra.mxu0 %v4009
    %4075 = vmatprep.subr.bf16.mxu0 %v4012
    %4076 = vmatpush1.bf16.msra.mxu0 %v4011
    %4077 = vmatprep.subr.bf16.mxu0 %v4014
    %4078 = vmatpush1.bf16.msra.mxu0 %v4013
    %4079 = vmatprep.subr.bf16.mxu0 %v4016
    %4080 = vmatpush1.bf16.msra.mxu0 %v4015
    %4081 = vmatprep.subr.bf16.mxu0 %v4018
    %4082 = vmatpush1.bf16.msra.mxu0 %v4017
    %4083 = vmatprep.subr.bf16.mxu0 %v4020
    %4084 = vmatpush1.bf16.msra.mxu0 %v4019
    %4085 = vmatprep.subr.bf16.mxu0 %v4022
    %4086 = vmatpush1.bf16.msra.mxu0 %v4021
    %4087 = vmatprep.subr.bf16.mxu0 %v4024
    %4088 = vmatpush1.bf16.msra.mxu0 %v4023
    %4089 = vmatprep.subr.bf16.mxu0 %v4026
    %4090 = vmatpush1.bf16.msra.mxu0 %v4025
    %4091 = vmatprep.mubr.bf16.mxu0 %v3859
    %4092 = vmatmul.mubr.bf16.gmra.mrb[0].mxu0 %v3858
    %v4093 = vpop.f32.mrb[0].mxu0
    %v4094 = vadd.f32 0.0, %v4093
    %v4095 = vpop.f32.mrb[0].mxu0
    %v4096 = vadd.f32 0.0, %v4095
    %v4097 = vpop.f32.mrb[0].mxu0
    %v4098 = vadd.f32 0.0, %v4097
    %v4099 = vpop.f32.mrb[0].mxu0
    %v4100 = vadd.f32 0.0, %v4099
    %4101 = vmatprep.mubr.bf16.mxu0 %v3861
    %4102 = vmatmul.mubr.bf16.gmra.mrb[0].mxu0 %v3860
    %v4103 = vpop.f32.mrb[0].mxu0
    %v4104 = vadd.f32 0.0, %v4103
    %v4105 = vpop.f32.mrb[0].mxu0
    %v4106 = vadd.f32 0.0, %v4105
    %v4107 = vpop.f32.mrb[0].mxu0
    %v4108 = vadd.f32 0.0, %v4107
    %v4109 = vpop.f32.mrb[0].mxu0
    %v4110 = vadd.f32 0.0, %v4109
    %4111 = vmatprep.mubr.bf16.mxu0 %v3863
    %4112 = vmatmul.mubr.bf16.gmra.mrb[0].mxu0 %v3862
    %v4113 = vpop.f32.mrb[0].mxu0
    %v4114 = vadd.f32 0.0, %v4113
    %v4115 = vpop.f32.mrb[0].mxu0
    %v4116 = vadd.f32 0.0, %v4115
    %v4117 = vpop.f32.mrb[0].mxu0
    %v4118 = vadd.f32 0.0, %v4117
    %v4119 = vpop.f32.mrb[0].mxu0
    %v4120 = vadd.f32 0.0, %v4119
    %4121 = vmatprep.mubr.bf16.mxu0 %v3865
    %4122 = vmatmul.mubr.bf16.gmra.mrb[0].mxu0 %v3864
    %v4123 = vpop.f32.mrb[0].mxu0
    %v4124 = vadd.f32 0.0, %v4123
    %v4125 = vpop.f32.mrb[0].mxu0
    %v4126 = vadd.f32 0.0, %v4125
    %v4127 = vpop.f32.mrb[0].mxu0
    %v4128 = vadd.f32 0.0, %v4127
    %v4129 = vpop.f32.mrb[0].mxu0
    %v4130 = vadd.f32 0.0, %v4129
    %4131 = vdwg.mxu0
    %v4132 = vadd.f32 %v3784, %v4094
    %v4133 = vadd.f32 %v3786, %v4096
    %v4134 = vadd.f32 %v3788, %v4098
    %v4135 = vadd.f32 %v3790, %v4100
    %v4136 = vadd.f32 %v3794, %v4104
    %v4137 = vadd.f32 %v3796, %v4106
    %v4138 = vadd.f32 %v3798, %v4108
    %v4139 = vadd.f32 %v3800, %v4110
    %v4140 = vadd.f32 %v3804, %v4114
    %v4141 = vadd.f32 %v3806, %v4116
    %v4142 = vadd.f32 %v3808, %v4118
    %v4143 = vadd.f32 %v3810, %v4120
    %v4144 = vadd.f32 %v3814, %v4124
    %v4145 = vadd.f32 %v3816, %v4126
    %v4146 = vadd.f32 %v3818, %v4128
    %v4147 = vadd.f32 %v3820, %v4130
    %v4152 = vrot.slane %v3217, 7
    %v4153 = vsel %vm224, %v225, %v4152
    %v4154 = vrot.slane %v3218, 7
    %v4155 = vsel %vm224, %v225, %v4154
    %v4156 = vrot.slane %v3225, 7
    %v4157 = vsel %vm224, %v225, %v4156
    %v4158 = vrot.slane %v3226, 7
    %v4159 = vsel %vm224, %v225, %v4158
    %v4164 = vpack.c.bf16 %v3244, %v3240
    %v4165 = vpack.c.bf16 %v3246, %v3242
    %v4166 = vpack.c.bf16 %v4153, %v3248
    %v4167 = vpack.c.bf16 %v4155, %v3250
    %v4168 = vpack.c.bf16 %v3256, %v3252
    %v4169 = vpack.c.bf16 %v3258, %v3254
    %v4170 = vpack.c.bf16 %v4157, %v3260
    %v4171 = vpack.c.bf16 %v4159, %v3262
    %s4172 = scalar_lea.vmem [#allocation7], 768
    %v4173 = vld [vmem:[%s4172] sm:$0xff]
    %v4174 = vld [vmem:[%s4172 + $0x8] sm:$0xff]
    %v4175 = vld [vmem:[%s4172 + $0x10] sm:$0xff]
    %v4176 = vld [vmem:[%s4172 + $0x18] sm:$0xff]
    %v4177 = vld [vmem:[%s4172 + $0x20] sm:$0xff]
    %v4178 = vld [vmem:[%s4172 + $0x28] sm:$0xff]
    %v4179 = vld [vmem:[%s4172 + $0x30] sm:$0xff]
    %v4180 = vld [vmem:[%s4172 + $0x38] sm:$0xff]
    %v4181 = vld [vmem:[%s4172 + $0x40] sm:$0xff]
    %v4182 = vld [vmem:[%s4172 + $0x48] sm:$0xff]
    %v4183 = vld [vmem:[%s4172 + $0x50] sm:$0xff]
    %v4184 = vld [vmem:[%s4172 + $0x58] sm:$0xff]
    %v4185 = vld [vmem:[%s4172 + $0x60] sm:$0xff]
    %v4186 = vld [vmem:[%s4172 + $0x68] sm:$0xff]
    %v4187 = vld [vmem:[%s4172 + $0x70] sm:$0xff]
    %v4188 = vld [vmem:[%s4172 + $0x78] sm:$0xff]
    %v4189 = vld [vmem:[%s4172 + $0x80] sm:$0xff]
    %v4190 = vld [vmem:[%s4172 + $0x88] sm:$0xff]
    %v4191 = vld [vmem:[%s4172 + $0x90] sm:$0xff]
    %v4192 = vld [vmem:[%s4172 + $0x98] sm:$0xff]
    %v4193 = vld [vmem:[%s4172 + $0xa0] sm:$0xff]
    %v4194 = vld [vmem:[%s4172 + $0xa8] sm:$0xff]
    %v4195 = vld [vmem:[%s4172 + $0xb0] sm:$0xff]
    %v4196 = vld [vmem:[%s4172 + $0xb8] sm:$0xff]
    %v4197 = vld [vmem:[%s4172 + $0xc0] sm:$0xff]
    %v4198 = vld [vmem:[%s4172 + $0xc8] sm:$0xff]
    %v4199 = vld [vmem:[%s4172 + $0xd0] sm:$0xff]
    %v4200 = vld [vmem:[%s4172 + $0xd8] sm:$0xff]
    %v4201 = vld [vmem:[%s4172 + $0xe0] sm:$0xff]
    %v4202 = vld [vmem:[%s4172 + $0xe8] sm:$0xff]
    %v4203 = vld [vmem:[%s4172 + $0xf0] sm:$0xff]
    %v4204 = vld [vmem:[%s4172 + $0xf8] sm:$0xff]
    %v4237 = vunpack.c.l.b16 %v4173
    %v4238 = vunpack.c.h.b16 %v4173
    %v4239 = vunpack.c.l.b16 %v4174
    %v4240 = vunpack.c.h.b16 %v4174
    %v4241 = vunpack.c.l.b16 %v4175
    %v4242 = vunpack.c.h.b16 %v4175
    %v4243 = vunpack.c.l.b16 %v4176
    %v4244 = vunpack.c.h.b16 %v4176
    %v4245 = vunpack.c.l.b16 %v4177
    %v4246 = vunpack.c.h.b16 %v4177
    %v4247 = vunpack.c.l.b16 %v4178
    %v4248 = vunpack.c.h.b16 %v4178
    %v4249 = vunpack.c.l.b16 %v4179
    %v4250 = vunpack.c.h.b16 %v4179
    %v4251 = vunpack.c.l.b16 %v4180
    %v4252 = vunpack.c.h.b16 %v4180
    %v4253 = vunpack.c.l.b16 %v4181
    %v4254 = vunpack.c.h.b16 %v4181
    %v4255 = vunpack.c.l.b16 %v4182
    %v4256 = vunpack.c.h.b16 %v4182
    %v4257 = vunpack.c.l.b16 %v4183
    %v4258 = vunpack.c.h.b16 %v4183
    %v4259 = vunpack.c.l.b16 %v4184
    %v4260 = vunpack.c.h.b16 %v4184
    %v4261 = vunpack.c.l.b16 %v4185
    %v4262 = vunpack.c.h.b16 %v4185
    %v4263 = vunpack.c.l.b16 %v4186
    %v4264 = vunpack.c.h.b16 %v4186
    %v4265 = vunpack.c.l.b16 %v4187
    %v4266 = vunpack.c.h.b16 %v4187
    %v4267 = vunpack.c.l.b16 %v4188
    %v4268 = vunpack.c.h.b16 %v4188
    %v4269 = vunpack.c.l.b16 %v4189
    %v4270 = vunpack.c.h.b16 %v4189
    %v4271 = vunpack.c.l.b16 %v4190
    %v4272 = vunpack.c.h.b16 %v4190
    %v4273 = vunpack.c.l.b16 %v4191
    %v4274 = vunpack.c.h.b16 %v4191
    %v4275 = vunpack.c.l.b16 %v4192
    %v4276 = vunpack.c.h.b16 %v4192
    %v4277 = vunpack.c.l.b16 %v4193
    %v4278 = vunpack.c.h.b16 %v4193
    %v4279 = vunpack.c.l.b16 %v4194
    %v4280 = vunpack.c.h.b16 %v4194
    %v4281 = vunpack.c.l.b16 %v4195
    %v4282 = vunpack.c.h.b16 %v4195
    %v4283 = vunpack.c.l.b16 %v4196
    %v4284 = vunpack.c.h.b16 %v4196
    %v4285 = vunpack.c.l.b16 %v4197
    %v4286 = vunpack.c.h.b16 %v4197
    %v4287 = vunpack.c.l.b16 %v4198
    %v4288 = vunpack.c.h.b16 %v4198
    %v4289 = vunpack.c.l.b16 %v4199
    %v4290 = vunpack.c.h.b16 %v4199
    %v4291 = vunpack.c.l.b16 %v4200
    %v4292 = vunpack.c.h.b16 %v4200
    %v4293 = vunpack.c.l.b16 %v4201
    %v4294 = vunpack.c.h.b16 %v4201
    %v4295 = vunpack.c.l.b16 %v4202
    %v4296 = vunpack.c.h.b16 %v4202
    %v4297 = vunpack.c.l.b16 %v4203
    %v4298 = vunpack.c.h.b16 %v4203
    %v4299 = vunpack.c.l.b16 %v4204
    %v4300 = vunpack.c.h.b16 %v4204
    %v4301 = vpack.c.b16 %v4239, %v4237
    %v4302 = vpack.c.b16 %v4240, %v4238
    %v4303 = vpack.c.b16 %v4243, %v4241
    %v4304 = vpack.c.b16 %v4244, %v4242
    %v4305 = vpack.c.b16 %v4247, %v4245
    %v4306 = vpack.c.b16 %v4248, %v4246
    %v4307 = vpack.c.b16 %v4251, %v4249
    %v4308 = vpack.c.b16 %v4252, %v4250
    %v4309 = vpack.c.b16 %v4255, %v4253
    %v4310 = vpack.c.b16 %v4256, %v4254
    %v4311 = vpack.c.b16 %v4259, %v4257
    %v4312 = vpack.c.b16 %v4260, %v4258
    %v4313 = vpack.c.b16 %v4263, %v4261
    %v4314 = vpack.c.b16 %v4264, %v4262
    %v4315 = vpack.c.b16 %v4267, %v4265
    %v4316 = vpack.c.b16 %v4268, %v4266
    %v4317 = vpack.c.b16 %v4271, %v4269
    %v4318 = vpack.c.b16 %v4272, %v4270
    %v4319 = vpack.c.b16 %v4275, %v4273
    %v4320 = vpack.c.b16 %v4276, %v4274
    %v4321 = vpack.c.b16 %v4279, %v4277
    %v4322 = vpack.c.b16 %v4280, %v4278
    %v4323 = vpack.c.b16 %v4283, %v4281
    %v4324 = vpack.c.b16 %v4284, %v4282
    %v4325 = vpack.c.b16 %v4287, %v4285
    %v4326 = vpack.c.b16 %v4288, %v4286
    %v4327 = vpack.c.b16 %v4291, %v4289
    %v4328 = vpack.c.b16 %v4292, %v4290
    %v4329 = vpack.c.b16 %v4295, %v4293
    %v4330 = vpack.c.b16 %v4296, %v4294
    %v4331 = vpack.c.b16 %v4299, %v4297
    %v4332 = vpack.c.b16 %v4300, %v4298
    %4365 = vmatprep.subr.bf16.mxu0 %v4302
    %4366 = vmatpush1.bf16.msra.mxu0 %v4301
    %4367 = vmatprep.subr.bf16.mxu0 %v4304
    %4368 = vmatpush1.bf16.msra.mxu0 %v4303
    %4369 = vmatprep.subr.bf16.mxu0 %v4306
    %4370 = vmatpush1.bf16.msra.mxu0 %v4305
    %4371 = vmatprep.subr.bf16.mxu0 %v4308
    %4372 = vmatpush1.bf16.msra.mxu0 %v4307
    %4373 = vmatprep.subr.bf16.mxu0 %v4310
    %4374 = vmatpush1.bf16.msra.mxu0 %v4309
    %4375 = vmatprep.subr.bf16.mxu0 %v4312
    %4376 = vmatpush1.bf16.msra.mxu0 %v4311
    %4377 = vmatprep.subr.bf16.mxu0 %v4314
    %4378 = vmatpush1.bf16.msra.mxu0 %v4313
    %4379 = vmatprep.subr.bf16.mxu0 %v4316
    %4380 = vmatpush1.bf16.msra.mxu0 %v4315
    %4381 = vmatprep.subr.bf16.mxu0 %v4318
    %4382 = vmatpush1.bf16.msra.mxu0 %v4317
    %4383 = vmatprep.subr.bf16.mxu0 %v4320
    %4384 = vmatpush1.bf16.msra.mxu0 %v4319
    %4385 = vmatprep.subr.bf16.mxu0 %v4322
    %4386 = vmatpush1.bf16.msra.mxu0 %v4321
    %4387 = vmatprep.subr.bf16.mxu0 %v4324
    %4388 = vmatpush1.bf16.msra.mxu0 %v4323
    %4389 = vmatprep.subr.bf16.mxu0 %v4326
    %4390 = vmatpush1.bf16.msra.mxu0 %v4325
    %4391 = vmatprep.subr.bf16.mxu0 %v4328
    %4392 = vmatpush1.bf16.msra.mxu0 %v4327
    %4393 = vmatprep.subr.bf16.mxu0 %v4330
    %4394 = vmatpush1.bf16.msra.mxu0 %v4329
    %4395 = vmatprep.subr.bf16.mxu0 %v4332
    %4396 = vmatpush1.bf16.msra.mxu0 %v4331
    %4397 = vmatprep.mubr.bf16.mxu0 %v4165
    %4398 = vmatmul.mubr.bf16.gmra.mrb[0].mxu0 %v4164
    %v4399 = vpop.f32.mrb[0].mxu0
    %v4400 = vadd.f32 0.0, %v4399
    %v4401 = vpop.f32.mrb[0].mxu0
    %v4402 = vadd.f32 0.0, %v4401
    %v4403 = vpop.f32.mrb[0].mxu0
    %v4404 = vadd.f32 0.0, %v4403
    %v4405 = vpop.f32.mrb[0].mxu0
    %v4406 = vadd.f32 0.0, %v4405
    %4407 = vmatprep.mubr.bf16.mxu0 %v4167
    %4408 = vmatmul.mubr.bf16.gmra.mrb[0].mxu0 %v4166
    %v4409 = vpop.f32.mrb[0].mxu0
    %v4410 = vadd.f32 0.0, %v4409
    %v4411 = vpop.f32.mrb[0].mxu0
    %v4412 = vadd.f32 0.0, %v4411
    %v4413 = vpop.f32.mrb[0].mxu0
    %v4414 = vadd.f32 0.0, %v4413
    %v4415 = vpop.f32.mrb[0].mxu0
    %v4416 = vadd.f32 0.0, %v4415
    %4417 = vmatprep.mubr.bf16.mxu0 %v4169
    %4418 = vmatmul.mubr.bf16.gmra.mrb[0].mxu0 %v4168
    %v4419 = vpop.f32.mrb[0].mxu0
    %v4420 = vadd.f32 0.0, %v4419
    %v4421 = vpop.f32.mrb[0].mxu0
    %v4422 = vadd.f32 0.0, %v4421
    %v4423 = vpop.f32.mrb[0].mxu0
    %v4424 = vadd.f32 0.0, %v4423
    %v4425 = vpop.f32.mrb[0].mxu0
    %v4426 = vadd.f32 0.0, %v4425
    %4427 = vmatprep.mubr.bf16.mxu0 %v4171
    %4428 = vmatmul.mubr.bf16.gmra.mrb[0].mxu0 %v4170
    %v4429 = vpop.f32.mrb[0].mxu0
    %v4430 = vadd.f32 0.0, %v4429
    %v4431 = vpop.f32.mrb[0].mxu0
    %v4432 = vadd.f32 0.0, %v4431
    %v4433 = vpop.f32.mrb[0].mxu0
    %v4434 = vadd.f32 0.0, %v4433
    %v4435 = vpop.f32.mrb[0].mxu0
    %v4436 = vadd.f32 0.0, %v4435
    %4437 = vdwg.mxu0
    %v4438 = vadd.f32 %v4132, %v4400
    %v4439 = vadd.f32 %v4133, %v4402
    %v4440 = vadd.f32 %v4134, %v4404
    %v4441 = vadd.f32 %v4135, %v4406
    %v4442 = vadd.f32 %v4136, %v4410
    %v4443 = vadd.f32 %v4137, %v4412
    %v4444 = vadd.f32 %v4138, %v4414
    %v4445 = vadd.f32 %v4139, %v4416
    %v4446 = vadd.f32 %v4140, %v4420
    %v4447 = vadd.f32 %v4141, %v4422
    %v4448 = vadd.f32 %v4142, %v4424
    %v4449 = vadd.f32 %v4143, %v4426
    %v4450 = vadd.f32 %v4144, %v4430
    %v4451 = vadd.f32 %v4145, %v4432
    %v4452 = vadd.f32 %v4146, %v4434
    %v4453 = vadd.f32 %v4147, %v4436
    %v4454 = vpack.c.bf16 %v3213, %v3211
    %v4455 = vpack.c.bf16 %v3214, %v3212
    %v4456 = vpack.c.bf16 %v3217, %v3215
    %v4457 = vpack.c.bf16 %v3218, %v3216
    %v4458 = vpack.c.bf16 %v3221, %v3219
    %v4459 = vpack.c.bf16 %v3222, %v3220
    %v4460 = vpack.c.bf16 %v3225, %v3223
    %v4461 = vpack.c.bf16 %v3226, %v3224
    %s4462 = scalar_lea.vmem [#allocation7], 1024
    %v4463 = vld [vmem:[%s4462] sm:$0xff]
    %v4464 = vld [vmem:[%s4462 + $0x8] sm:$0xff]
    %v4465 = vld [vmem:[%s4462 + $0x10] sm:$0xff]
    %v4466 = vld [vmem:[%s4462 + $0x18] sm:$0xff]
    %v4467 = vld [vmem:[%s4462 + $0x20] sm:$0xff]
    %v4468 = vld [vmem:[%s4462 + $0x28] sm:$0xff]
    %v4469 = vld [vmem:[%s4462 + $0x30] sm:$0xff]
    %v4470 = vld [vmem:[%s4462 + $0x38] sm:$0xff]
    %v4471 = vld [vmem:[%s4462 + $0x40] sm:$0xff]
    %v4472 = vld [vmem:[%s4462 + $0x48] sm:$0xff]
    %v4473 = vld [vmem:[%s4462 + $0x50] sm:$0xff]
    %v4474 = vld [vmem:[%s4462 + $0x58] sm:$0xff]
    %v4475 = vld [vmem:[%s4462 + $0x60] sm:$0xff]
    %v4476 = vld [vmem:[%s4462 + $0x68] sm:$0xff]
    %v4477 = vld [vmem:[%s4462 + $0x70] sm:$0xff]
    %v4478 = vld [vmem:[%s4462 + $0x78] sm:$0xff]
    %v4479 = vld [vmem:[%s4462 + $0x80] sm:$0xff]
    %v4480 = vld [vmem:[%s4462 + $0x88] sm:$0xff]
    %v4481 = vld [vmem:[%s4462 + $0x90] sm:$0xff]
    %v4482 = vld [vmem:[%s4462 + $0x98] sm:$0xff]
    %v4483 = vld [vmem:[%s4462 + $0xa0] sm:$0xff]
    %v4484 = vld [vmem:[%s4462 + $0xa8] sm:$0xff]
    %v4485 = vld [vmem:[%s4462 + $0xb0] sm:$0xff]
    %v4486 = vld [vmem:[%s4462 + $0xb8] sm:$0xff]
    %v4487 = vld [vmem:[%s4462 + $0xc0] sm:$0xff]
    %v4488 = vld [vmem:[%s4462 + $0xc8] sm:$0xff]
    %v4489 = vld [vmem:[%s4462 + $0xd0] sm:$0xff]
    %v4490 = vld [vmem:[%s4462 + $0xd8] sm:$0xff]
    %v4491 = vld [vmem:[%s4462 + $0xe0] sm:$0xff]
    %v4492 = vld [vmem:[%s4462 + $0xe8] sm:$0xff]
    %v4493 = vld [vmem:[%s4462 + $0xf0] sm:$0xff]
    %v4494 = vld [vmem:[%s4462 + $0xf8] sm:$0xff]
    %v4527 = vunpack.c.l.b16 %v4463
    %v4528 = vunpack.c.h.b16 %v4463
    %v4529 = vunpack.c.l.b16 %v4464
    %v4530 = vunpack.c.h.b16 %v4464
    %v4531 = vunpack.c.l.b16 %v4465
    %v4532 = vunpack.c.h.b16 %v4465
    %v4533 = vunpack.c.l.b16 %v4466
    %v4534 = vunpack.c.h.b16 %v4466
    %v4535 = vunpack.c.l.b16 %v4467
    %v4536 = vunpack.c.h.b16 %v4467
    %v4537 = vunpack.c.l.b16 %v4468
    %v4538 = vunpack.c.h.b16 %v4468
    %v4539 = vunpack.c.l.b16 %v4469
    %v4540 = vunpack.c.h.b16 %v4469
    %v4541 = vunpack.c.l.b16 %v4470
    %v4542 = vunpack.c.h.b16 %v4470
    %v4543 = vunpack.c.l.b16 %v4471
    %v4544 = vunpack.c.h.b16 %v4471
    %v4545 = vunpack.c.l.b16 %v4472
    %v4546 = vunpack.c.h.b16 %v4472
    %v4547 = vunpack.c.l.b16 %v4473
    %v4548 = vunpack.c.h.b16 %v4473
    %v4549 = vunpack.c.l.b16 %v4474
    %v4550 = vunpack.c.h.b16 %v4474
    %v4551 = vunpack.c.l.b16 %v4475
    %v4552 = vunpack.c.h.b16 %v4475
    %v4553 = vunpack.c.l.b16 %v4476
    %v4554 = vunpack.c.h.b16 %v4476
    %v4555 = vunpack.c.l.b16 %v4477
    %v4556 = vunpack.c.h.b16 %v4477
    %v4557 = vunpack.c.l.b16 %v4478
    %v4558 = vunpack.c.h.b16 %v4478
    %v4559 = vunpack.c.l.b16 %v4479
    %v4560 = vunpack.c.h.b16 %v4479
    %v4561 = vunpack.c.l.b16 %v4480
    %v4562 = vunpack.c.h.b16 %v4480
    %v4563 = vunpack.c.l.b16 %v4481
    %v4564 = vunpack.c.h.b16 %v4481
    %v4565 = vunpack.c.l.b16 %v4482
    %v4566 = vunpack.c.h.b16 %v4482
    %v4567 = vunpack.c.l.b16 %v4483
    %v4568 = vunpack.c.h.b16 %v4483
    %v4569 = vunpack.c.l.b16 %v4484
    %v4570 = vunpack.c.h.b16 %v4484
    %v4571 = vunpack.c.l.b16 %v4485
    %v4572 = vunpack.c.h.b16 %v4485
    %v4573 = vunpack.c.l.b16 %v4486
    %v4574 = vunpack.c.h.b16 %v4486
    %v4575 = vunpack.c.l.b16 %v4487
    %v4576 = vunpack.c.h.b16 %v4487
    %v4577 = vunpack.c.l.b16 %v4488
    %v4578 = vunpack.c.h.b16 %v4488
    %v4579 = vunpack.c.l.b16 %v4489
    %v4580 = vunpack.c.h.b16 %v4489
    %v4581 = vunpack.c.l.b16 %v4490
    %v4582 = vunpack.c.h.b16 %v4490
    %v4583 = vunpack.c.l.b16 %v4491
    %v4584 = vunpack.c.h.b16 %v4491
    %v4585 = vunpack.c.l.b16 %v4492
    %v4586 = vunpack.c.h.b16 %v4492
    %v4587 = vunpack.c.l.b16 %v4493
    %v4588 = vunpack.c.h.b16 %v4493
    %v4589 = vunpack.c.l.b16 %v4494
    %v4590 = vunpack.c.h.b16 %v4494
    %v4591 = vpack.c.b16 %v4529, %v4527
    %v4592 = vpack.c.b16 %v4530, %v4528
    %v4593 = vpack.c.b16 %v4533, %v4531
    %v4594 = vpack.c.b16 %v4534, %v4532
    %v4595 = vpack.c.b16 %v4537, %v4535
    %v4596 = vpack.c.b16 %v4538, %v4536
    %v4597 = vpack.c.b16 %v4541, %v4539
    %v4598 = vpack.c.b16 %v4542, %v4540
    %v4599 = vpack.c.b16 %v4545, %v4543
    %v4600 = vpack.c.b16 %v4546, %v4544
    %v4601 = vpack.c.b16 %v4549, %v4547
    %v4602 = vpack.c.b16 %v4550, %v4548
    %v4603 = vpack.c.b16 %v4553, %v4551
    %v4604 = vpack.c.b16 %v4554, %v4552
    %v4605 = vpack.c.b16 %v4557, %v4555
    %v4606 = vpack.c.b16 %v4558, %v4556
    %v4607 = vpack.c.b16 %v4561, %v4559
    %v4608 = vpack.c.b16 %v4562, %v4560
    %v4609 = vpack.c.b16 %v4565, %v4563
    %v4610 = vpack.c.b16 %v4566, %v4564
    %v4611 = vpack.c.b16 %v4569, %v4567
    %v4612 = vpack.c.b16 %v4570, %v4568
    %v4613 = vpack.c.b16 %v4573, %v4571
    %v4614 = vpack.c.b16 %v4574, %v4572
    %v4615 = vpack.c.b16 %v4577, %v4575
    %v4616 = vpack.c.b16 %v4578, %v4576
    %v4617 = vpack.c.b16 %v4581, %v4579
    %v4618 = vpack.c.b16 %v4582, %v4580
    %v4619 = vpack.c.b16 %v4585, %v4583
    %v4620 = vpack.c.b16 %v4586, %v4584
    %v4621 = vpack.c.b16 %v4589, %v4587
    %v4622 = vpack.c.b16 %v4590, %v4588
    %4655 = vmatprep.subr.bf16.mxu0 %v4592
    %4656 = vmatpush1.bf16.msra.mxu0 %v4591
    %4657 = vmatprep.subr.bf16.mxu0 %v4594
    %4658 = vmatpush1.bf16.msra.mxu0 %v4593
    %4659 = vmatprep.subr.bf16.mxu0 %v4596
    %4660 = vmatpush1.bf16.msra.mxu0 %v4595
    %4661 = vmatprep.subr.bf16.mxu0 %v4598
    %4662 = vmatpush1.bf16.msra.mxu0 %v4597
    %4663 = vmatprep.subr.bf16.mxu0 %v4600
    %4664 = vmatpush1.bf16.msra.mxu0 %v4599
    %4665 = vmatprep.subr.bf16.mxu0 %v4602
    %4666 = vmatpush1.bf16.msra.mxu0 %v4601
    %4667 = vmatprep.subr.bf16.mxu0 %v4604
    %4668 = vmatpush1.bf16.msra.mxu0 %v4603
    %4669 = vmatprep.subr.bf16.mxu0 %v4606
    %4670 = vmatpush1.bf16.msra.mxu0 %v4605
    %4671 = vmatprep.subr.bf16.mxu0 %v4608
    %4672 = vmatpush1.bf16.msra.mxu0 %v4607
    %4673 = vmatprep.subr.bf16.mxu0 %v4610
    %4674 = vmatpush1.bf16.msra.mxu0 %v4609
    %4675 = vmatprep.subr.bf16.mxu0 %v4612
    %4676 = vmatpush1.bf16.msra.mxu0 %v4611
    %4677 = vmatprep.subr.bf16.mxu0 %v4614
    %4678 = vmatpush1.bf16.msra.mxu0 %v4613
    %4679 = vmatprep.subr.bf16.mxu0 %v4616
    %4680 = vmatpush1.bf16.msra.mxu0 %v4615
    %4681 = vmatprep.subr.bf16.mxu0 %v4618
    %4682 = vmatpush1.bf16.msra.mxu0 %v4617
    %4683 = vmatprep.subr.bf16.mxu0 %v4620
    %4684 = vmatpush1.bf16.msra.mxu0 %v4619
    %4685 = vmatprep.subr.bf16.mxu0 %v4622
    %4686 = vmatpush1.bf16.msra.mxu0 %v4621
    %4687 = vmatprep.mubr.bf16.mxu0 %v4455
    %4688 = vmatmul.mubr.bf16.gmra.mrb[0].mxu0 %v4454
    %v4689 = vpop.f32.mrb[0].mxu0
    %v4690 = vadd.f32 0.0, %v4689
    %v4691 = vpop.f32.mrb[0].mxu0
    %v4692 = vadd.f32 0.0, %v4691
    %v4693 = vpop.f32.mrb[0].mxu0
    %v4694 = vadd.f32 0.0, %v4693
    %v4695 = vpop.f32.mrb[0].mxu0
    %v4696 = vadd.f32 0.0, %v4695
    %4697 = vmatprep.mubr.bf16.mxu0 %v4457
    %4698 = vmatmul.mubr.bf16.gmra.mrb[0].mxu0 %v4456
    %v4699 = vpop.f32.mrb[0].mxu0
    %v4700 = vadd.f32 0.0, %v4699
    %v4701 = vpop.f32.mrb[0].mxu0
    %v4702 = vadd.f32 0.0, %v4701
    %v4703 = vpop.f32.mrb[0].mxu0
    %v4704 = vadd.f32 0.0, %v4703
    %v4705 = vpop.f32.mrb[0].mxu0
    %v4706 = vadd.f32 0.0, %v4705
    %4707 = vmatprep.mubr.bf16.mxu0 %v4459
    %4708 = vmatmul.mubr.bf16.gmra.mrb[0].mxu0 %v4458
    %v4709 = vpop.f32.mrb[0].mxu0
    %v4710 = vadd.f32 0.0, %v4709
    %v4711 = vpop.f32.mrb[0].mxu0
    %v4712 = vadd.f32 0.0, %v4711
    %v4713 = vpop.f32.mrb[0].mxu0
    %v4714 = vadd.f32 0.0, %v4713
    %v4715 = vpop.f32.mrb[0].mxu0
    %v4716 = vadd.f32 0.0, %v4715
    %4717 = vmatprep.mubr.bf16.mxu0 %v4461
    %4718 = vmatmul.mubr.bf16.gmra.mrb[0].mxu0 %v4460
    %v4719 = vpop.f32.mrb[0].mxu0
    %v4720 = vadd.f32 0.0, %v4719
    %v4721 = vpop.f32.mrb[0].mxu0
    %v4722 = vadd.f32 0.0, %v4721
    %v4723 = vpop.f32.mrb[0].mxu0
    %v4724 = vadd.f32 0.0, %v4723
    %v4725 = vpop.f32.mrb[0].mxu0
    %v4726 = vadd.f32 0.0, %v4725
    %4727 = vdwg.mxu0
    %v4728 = vadd.f32 %v4438, %v4690
    %v4729 = vadd.f32 %v4439, %v4692
    %v4730 = vadd.f32 %v4440, %v4694
    %v4731 = vadd.f32 %v4441, %v4696
    %v4732 = vadd.f32 %v4442, %v4700
    %v4733 = vadd.f32 %v4443, %v4702
    %v4734 = vadd.f32 %v4444, %v4704
    %v4735 = vadd.f32 %v4445, %v4706
    %v4736 = vadd.f32 %v4446, %v4710
    %v4737 = vadd.f32 %v4447, %v4712
    %v4738 = vadd.f32 %v4448, %v4714
    %v4739 = vadd.f32 %v4449, %v4716
    %v4740 = vadd.f32 %v4450, %v4720
    %v4741 = vadd.f32 %v4451, %v4722
    %v4742 = vadd.f32 %v4452, %v4724
    %v4743 = vadd.f32 %v4453, %v4726
    %v4744 = vrot.slane %v3217, 1
    %v4745 = vsel %vm811, %v4744, %v812
    %v4746 = vrot.slane %v3218, 1
    %v4747 = vsel %vm811, %v4746, %v812
    %v4748 = vrot.slane %v3225, 1
    %v4749 = vsel %vm811, %v4748, %v812
    %v4750 = vrot.slane %v3226, 1
    %v4751 = vsel %vm811, %v4750, %v812
    %v4756 = vpack.c.bf16 %v3827, %v3823
    %v4757 = vpack.c.bf16 %v3829, %v3825
    %v4758 = vpack.c.bf16 %v4745, %v3831
    %v4759 = vpack.c.bf16 %v4747, %v3833
    %v4760 = vpack.c.bf16 %v3839, %v3835
    %v4761 = vpack.c.bf16 %v3841, %v3837
    %v4762 = vpack.c.bf16 %v4749, %v3843
    %v4763 = vpack.c.bf16 %v4751, %v3845
    %s4764 = scalar_lea.vmem [#allocation7], 1280
    %v4765 = vld [vmem:[%s4764] sm:$0xff]
    %v4766 = vld [vmem:[%s4764 + $0x8] sm:$0xff]
    %v4767 = vld [vmem:[%s4764 + $0x10] sm:$0xff]
    %v4768 = vld [vmem:[%s4764 + $0x18] sm:$0xff]
    %v4769 = vld [vmem:[%s4764 + $0x20] sm:$0xff]
    %v4770 = vld [vmem:[%s4764 + $0x28] sm:$0xff]
    %v4771 = vld [vmem:[%s4764 + $0x30] sm:$0xff]
    %v4772 = vld [vmem:[%s4764 + $0x38] sm:$0xff]
    %v4773 = vld [vmem:[%s4764 + $0x40] sm:$0xff]
    %v4774 = vld [vmem:[%s4764 + $0x48] sm:$0xff]
    %v4775 = vld [vmem:[%s4764 + $0x50] sm:$0xff]
    %v4776 = vld [vmem:[%s4764 + $0x58] sm:$0xff]
    %v4777 = vld [vmem:[%s4764 + $0x60] sm:$0xff]
    %v4778 = vld [vmem:[%s4764 + $0x68] sm:$0xff]
    %v4779 = vld [vmem:[%s4764 + $0x70] sm:$0xff]
    %v4780 = vld [vmem:[%s4764 + $0x78] sm:$0xff]
    %v4781 = vld [vmem:[%s4764 + $0x80] sm:$0xff]
    %v4782 = vld [vmem:[%s4764 + $0x88] sm:$0xff]
    %v4783 = vld [vmem:[%s4764 + $0x90] sm:$0xff]
    %v4784 = vld [vmem:[%s4764 + $0x98] sm:$0xff]
    %v4785 = vld [vmem:[%s4764 + $0xa0] sm:$0xff]
    %v4786 = vld [vmem:[%s4764 + $0xa8] sm:$0xff]
    %v4787 = vld [vmem:[%s4764 + $0xb0] sm:$0xff]
    %v4788 = vld [vmem:[%s4764 + $0xb8] sm:$0xff]
    %v4789 = vld [vmem:[%s4764 + $0xc0] sm:$0xff]
    %v4790 = vld [vmem:[%s4764 + $0xc8] sm:$0xff]
    %v4791 = vld [vmem:[%s4764 + $0xd0] sm:$0xff]
    %v4792 = vld [vmem:[%s4764 + $0xd8] sm:$0xff]
    %v4793 = vld [vmem:[%s4764 + $0xe0] sm:$0xff]
    %v4794 = vld [vmem:[%s4764 + $0xe8] sm:$0xff]
    %v4795 = vld [vmem:[%s4764 + $0xf0] sm:$0xff]
    %v4796 = vld [vmem:[%s4764 + $0xf8] sm:$0xff]
    %v4829 = vunpack.c.l.b16 %v4765
    %v4830 = vunpack.c.h.b16 %v4765
    %v4831 = vunpack.c.l.b16 %v4766
    %v4832 = vunpack.c.h.b16 %v4766
    %v4833 = vunpack.c.l.b16 %v4767
    %v4834 = vunpack.c.h.b16 %v4767
    %v4835 = vunpack.c.l.b16 %v4768
    %v4836 = vunpack.c.h.b16 %v4768
    %v4837 = vunpack.c.l.b16 %v4769
    %v4838 = vunpack.c.h.b16 %v4769
    %v4839 = vunpack.c.l.b16 %v4770
    %v4840 = vunpack.c.h.b16 %v4770
    %v4841 = vunpack.c.l.b16 %v4771
    %v4842 = vunpack.c.h.b16 %v4771
    %v4843 = vunpack.c.l.b16 %v4772
    %v4844 = vunpack.c.h.b16 %v4772
    %v4845 = vunpack.c.l.b16 %v4773
    %v4846 = vunpack.c.h.b16 %v4773
    %v4847 = vunpack.c.l.b16 %v4774
    %v4848 = vunpack.c.h.b16 %v4774
    %v4849 = vunpack.c.l.b16 %v4775
    %v4850 = vunpack.c.h.b16 %v4775
    %v4851 = vunpack.c.l.b16 %v4776
    %v4852 = vunpack.c.h.b16 %v4776
    %v4853 = vunpack.c.l.b16 %v4777
    %v4854 = vunpack.c.h.b16 %v4777
    %v4855 = vunpack.c.l.b16 %v4778
    %v4856 = vunpack.c.h.b16 %v4778
    %v4857 = vunpack.c.l.b16 %v4779
    %v4858 = vunpack.c.h.b16 %v4779
    %v4859 = vunpack.c.l.b16 %v4780
    %v4860 = vunpack.c.h.b16 %v4780
    %v4861 = vunpack.c.l.b16 %v4781
    %v4862 = vunpack.c.h.b16 %v4781
    %v4863 = vunpack.c.l.b16 %v4782
    %v4864 = vunpack.c.h.b16 %v4782
    %v4865 = vunpack.c.l.b16 %v4783
    %v4866 = vunpack.c.h.b16 %v4783
    %v4867 = vunpack.c.l.b16 %v4784
    %v4868 = vunpack.c.h.b16 %v4784
    %v4869 = vunpack.c.l.b16 %v4785
    %v4870 = vunpack.c.h.b16 %v4785
    %v4871 = vunpack.c.l.b16 %v4786
    %v4872 = vunpack.c.h.b16 %v4786
    %v4873 = vunpack.c.l.b16 %v4787
    %v4874 = vunpack.c.h.b16 %v4787
    %v4875 = vunpack.c.l.b16 %v4788
    %v4876 = vunpack.c.h.b16 %v4788
    %v4877 = vunpack.c.l.b16 %v4789
    %v4878 = vunpack.c.h.b16 %v4789
    %v4879 = vunpack.c.l.b16 %v4790
    %v4880 = vunpack.c.h.b16 %v4790
    %v4881 = vunpack.c.l.b16 %v4791
    %v4882 = vunpack.c.h.b16 %v4791
    %v4883 = vunpack.c.l.b16 %v4792
    %v4884 = vunpack.c.h.b16 %v4792
    %v4885 = vunpack.c.l.b16 %v4793
    %v4886 = vunpack.c.h.b16 %v4793
    %v4887 = vunpack.c.l.b16 %v4794
    %v4888 = vunpack.c.h.b16 %v4794
    %v4889 = vunpack.c.l.b16 %v4795
    %v4890 = vunpack.c.h.b16 %v4795
    %v4891 = vunpack.c.l.b16 %v4796
    %v4892 = vunpack.c.h.b16 %v4796
    %v4893 = vpack.c.b16 %v4831, %v4829
    %v4894 = vpack.c.b16 %v4832, %v4830
    %v4895 = vpack.c.b16 %v4835, %v4833
    %v4896 = vpack.c.b16 %v4836, %v4834
    %v4897 = vpack.c.b16 %v4839, %v4837
    %v4898 = vpack.c.b16 %v4840, %v4838
    %v4899 = vpack.c.b16 %v4843, %v4841
    %v4900 = vpack.c.b16 %v4844, %v4842
    %v4901 = vpack.c.b16 %v4847, %v4845
    %v4902 = vpack.c.b16 %v4848, %v4846
    %v4903 = vpack.c.b16 %v4851, %v4849
    %v4904 = vpack.c.b16 %v4852, %v4850
    %v4905 = vpack.c.b16 %v4855, %v4853
    %v4906 = vpack.c.b16 %v4856, %v4854
    %v4907 = vpack.c.b16 %v4859, %v4857
    %v4908 = vpack.c.b16 %v4860, %v4858
    %v4909 = vpack.c.b16 %v4863, %v4861
    %v4910 = vpack.c.b16 %v4864, %v4862
    %v4911 = vpack.c.b16 %v4867, %v4865
    %v4912 = vpack.c.b16 %v4868, %v4866
    %v4913 = vpack.c.b16 %v4871, %v4869
    %v4914 = vpack.c.b16 %v4872, %v4870
    %v4915 = vpack.c.b16 %v4875, %v4873
    %v4916 = vpack.c.b16 %v4876, %v4874
    %v4917 = vpack.c.b16 %v4879, %v4877
    %v4918 = vpack.c.b16 %v4880, %v4878
    %v4919 = vpack.c.b16 %v4883, %v4881
    %v4920 = vpack.c.b16 %v4884, %v4882
    %v4921 = vpack.c.b16 %v4887, %v4885
    %v4922 = vpack.c.b16 %v4888, %v4886
    %v4923 = vpack.c.b16 %v4891, %v4889
    %v4924 = vpack.c.b16 %v4892, %v4890
    %4957 = vmatprep.subr.bf16.mxu0 %v4894
    %4958 = vmatpush1.bf16.msra.mxu0 %v4893
    %4959 = vmatprep.subr.bf16.mxu0 %v4896
    %4960 = vmatpush1.bf16.msra.mxu0 %v4895
    %4961 = vmatprep.subr.bf16.mxu0 %v4898
    %4962 = vmatpush1.bf16.msra.mxu0 %v4897
    %4963 = vmatprep.subr.bf16.mxu0 %v4900
    %4964 = vmatpush1.bf16.msra.mxu0 %v4899
    %4965 = vmatprep.subr.bf16.mxu0 %v4902
    %4966 = vmatpush1.bf16.msra.mxu0 %v4901
    %4967 = vmatprep.subr.bf16.mxu0 %v4904
    %4968 = vmatpush1.bf16.msra.mxu0 %v4903
    %4969 = vmatprep.subr.bf16.mxu0 %v4906
    %4970 = vmatpush1.bf16.msra.mxu0 %v4905
    %4971 = vmatprep.subr.bf16.mxu0 %v4908
    %4972 = vmatpush1.bf16.msra.mxu0 %v4907
    %4973 = vmatprep.subr.bf16.mxu0 %v4910
    %4974 = vmatpush1.bf16.msra.mxu0 %v4909
    %4975 = vmatprep.subr.bf16.mxu0 %v4912
    %4976 = vmatpush1.bf16.msra.mxu0 %v4911
    %4977 = vmatprep.subr.bf16.mxu0 %v4914
    %4978 = vmatpush1.bf16.msra.mxu0 %v4913
    %4979 = vmatprep.subr.bf16.mxu0 %v4916
    %4980 = vmatpush1.bf16.msra.mxu0 %v4915
    %4981 = vmatprep.subr.bf16.mxu0 %v4918
    %4982 = vmatpush1.bf16.msra.mxu0 %v4917
    %4983 = vmatprep.subr.bf16.mxu0 %v4920
    %4984 = vmatpush1.bf16.msra.mxu0 %v4919
    %4985 = vmatprep.subr.bf16.mxu0 %v4922
    %4986 = vmatpush1.bf16.msra.mxu0 %v4921
    %4987 = vmatprep.subr.bf16.mxu0 %v4924
    %4988 = vmatpush1.bf16.msra.mxu0 %v4923
    %4989 = vmatprep.mubr.bf16.mxu0 %v4757
    %4990 = vmatmul.mubr.bf16.gmra.mrb[0].mxu0 %v4756
    %v4991 = vpop.f32.mrb[0].mxu0
    %v4992 = vadd.f32 0.0, %v4991
    %v4993 = vpop.f32.mrb[0].mxu0
    %v4994 = vadd.f32 0.0, %v4993
    %v4995 = vpop.f32.mrb[0].mxu0
    %v4996 = vadd.f32 0.0, %v4995
    %v4997 = vpop.f32.mrb[0].mxu0
    %v4998 = vadd.f32 0.0, %v4997
    %4999 = vmatprep.mubr.bf16.mxu0 %v4759
    %5000 = vmatmul.mubr.bf16.gmra.mrb[0].mxu0 %v4758
    %v5001 = vpop.f32.mrb[0].mxu0
    %v5002 = vadd.f32 0.0, %v5001
    %v5003 = vpop.f32.mrb[0].mxu0
    %v5004 = vadd.f32 0.0, %v5003
    %v5005 = vpop.f32.mrb[0].mxu0
    %v5006 = vadd.f32 0.0, %v5005
    %v5007 = vpop.f32.mrb[0].mxu0
    %v5008 = vadd.f32 0.0, %v5007
    %5009 = vmatprep.mubr.bf16.mxu0 %v4761
    %5010 = vmatmul.mubr.bf16.gmra.mrb[0].mxu0 %v4760
    %v5011 = vpop.f32.mrb[0].mxu0
    %v5012 = vadd.f32 0.0, %v5011
    %v5013 = vpop.f32.mrb[0].mxu0
    %v5014 = vadd.f32 0.0, %v5013
    %v5015 = vpop.f32.mrb[0].mxu0
    %v5016 = vadd.f32 0.0, %v5015
    %v5017 = vpop.f32.mrb[0].mxu0
    %v5018 = vadd.f32 0.0, %v5017
    %5019 = vmatprep.mubr.bf16.mxu0 %v4763
    %5020 = vmatmul.mubr.bf16.gmra.mrb[0].mxu0 %v4762
    %v5021 = vpop.f32.mrb[0].mxu0
    %v5022 = vadd.f32 0.0, %v5021
    %v5023 = vpop.f32.mrb[0].mxu0
    %v5024 = vadd.f32 0.0, %v5023
    %v5025 = vpop.f32.mrb[0].mxu0
    %v5026 = vadd.f32 0.0, %v5025
    %v5027 = vpop.f32.mrb[0].mxu0
    %v5028 = vadd.f32 0.0, %v5027
    %5029 = vdwg.mxu0
    %v5030 = vadd.f32 %v4728, %v4992
    %v5031 = vadd.f32 %v4729, %v4994
    %v5032 = vadd.f32 %v4730, %v4996
    %v5033 = vadd.f32 %v4731, %v4998
    %v5034 = vadd.f32 %v4732, %v5002
    %v5035 = vadd.f32 %v4733, %v5004
    %v5036 = vadd.f32 %v4734, %v5006
    %v5037 = vadd.f32 %v4735, %v5008
    %v5038 = vadd.f32 %v4736, %v5012
    %v5039 = vadd.f32 %v4737, %v5014
    %v5040 = vadd.f32 %v4738, %v5016
    %v5041 = vadd.f32 %v4739, %v5018
    %v5042 = vadd.f32 %v4740, %v5022
    %v5043 = vadd.f32 %v4741, %v5024
    %v5044 = vadd.f32 %v4742, %v5026
    %v5045 = vadd.f32 %v4743, %v5028
    %v5046 = vpack.c.bf16 %v226, %v4153
    %v5047 = vpack.c.bf16 %v226, %v4155
    %v5048 = vpack.c.bf16 %v226, %v4157
    %v5049 = vpack.c.bf16 %v226, %v4159
    %s5050 = scalar_lea.vmem [#allocation7], 1536
    %v5051 = vld [vmem:[%s5050] sm:$0xff]
    %v5052 = vld [vmem:[%s5050 + $0x8] sm:$0xff]
    %v5053 = vld [vmem:[%s5050 + $0x10] sm:$0xff]
    %v5054 = vld [vmem:[%s5050 + $0x18] sm:$0xff]
    %v5055 = vld [vmem:[%s5050 + $0x20] sm:$0xff]
    %v5056 = vld [vmem:[%s5050 + $0x28] sm:$0xff]
    %v5057 = vld [vmem:[%s5050 + $0x30] sm:$0xff]
    %v5058 = vld [vmem:[%s5050 + $0x38] sm:$0xff]
    %v5059 = vld [vmem:[%s5050 + $0x40] sm:$0xff]
    %v5060 = vld [vmem:[%s5050 + $0x48] sm:$0xff]
    %v5061 = vld [vmem:[%s5050 + $0x50] sm:$0xff]
    %v5062 = vld [vmem:[%s5050 + $0x58] sm:$0xff]
    %v5063 = vld [vmem:[%s5050 + $0x60] sm:$0xff]
    %v5064 = vld [vmem:[%s5050 + $0x68] sm:$0xff]
    %v5065 = vld [vmem:[%s5050 + $0x70] sm:$0xff]
    %v5066 = vld [vmem:[%s5050 + $0x78] sm:$0xff]
    %v5067 = vld [vmem:[%s5050 + $0x80] sm:$0xff]
    %v5068 = vld [vmem:[%s5050 + $0x88] sm:$0xff]
    %v5069 = vld [vmem:[%s5050 + $0x90] sm:$0xff]
    %v5070 = vld [vmem:[%s5050 + $0x98] sm:$0xff]
    %v5071 = vld [vmem:[%s5050 + $0xa0] sm:$0xff]
    %v5072 = vld [vmem:[%s5050 + $0xa8] sm:$0xff]
    %v5073 = vld [vmem:[%s5050 + $0xb0] sm:$0xff]
    %v5074 = vld [vmem:[%s5050 + $0xb8] sm:$0xff]
    %v5075 = vld [vmem:[%s5050 + $0xc0] sm:$0xff]
    %v5076 = vld [vmem:[%s5050 + $0xc8] sm:$0xff]
    %v5077 = vld [vmem:[%s5050 + $0xd0] sm:$0xff]
    %v5078 = vld [vmem:[%s5050 + $0xd8] sm:$0xff]
    %v5079 = vld [vmem:[%s5050 + $0xe0] sm:$0xff]
    %v5080 = vld [vmem:[%s5050 + $0xe8] sm:$0xff]
    %v5081 = vld [vmem:[%s5050 + $0xf0] sm:$0xff]
    %v5082 = vld [vmem:[%s5050 + $0xf8] sm:$0xff]
    %v5115 = vunpack.c.l.b16 %v5051
    %v5116 = vunpack.c.h.b16 %v5051
    %v5117 = vunpack.c.l.b16 %v5052
    %v5118 = vunpack.c.h.b16 %v5052
    %v5119 = vunpack.c.l.b16 %v5053
    %v5120 = vunpack.c.h.b16 %v5053
    %v5121 = vunpack.c.l.b16 %v5054
    %v5122 = vunpack.c.h.b16 %v5054
    %v5123 = vunpack.c.l.b16 %v5055
    %v5124 = vunpack.c.h.b16 %v5055
    %v5125 = vunpack.c.l.b16 %v5056
    %v5126 = vunpack.c.h.b16 %v5056
    %v5127 = vunpack.c.l.b16 %v5057
    %v5128 = vunpack.c.h.b16 %v5057
    %v5129 = vunpack.c.l.b16 %v5058
    %v5130 = vunpack.c.h.b16 %v5058
    %v5131 = vunpack.c.l.b16 %v5059
    %v5132 = vunpack.c.h.b16 %v5059
    %v5133 = vunpack.c.l.b16 %v5060
    %v5134 = vunpack.c.h.b16 %v5060
    %v5135 = vunpack.c.l.b16 %v5061
    %v5136 = vunpack.c.h.b16 %v5061
    %v5137 = vunpack.c.l.b16 %v5062
    %v5138 = vunpack.c.h.b16 %v5062
    %v5139 = vunpack.c.l.b16 %v5063
    %v5140 = vunpack.c.h.b16 %v5063
    %v5141 = vunpack.c.l.b16 %v5064
    %v5142 = vunpack.c.h.b16 %v5064
    %v5143 = vunpack.c.l.b16 %v5065
    %v5144 = vunpack.c.h.b16 %v5065
    %v5145 = vunpack.c.l.b16 %v5066
    %v5146 = vunpack.c.h.b16 %v5066
    %v5147 = vunpack.c.l.b16 %v5067
    %v5148 = vunpack.c.h.b16 %v5067
    %v5149 = vunpack.c.l.b16 %v5068
    %v5150 = vunpack.c.h.b16 %v5068
    %v5151 = vunpack.c.l.b16 %v5069
    %v5152 = vunpack.c.h.b16 %v5069
    %v5153 = vunpack.c.l.b16 %v5070
    %v5154 = vunpack.c.h.b16 %v5070
    %v5155 = vunpack.c.l.b16 %v5071
    %v5156 = vunpack.c.h.b16 %v5071
    %v5157 = vunpack.c.l.b16 %v5072
    %v5158 = vunpack.c.h.b16 %v5072
    %v5159 = vunpack.c.l.b16 %v5073
    %v5160 = vunpack.c.h.b16 %v5073
    %v5161 = vunpack.c.l.b16 %v5074
    %v5162 = vunpack.c.h.b16 %v5074
    %v5163 = vunpack.c.l.b16 %v5075
    %v5164 = vunpack.c.h.b16 %v5075
    %v5165 = vunpack.c.l.b16 %v5076
    %v5166 = vunpack.c.h.b16 %v5076
    %v5167 = vunpack.c.l.b16 %v5077
    %v5168 = vunpack.c.h.b16 %v5077
    %v5169 = vunpack.c.l.b16 %v5078
    %v5170 = vunpack.c.h.b16 %v5078
    %v5171 = vunpack.c.l.b16 %v5079
    %v5172 = vunpack.c.h.b16 %v5079
    %v5173 = vunpack.c.l.b16 %v5080
    %v5174 = vunpack.c.h.b16 %v5080
    %v5175 = vunpack.c.l.b16 %v5081
    %v5176 = vunpack.c.h.b16 %v5081
    %v5177 = vunpack.c.l.b16 %v5082
    %v5178 = vunpack.c.h.b16 %v5082
    %v5179 = vpack.c.b16 %v5117, %v5115
    %v5180 = vpack.c.b16 %v5118, %v5116
    %v5181 = vpack.c.b16 %v5121, %v5119
    %v5182 = vpack.c.b16 %v5122, %v5120
    %v5183 = vpack.c.b16 %v5125, %v5123
    %v5184 = vpack.c.b16 %v5126, %v5124
    %v5185 = vpack.c.b16 %v5129, %v5127
    %v5186 = vpack.c.b16 %v5130, %v5128
    %v5187 = vpack.c.b16 %v5133, %v5131
    %v5188 = vpack.c.b16 %v5134, %v5132
    %v5189 = vpack.c.b16 %v5137, %v5135
    %v5190 = vpack.c.b16 %v5138, %v5136
    %v5191 = vpack.c.b16 %v5141, %v5139
    %v5192 = vpack.c.b16 %v5142, %v5140
    %v5193 = vpack.c.b16 %v5145, %v5143
    %v5194 = vpack.c.b16 %v5146, %v5144
    %v5195 = vpack.c.b16 %v5149, %v5147
    %v5196 = vpack.c.b16 %v5150, %v5148
    %v5197 = vpack.c.b16 %v5153, %v5151
    %v5198 = vpack.c.b16 %v5154, %v5152
    %v5199 = vpack.c.b16 %v5157, %v5155
    %v5200 = vpack.c.b16 %v5158, %v5156
    %v5201 = vpack.c.b16 %v5161, %v5159
    %v5202 = vpack.c.b16 %v5162, %v5160
    %v5203 = vpack.c.b16 %v5165, %v5163
    %v5204 = vpack.c.b16 %v5166, %v5164
    %v5205 = vpack.c.b16 %v5169, %v5167
    %v5206 = vpack.c.b16 %v5170, %v5168
    %v5207 = vpack.c.b16 %v5173, %v5171
    %v5208 = vpack.c.b16 %v5174, %v5172
    %v5209 = vpack.c.b16 %v5177, %v5175
    %v5210 = vpack.c.b16 %v5178, %v5176
    %5243 = vmatprep.subr.bf16.mxu0 %v5180
    %5244 = vmatpush1.bf16.msra.mxu0 %v5179
    %5245 = vmatprep.subr.bf16.mxu0 %v5182
    %5246 = vmatpush1.bf16.msra.mxu0 %v5181
    %5247 = vmatprep.subr.bf16.mxu0 %v5184
    %5248 = vmatpush1.bf16.msra.mxu0 %v5183
    %5249 = vmatprep.subr.bf16.mxu0 %v5186
    %5250 = vmatpush1.bf16.msra.mxu0 %v5185
    %5251 = vmatprep.subr.bf16.mxu0 %v5188
    %5252 = vmatpush1.bf16.msra.mxu0 %v5187
    %5253 = vmatprep.subr.bf16.mxu0 %v5190
    %5254 = vmatpush1.bf16.msra.mxu0 %v5189
    %5255 = vmatprep.subr.bf16.mxu0 %v5192
    %5256 = vmatpush1.bf16.msra.mxu0 %v5191
    %5257 = vmatprep.subr.bf16.mxu0 %v5194
    %5258 = vmatpush1.bf16.msra.mxu0 %v5193
    %5259 = vmatprep.subr.bf16.mxu0 %v5196
    %5260 = vmatpush1.bf16.msra.mxu0 %v5195
    %5261 = vmatprep.subr.bf16.mxu0 %v5198
    %5262 = vmatpush1.bf16.msra.mxu0 %v5197
    %5263 = vmatprep.subr.bf16.mxu0 %v5200
    %5264 = vmatpush1.bf16.msra.mxu0 %v5199
    %5265 = vmatprep.subr.bf16.mxu0 %v5202
    %5266 = vmatpush1.bf16.msra.mxu0 %v5201
    %5267 = vmatprep.subr.bf16.mxu0 %v5204
    %5268 = vmatpush1.bf16.msra.mxu0 %v5203
    %5269 = vmatprep.subr.bf16.mxu0 %v5206
    %5270 = vmatpush1.bf16.msra.mxu0 %v5205
    %5271 = vmatprep.subr.bf16.mxu0 %v5208
    %5272 = vmatpush1.bf16.msra.mxu0 %v5207
    %5273 = vmatprep.subr.bf16.mxu0 %v5210
    %5274 = vmatpush1.bf16.msra.mxu0 %v5209
    %5275 = vmatprep.mubr.bf16.mxu0 %v3278
    %5276 = vmatmul.mubr.bf16.gmra.mrb[0].mxu0 %v3277
    %v5277 = vpop.f32.mrb[0].mxu0
    %v5278 = vadd.f32 0.0, %v5277
    %v5279 = vpop.f32.mrb[0].mxu0
    %v5280 = vadd.f32 0.0, %v5279
    %v5281 = vpop.f32.mrb[0].mxu0
    %v5282 = vadd.f32 0.0, %v5281
    %v5283 = vpop.f32.mrb[0].mxu0
    %v5284 = vadd.f32 0.0, %v5283
    %5285 = vmatprep.mubr.bf16.mxu0 %v5047
    %5286 = vmatmul.mubr.bf16.gmra.mrb[0].mxu0 %v5046
    %v5287 = vpop.f32.mrb[0].mxu0
    %v5288 = vadd.f32 0.0, %v5287
    %v5289 = vpop.f32.mrb[0].mxu0
    %v5290 = vadd.f32 0.0, %v5289
    %v5291 = vpop.f32.mrb[0].mxu0
    %v5292 = vadd.f32 0.0, %v5291
    %v5293 = vpop.f32.mrb[0].mxu0
    %v5294 = vadd.f32 0.0, %v5293
    %5295 = vmatprep.mubr.bf16.mxu0 %v3282
    %5296 = vmatmul.mubr.bf16.gmra.mrb[0].mxu0 %v3281
    %v5297 = vpop.f32.mrb[0].mxu0
    %v5298 = vadd.f32 0.0, %v5297
    %v5299 = vpop.f32.mrb[0].mxu0
    %v5300 = vadd.f32 0.0, %v5299
    %v5301 = vpop.f32.mrb[0].mxu0
    %v5302 = vadd.f32 0.0, %v5301
    %v5303 = vpop.f32.mrb[0].mxu0
    %v5304 = vadd.f32 0.0, %v5303
    %5305 = vmatprep.mubr.bf16.mxu0 %v5049
    %5306 = vmatmul.mubr.bf16.gmra.mrb[0].mxu0 %v5048
    %v5307 = vpop.f32.mrb[0].mxu0
    %v5308 = vadd.f32 0.0, %v5307
    %v5309 = vpop.f32.mrb[0].mxu0
    %v5310 = vadd.f32 0.0, %v5309
    %v5311 = vpop.f32.mrb[0].mxu0
    %v5312 = vadd.f32 0.0, %v5311
    %v5313 = vpop.f32.mrb[0].mxu0
    %v5314 = vadd.f32 0.0, %v5313
    %5315 = vdwg.mxu0
    %v5316 = vadd.f32 %v5030, %v5278
    %v5317 = vadd.f32 %v5031, %v5280
    %v5318 = vadd.f32 %v5032, %v5282
    %v5319 = vadd.f32 %v5033, %v5284
    %v5320 = vadd.f32 %v5034, %v5288
    %v5321 = vadd.f32 %v5035, %v5290
    %v5322 = vadd.f32 %v5036, %v5292
    %v5323 = vadd.f32 %v5037, %v5294
    %v5324 = vadd.f32 %v5038, %v5298
    %v5325 = vadd.f32 %v5039, %v5300
    %v5326 = vadd.f32 %v5040, %v5302
    %v5327 = vadd.f32 %v5041, %v5304
    %v5328 = vadd.f32 %v5042, %v5308
    %v5329 = vadd.f32 %v5043, %v5310
    %v5330 = vadd.f32 %v5044, %v5312
    %v5331 = vadd.f32 %v5045, %v5314
    %v5332 = vpack.c.bf16 0.0, %v3217
    %v5333 = vpack.c.bf16 0.0, %v3218
    %v5334 = vpack.c.bf16 0.0, %v3225
    %v5335 = vpack.c.bf16 0.0, %v3226
    %s5336 = scalar_lea.vmem [#allocation7], 1792
    %v5337 = vld [vmem:[%s5336] sm:$0xff]
    %v5338 = vld [vmem:[%s5336 + $0x8] sm:$0xff]
    %v5339 = vld [vmem:[%s5336 + $0x10] sm:$0xff]
    %v5340 = vld [vmem:[%s5336 + $0x18] sm:$0xff]
    %v5341 = vld [vmem:[%s5336 + $0x20] sm:$0xff]
    %v5342 = vld [vmem:[%s5336 + $0x28] sm:$0xff]
    %v5343 = vld [vmem:[%s5336 + $0x30] sm:$0xff]
    %v5344 = vld [vmem:[%s5336 + $0x38] sm:$0xff]
    %v5345 = vld [vmem:[%s5336 + $0x40] sm:$0xff]
    %v5346 = vld [vmem:[%s5336 + $0x48] sm:$0xff]
    %v5347 = vld [vmem:[%s5336 + $0x50] sm:$0xff]
    %v5348 = vld [vmem:[%s5336 + $0x58] sm:$0xff]
    %v5349 = vld [vmem:[%s5336 + $0x60] sm:$0xff]
    %v5350 = vld [vmem:[%s5336 + $0x68] sm:$0xff]
    %v5351 = vld [vmem:[%s5336 + $0x70] sm:$0xff]
    %v5352 = vld [vmem:[%s5336 + $0x78] sm:$0xff]
    %v5353 = vld [vmem:[%s5336 + $0x80] sm:$0xff]
    %v5354 = vld [vmem:[%s5336 + $0x88] sm:$0xff]
    %v5355 = vld [vmem:[%s5336 + $0x90] sm:$0xff]
    %v5356 = vld [vmem:[%s5336 + $0x98] sm:$0xff]
    %v5357 = vld [vmem:[%s5336 + $0xa0] sm:$0xff]
    %v5358 = vld [vmem:[%s5336 + $0xa8] sm:$0xff]
    %v5359 = vld [vmem:[%s5336 + $0xb0] sm:$0xff]
    %v5360 = vld [vmem:[%s5336 + $0xb8] sm:$0xff]
    %v5361 = vld [vmem:[%s5336 + $0xc0] sm:$0xff]
    %v5362 = vld [vmem:[%s5336 + $0xc8] sm:$0xff]
    %v5363 = vld [vmem:[%s5336 + $0xd0] sm:$0xff]
    %v5364 = vld [vmem:[%s5336 + $0xd8] sm:$0xff]
    %v5365 = vld [vmem:[%s5336 + $0xe0] sm:$0xff]
    %v5366 = vld [vmem:[%s5336 + $0xe8] sm:$0xff]
    %v5367 = vld [vmem:[%s5336 + $0xf0] sm:$0xff]
    %v5368 = vld [vmem:[%s5336 + $0xf8] sm:$0xff]
    %v5401 = vunpack.c.l.b16 %v5337
    %v5402 = vunpack.c.h.b16 %v5337
    %v5403 = vunpack.c.l.b16 %v5338
    %v5404 = vunpack.c.h.b16 %v5338
    %v5405 = vunpack.c.l.b16 %v5339
    %v5406 = vunpack.c.h.b16 %v5339
    %v5407 = vunpack.c.l.b16 %v5340
    %v5408 = vunpack.c.h.b16 %v5340
    %v5409 = vunpack.c.l.b16 %v5341
    %v5410 = vunpack.c.h.b16 %v5341
    %v5411 = vunpack.c.l.b16 %v5342
    %v5412 = vunpack.c.h.b16 %v5342
    %v5413 = vunpack.c.l.b16 %v5343
    %v5414 = vunpack.c.h.b16 %v5343
    %v5415 = vunpack.c.l.b16 %v5344
    %v5416 = vunpack.c.h.b16 %v5344
    %v5417 = vunpack.c.l.b16 %v5345
    %v5418 = vunpack.c.h.b16 %v5345
    %v5419 = vunpack.c.l.b16 %v5346
    %v5420 = vunpack.c.h.b16 %v5346
    %v5421 = vunpack.c.l.b16 %v5347
    %v5422 = vunpack.c.h.b16 %v5347
    %v5423 = vunpack.c.l.b16 %v5348
    %v5424 = vunpack.c.h.b16 %v5348
    %v5425 = vunpack.c.l.b16 %v5349
    %v5426 = vunpack.c.h.b16 %v5349
    %v5427 = vunpack.c.l.b16 %v5350
    %v5428 = vunpack.c.h.b16 %v5350
    %v5429 = vunpack.c.l.b16 %v5351
    %v5430 = vunpack.c.h.b16 %v5351
    %v5431 = vunpack.c.l.b16 %v5352
    %v5432 = vunpack.c.h.b16 %v5352
    %v5433 = vunpack.c.l.b16 %v5353
    %v5434 = vunpack.c.h.b16 %v5353
    %v5435 = vunpack.c.l.b16 %v5354
    %v5436 = vunpack.c.h.b16 %v5354
    %v5437 = vunpack.c.l.b16 %v5355
    %v5438 = vunpack.c.h.b16 %v5355
    %v5439 = vunpack.c.l.b16 %v5356
    %v5440 = vunpack.c.h.b16 %v5356
    %v5441 = vunpack.c.l.b16 %v5357
    %v5442 = vunpack.c.h.b16 %v5357
    %v5443 = vunpack.c.l.b16 %v5358
    %v5444 = vunpack.c.h.b16 %v5358
    %v5445 = vunpack.c.l.b16 %v5359
    %v5446 = vunpack.c.h.b16 %v5359
    %v5447 = vunpack.c.l.b16 %v5360
    %v5448 = vunpack.c.h.b16 %v5360
    %v5449 = vunpack.c.l.b16 %v5361
    %v5450 = vunpack.c.h.b16 %v5361
    %v5451 = vunpack.c.l.b16 %v5362
    %v5452 = vunpack.c.h.b16 %v5362
    %v5453 = vunpack.c.l.b16 %v5363
    %v5454 = vunpack.c.h.b16 %v5363
    %v5455 = vunpack.c.l.b16 %v5364
    %v5456 = vunpack.c.h.b16 %v5364
    %v5457 = vunpack.c.l.b16 %v5365
    %v5458 = vunpack.c.h.b16 %v5365
    %v5459 = vunpack.c.l.b16 %v5366
    %v5460 = vunpack.c.h.b16 %v5366
    %v5461 = vunpack.c.l.b16 %v5367
    %v5462 = vunpack.c.h.b16 %v5367
    %v5463 = vunpack.c.l.b16 %v5368
    %v5464 = vunpack.c.h.b16 %v5368
    %v5465 = vpack.c.b16 %v5403, %v5401
    %v5466 = vpack.c.b16 %v5404, %v5402
    %v5467 = vpack.c.b16 %v5407, %v5405
    %v5468 = vpack.c.b16 %v5408, %v5406
    %v5469 = vpack.c.b16 %v5411, %v5409
    %v5470 = vpack.c.b16 %v5412, %v5410
    %v5471 = vpack.c.b16 %v5415, %v5413
    %v5472 = vpack.c.b16 %v5416, %v5414
    %v5473 = vpack.c.b16 %v5419, %v5417
    %v5474 = vpack.c.b16 %v5420, %v5418
    %v5475 = vpack.c.b16 %v5423, %v5421
    %v5476 = vpack.c.b16 %v5424, %v5422
    %v5477 = vpack.c.b16 %v5427, %v5425
    %v5478 = vpack.c.b16 %v5428, %v5426
    %v5479 = vpack.c.b16 %v5431, %v5429
    %v5480 = vpack.c.b16 %v5432, %v5430
    %v5481 = vpack.c.b16 %v5435, %v5433
    %v5482 = vpack.c.b16 %v5436, %v5434
    %v5483 = vpack.c.b16 %v5439, %v5437
    %v5484 = vpack.c.b16 %v5440, %v5438
    %v5485 = vpack.c.b16 %v5443, %v5441
    %v5486 = vpack.c.b16 %v5444, %v5442
    %v5487 = vpack.c.b16 %v5447, %v5445
    %v5488 = vpack.c.b16 %v5448, %v5446
    %v5489 = vpack.c.b16 %v5451, %v5449
    %v5490 = vpack.c.b16 %v5452, %v5450
    %v5491 = vpack.c.b16 %v5455, %v5453
    %v5492 = vpack.c.b16 %v5456, %v5454
    %v5493 = vpack.c.b16 %v5459, %v5457
    %v5494 = vpack.c.b16 %v5460, %v5458
    %v5495 = vpack.c.b16 %v5463, %v5461
    %v5496 = vpack.c.b16 %v5464, %v5462
    %5529 = vmatprep.subr.bf16.mxu0 %v5466
    %5530 = vmatpush1.bf16.msra.mxu0 %v5465
    %5531 = vmatprep.subr.bf16.mxu0 %v5468
    %5532 = vmatpush1.bf16.msra.mxu0 %v5467
    %5533 = vmatprep.subr.bf16.mxu0 %v5470
    %5534 = vmatpush1.bf16.msra.mxu0 %v5469
    %5535 = vmatprep.subr.bf16.mxu0 %v5472
    %5536 = vmatpush1.bf16.msra.mxu0 %v5471
    %5537 = vmatprep.subr.bf16.mxu0 %v5474
    %5538 = vmatpush1.bf16.msra.mxu0 %v5473
    %5539 = vmatprep.subr.bf16.mxu0 %v5476
    %5540 = vmatpush1.bf16.msra.mxu0 %v5475
    %5541 = vmatprep.subr.bf16.mxu0 %v5478
    %5542 = vmatpush1.bf16.msra.mxu0 %v5477
    %5543 = vmatprep.subr.bf16.mxu0 %v5480
    %5544 = vmatpush1.bf16.msra.mxu0 %v5479
    %5545 = vmatprep.subr.bf16.mxu0 %v5482
    %5546 = vmatpush1.bf16.msra.mxu0 %v5481
    %5547 = vmatprep.subr.bf16.mxu0 %v5484
    %5548 = vmatpush1.bf16.msra.mxu0 %v5483
    %5549 = vmatprep.subr.bf16.mxu0 %v5486
    %5550 = vmatpush1.bf16.msra.mxu0 %v5485
    %5551 = vmatprep.subr.bf16.mxu0 %v5488
    %5552 = vmatpush1.bf16.msra.mxu0 %v5487
    %5553 = vmatprep.subr.bf16.mxu0 %v5490
    %5554 = vmatpush1.bf16.msra.mxu0 %v5489
    %5555 = vmatprep.subr.bf16.mxu0 %v5492
    %5556 = vmatpush1.bf16.msra.mxu0 %v5491
    %5557 = vmatprep.subr.bf16.mxu0 %v5494
    %5558 = vmatpush1.bf16.msra.mxu0 %v5493
    %5559 = vmatprep.subr.bf16.mxu0 %v5496
    %5560 = vmatpush1.bf16.msra.mxu0 %v5495
    %5561 = vmatprep.mubr.bf16.mxu0 %v3318
    %5562 = vmatmul.mubr.bf16.gmra.mrb[0].mxu0 %v3317
    %v5563 = vpop.f32.mrb[0].mxu0
    %v5564 = vadd.f32 0.0, %v5563
    %v5565 = vpop.f32.mrb[0].mxu0
    %v5566 = vadd.f32 0.0, %v5565
    %v5567 = vpop.f32.mrb[0].mxu0
    %v5568 = vadd.f32 0.0, %v5567
    %v5569 = vpop.f32.mrb[0].mxu0
    %v5570 = vadd.f32 0.0, %v5569
    %5571 = vmatprep.mubr.bf16.mxu0 %v5333
    %5572 = vmatmul.mubr.bf16.gmra.mrb[0].mxu0 %v5332
    %v5573 = vpop.f32.mrb[0].mxu0
    %v5574 = vadd.f32 0.0, %v5573
    %v5575 = vpop.f32.mrb[0].mxu0
    %v5576 = vadd.f32 0.0, %v5575
    %v5577 = vpop.f32.mrb[0].mxu0
    %v5578 = vadd.f32 0.0, %v5577
    %v5579 = vpop.f32.mrb[0].mxu0
    %v5580 = vadd.f32 0.0, %v5579
    %5581 = vmatprep.mubr.bf16.mxu0 %v3322
    %5582 = vmatmul.mubr.bf16.gmra.mrb[0].mxu0 %v3321
    %v5583 = vpop.f32.mrb[0].mxu0
    %v5584 = vadd.f32 0.0, %v5583
    %v5585 = vpop.f32.mrb[0].mxu0
    %v5586 = vadd.f32 0.0, %v5585
    %v5587 = vpop.f32.mrb[0].mxu0
    %v5588 = vadd.f32 0.0, %v5587
    %v5589 = vpop.f32.mrb[0].mxu0
    %v5590 = vadd.f32 0.0, %v5589
    %5591 = vmatprep.mubr.bf16.mxu0 %v5335
    %5592 = vmatmul.mubr.bf16.gmra.mrb[0].mxu0 %v5334
    %v5593 = vpop.f32.mrb[0].mxu0
    %v5594 = vadd.f32 0.0, %v5593
    %v5595 = vpop.f32.mrb[0].mxu0
    %v5596 = vadd.f32 0.0, %v5595
    %v5597 = vpop.f32.mrb[0].mxu0
    %v5598 = vadd.f32 0.0, %v5597
    %v5599 = vpop.f32.mrb[0].mxu0
    %v5600 = vadd.f32 0.0, %v5599
    %5601 = vdwg.mxu0
    %v5602 = vadd.f32 %v5316, %v5564
    %v5603 = vadd.f32 %v5317, %v5566
    %v5604 = vadd.f32 %v5318, %v5568
    %v5605 = vadd.f32 %v5319, %v5570
    %v5606 = vadd.f32 %v5320, %v5574
    %v5607 = vadd.f32 %v5321, %v5576
    %v5608 = vadd.f32 %v5322, %v5578
    %v5609 = vadd.f32 %v5323, %v5580
    %v5610 = vadd.f32 %v5324, %v5584
    %v5611 = vadd.f32 %v5325, %v5586
    %v5612 = vadd.f32 %v5326, %v5588
    %v5613 = vadd.f32 %v5327, %v5590
    %v5614 = vadd.f32 %v5328, %v5594
    %v5615 = vadd.f32 %v5329, %v5596
    %v5616 = vadd.f32 %v5330, %v5598
    %v5617 = vadd.f32 %v5331, %v5600
    %v5618 = vpack.c.bf16 %v813, %v4745
    %v5619 = vpack.c.bf16 %v813, %v4747
    %v5620 = vpack.c.bf16 %v813, %v4749
    %v5621 = vpack.c.bf16 %v813, %v4751
    %s5622 = scalar_lea.vmem [#allocation7], 2048
    %v5623 = vld [vmem:[%s5622] sm:$0xff]
    %v5624 = vld [vmem:[%s5622 + $0x8] sm:$0xff]
    %v5625 = vld [vmem:[%s5622 + $0x10] sm:$0xff]
    %v5626 = vld [vmem:[%s5622 + $0x18] sm:$0xff]
    %v5627 = vld [vmem:[%s5622 + $0x20] sm:$0xff]
    %v5628 = vld [vmem:[%s5622 + $0x28] sm:$0xff]
    %v5629 = vld [vmem:[%s5622 + $0x30] sm:$0xff]
    %v5630 = vld [vmem:[%s5622 + $0x38] sm:$0xff]
    %v5631 = vld [vmem:[%s5622 + $0x40] sm:$0xff]
    %v5632 = vld [vmem:[%s5622 + $0x48] sm:$0xff]
    %v5633 = vld [vmem:[%s5622 + $0x50] sm:$0xff]
    %v5634 = vld [vmem:[%s5622 + $0x58] sm:$0xff]
    %v5635 = vld [vmem:[%s5622 + $0x60] sm:$0xff]
    %v5636 = vld [vmem:[%s5622 + $0x68] sm:$0xff]
    %v5637 = vld [vmem:[%s5622 + $0x70] sm:$0xff]
    %v5638 = vld [vmem:[%s5622 + $0x78] sm:$0xff]
    %v5639 = vld [vmem:[%s5622 + $0x80] sm:$0xff]
    %v5640 = vld [vmem:[%s5622 + $0x88] sm:$0xff]
    %v5641 = vld [vmem:[%s5622 + $0x90] sm:$0xff]
    %v5642 = vld [vmem:[%s5622 + $0x98] sm:$0xff]
    %v5643 = vld [vmem:[%s5622 + $0xa0] sm:$0xff]
    %v5644 = vld [vmem:[%s5622 + $0xa8] sm:$0xff]
    %v5645 = vld [vmem:[%s5622 + $0xb0] sm:$0xff]
    %v5646 = vld [vmem:[%s5622 + $0xb8] sm:$0xff]
    %v5647 = vld [vmem:[%s5622 + $0xc0] sm:$0xff]
    %v5648 = vld [vmem:[%s5622 + $0xc8] sm:$0xff]
    %v5649 = vld [vmem:[%s5622 + $0xd0] sm:$0xff]
    %v5650 = vld [vmem:[%s5622 + $0xd8] sm:$0xff]
    %v5651 = vld [vmem:[%s5622 + $0xe0] sm:$0xff]
    %v5652 = vld [vmem:[%s5622 + $0xe8] sm:$0xff]
    %v5653 = vld [vmem:[%s5622 + $0xf0] sm:$0xff]
    %v5654 = vld [vmem:[%s5622 + $0xf8] sm:$0xff]
    %v5687 = vunpack.c.l.b16 %v5623
    %v5688 = vunpack.c.h.b16 %v5623
    %v5689 = vunpack.c.l.b16 %v5624
    %v5690 = vunpack.c.h.b16 %v5624
    %v5691 = vunpack.c.l.b16 %v5625
    %v5692 = vunpack.c.h.b16 %v5625
    %v5693 = vunpack.c.l.b16 %v5626
    %v5694 = vunpack.c.h.b16 %v5626
    %v5695 = vunpack.c.l.b16 %v5627
    %v5696 = vunpack.c.h.b16 %v5627
    %v5697 = vunpack.c.l.b16 %v5628
    %v5698 = vunpack.c.h.b16 %v5628
    %v5699 = vunpack.c.l.b16 %v5629
    %v5700 = vunpack.c.h.b16 %v5629
    %v5701 = vunpack.c.l.b16 %v5630
    %v5702 = vunpack.c.h.b16 %v5630
    %v5703 = vunpack.c.l.b16 %v5631
    %v5704 = vunpack.c.h.b16 %v5631
    %v5705 = vunpack.c.l.b16 %v5632
    %v5706 = vunpack.c.h.b16 %v5632
    %v5707 = vunpack.c.l.b16 %v5633
    %v5708 = vunpack.c.h.b16 %v5633
    %v5709 = vunpack.c.l.b16 %v5634
    %v5710 = vunpack.c.h.b16 %v5634
    %v5711 = vunpack.c.l.b16 %v5635
    %v5712 = vunpack.c.h.b16 %v5635
    %v5713 = vunpack.c.l.b16 %v5636
    %v5714 = vunpack.c.h.b16 %v5636
    %v5715 = vunpack.c.l.b16 %v5637
    %v5716 = vunpack.c.h.b16 %v5637
    %v5717 = vunpack.c.l.b16 %v5638
    %v5718 = vunpack.c.h.b16 %v5638
    %v5719 = vunpack.c.l.b16 %v5639
    %v5720 = vunpack.c.h.b16 %v5639
    %v5721 = vunpack.c.l.b16 %v5640
    %v5722 = vunpack.c.h.b16 %v5640
    %v5723 = vunpack.c.l.b16 %v5641
    %v5724 = vunpack.c.h.b16 %v5641
    %v5725 = vunpack.c.l.b16 %v5642
    %v5726 = vunpack.c.h.b16 %v5642
    %v5727 = vunpack.c.l.b16 %v5643
    %v5728 = vunpack.c.h.b16 %v5643
    %v5729 = vunpack.c.l.b16 %v5644
    %v5730 = vunpack.c.h.b16 %v5644
    %v5731 = vunpack.c.l.b16 %v5645
    %v5732 = vunpack.c.h.b16 %v5645
    %v5733 = vunpack.c.l.b16 %v5646
    %v5734 = vunpack.c.h.b16 %v5646
    %v5735 = vunpack.c.l.b16 %v5647
    %v5736 = vunpack.c.h.b16 %v5647
    %v5737 = vunpack.c.l.b16 %v5648
    %v5738 = vunpack.c.h.b16 %v5648
    %v5739 = vunpack.c.l.b16 %v5649
    %v5740 = vunpack.c.h.b16 %v5649
    %v5741 = vunpack.c.l.b16 %v5650
    %v5742 = vunpack.c.h.b16 %v5650
    %v5743 = vunpack.c.l.b16 %v5651
    %v5744 = vunpack.c.h.b16 %v5651
    %v5745 = vunpack.c.l.b16 %v5652
    %v5746 = vunpack.c.h.b16 %v5652
    %v5747 = vunpack.c.l.b16 %v5653
    %v5748 = vunpack.c.h.b16 %v5653
    %v5749 = vunpack.c.l.b16 %v5654
    %v5750 = vunpack.c.h.b16 %v5654
    %v5751 = vpack.c.b16 %v5689, %v5687
    %v5752 = vpack.c.b16 %v5690, %v5688
    %v5753 = vpack.c.b16 %v5693, %v5691
    %v5754 = vpack.c.b16 %v5694, %v5692
    %v5755 = vpack.c.b16 %v5697, %v5695
    %v5756 = vpack.c.b16 %v5698, %v5696
    %v5757 = vpack.c.b16 %v5701, %v5699
    %v5758 = vpack.c.b16 %v5702, %v5700
    %v5759 = vpack.c.b16 %v5705, %v5703
    %v5760 = vpack.c.b16 %v5706, %v5704
    %v5761 = vpack.c.b16 %v5709, %v5707
    %v5762 = vpack.c.b16 %v5710, %v5708
    %v5763 = vpack.c.b16 %v5713, %v5711
    %v5764 = vpack.c.b16 %v5714, %v5712
    %v5765 = vpack.c.b16 %v5717, %v5715
    %v5766 = vpack.c.b16 %v5718, %v5716
    %v5767 = vpack.c.b16 %v5721, %v5719
    %v5768 = vpack.c.b16 %v5722, %v5720
    %v5769 = vpack.c.b16 %v5725, %v5723
    %v5770 = vpack.c.b16 %v5726, %v5724
    %v5771 = vpack.c.b16 %v5729, %v5727
    %v5772 = vpack.c.b16 %v5730, %v5728
    %v5773 = vpack.c.b16 %v5733, %v5731
    %v5774 = vpack.c.b16 %v5734, %v5732
    %v5775 = vpack.c.b16 %v5737, %v5735
    %v5776 = vpack.c.b16 %v5738, %v5736
    %v5777 = vpack.c.b16 %v5741, %v5739
    %v5778 = vpack.c.b16 %v5742, %v5740
    %v5779 = vpack.c.b16 %v5745, %v5743
    %v5780 = vpack.c.b16 %v5746, %v5744
    %v5781 = vpack.c.b16 %v5749, %v5747
    %v5782 = vpack.c.b16 %v5750, %v5748
    %5815 = vmatprep.subr.bf16.mxu0 %v5752
    %5816 = vmatpush1.bf16.msra.mxu0 %v5751
    %5817 = vmatprep.subr.bf16.mxu0 %v5754
    %5818 = vmatpush1.bf16.msra.mxu0 %v5753
    %5819 = vmatprep.subr.bf16.mxu0 %v5756
    %5820 = vmatpush1.bf16.msra.mxu0 %v5755
    %5821 = vmatprep.subr.bf16.mxu0 %v5758
    %5822 = vmatpush1.bf16.msra.mxu0 %v5757
    %5823 = vmatprep.subr.bf16.mxu0 %v5760
    %5824 = vmatpush1.bf16.msra.mxu0 %v5759
    %5825 = vmatprep.subr.bf16.mxu0 %v5762
    %5826 = vmatpush1.bf16.msra.mxu0 %v5761
    %5827 = vmatprep.subr.bf16.mxu0 %v5764
    %5828 = vmatpush1.bf16.msra.mxu0 %v5763
    %5829 = vmatprep.subr.bf16.mxu0 %v5766
    %5830 = vmatpush1.bf16.msra.mxu0 %v5765
    %5831 = vmatprep.subr.bf16.mxu0 %v5768
    %5832 = vmatpush1.bf16.msra.mxu0 %v5767
    %5833 = vmatprep.subr.bf16.mxu0 %v5770
    %5834 = vmatpush1.bf16.msra.mxu0 %v5769
    %5835 = vmatprep.subr.bf16.mxu0 %v5772
    %5836 = vmatpush1.bf16.msra.mxu0 %v5771
    %5837 = vmatprep.subr.bf16.mxu0 %v5774
    %5838 = vmatpush1.bf16.msra.mxu0 %v5773
    %5839 = vmatprep.subr.bf16.mxu0 %v5776
    %5840 = vmatpush1.bf16.msra.mxu0 %v5775
    %5841 = vmatprep.subr.bf16.mxu0 %v5778
    %5842 = vmatpush1.bf16.msra.mxu0 %v5777
    %5843 = vmatprep.subr.bf16.mxu0 %v5780
    %5844 = vmatpush1.bf16.msra.mxu0 %v5779
    %5845 = vmatprep.subr.bf16.mxu0 %v5782
    %5846 = vmatpush1.bf16.msra.mxu0 %v5781
    %5847 = vmatprep.mubr.bf16.mxu0 %v3861
    %5848 = vmatmul.mubr.bf16.gmra.mrb[0].mxu0 %v3860
    %v5849 = vpop.f32.mrb[0].mxu0
    %v5850 = vadd.f32 0.0, %v5849
    %v5851 = vpop.f32.mrb[0].mxu0
    %v5852 = vadd.f32 0.0, %v5851
    %v5853 = vpop.f32.mrb[0].mxu0
    %v5854 = vadd.f32 0.0, %v5853
    %v5855 = vpop.f32.mrb[0].mxu0
    %v5856 = vadd.f32 0.0, %v5855
    %5857 = vmatprep.mubr.bf16.mxu0 %v5619
    %5858 = vmatmul.mubr.bf16.gmra.mrb[0].mxu0 %v5618
    %v5859 = vpop.f32.mrb[0].mxu0
    %v5860 = vadd.f32 0.0, %v5859
    %v5861 = vpop.f32.mrb[0].mxu0
    %v5862 = vadd.f32 0.0, %v5861
    %v5863 = vpop.f32.mrb[0].mxu0
    %v5864 = vadd.f32 0.0, %v5863
    %v5865 = vpop.f32.mrb[0].mxu0
    %v5866 = vadd.f32 0.0, %v5865
    %5867 = vmatprep.mubr.bf16.mxu0 %v3865
    %5868 = vmatmul.mubr.bf16.gmra.mrb[0].mxu0 %v3864
    %v5869 = vpop.f32.mrb[0].mxu0
    %v5870 = vadd.f32 0.0, %v5869
    %v5871 = vpop.f32.mrb[0].mxu0
    %v5872 = vadd.f32 0.0, %v5871
    %v5873 = vpop.f32.mrb[0].mxu0
    %v5874 = vadd.f32 0.0, %v5873
    %v5875 = vpop.f32.mrb[0].mxu0
    %v5876 = vadd.f32 0.0, %v5875
    %5877 = vmatprep.mubr.bf16.mxu0 %v5621
    %5878 = vmatmul.mubr.bf16.gmra.mrb[0].mxu0 %v5620
    %v5879 = vpop.f32.mrb[0].mxu0
    %v5880 = vadd.f32 0.0, %v5879
    %v5881 = vpop.f32.mrb[0].mxu0
    %v5882 = vadd.f32 0.0, %v5881
    %v5883 = vpop.f32.mrb[0].mxu0
    %v5884 = vadd.f32 0.0, %v5883
    %v5885 = vpop.f32.mrb[0].mxu0
    %v5886 = vadd.f32 0.0, %v5885
    %5887 = vdwg.mxu0
    %v5888 = vadd.f32 %v5602, %v5850
    %v5889 = vadd.f32 %v5603, %v5852
    %v5890 = vadd.f32 %v5604, %v5854
    %v5891 = vadd.f32 %v5605, %v5856
    %v5892 = vadd.f32 %v5606, %v5860
    %v5893 = vadd.f32 %v5607, %v5862
    %v5894 = vadd.f32 %v5608, %v5864
    %v5895 = vadd.f32 %v5609, %v5866
    %v5896 = vadd.f32 %v5610, %v5870
    %v5897 = vadd.f32 %v5611, %v5872
    %v5898 = vadd.f32 %v5612, %v5874
    %v5899 = vadd.f32 %v5613, %v5876
    %v5900 = vadd.f32 %v5614, %v5880
    %v5901 = vadd.f32 %v5615, %v5882
    %v5902 = vadd.f32 %v5616, %v5884
    %v5903 = vadd.f32 %v5617, %v5886
    %v5904 = vld [vmem:[#allocation13] sm:$0x3]
    %v5905 = vld [vmem:[#allocation14] sm:$0x3]
    %v5906 = vadd.f32 %v5888, %v5890
    %v5907 = vadd.f32 %v5906, %v5892
    %v5908 = vadd.f32 %v5907, %v5894
    %v5909 = vadd.f32 %v5908, %v5896
    %v5910 = vadd.f32 %v5909, %v5898
    %v5911 = vadd.f32 %v5910, %v5900
    %v5912 = vadd.f32 %v5911, %v5902
    %v5913 = vrot.slane %v5912, 4
    %v5914 = vadd.f32 %v5912, %v5913
    %v5915 = vrot.slane %v5914, 2
    %v5916 = vadd.f32 %v5914, %v5915
    %v5917 = vrot.slane %v5916, 1
    %v5918 = vadd.f32 %v5916, %v5917
    %v5919 = vadd.f32 %v5889, %v5891
    %v5920 = vadd.f32 %v5919, %v5893
    %v5921 = vadd.f32 %v5920, %v5895
    %v5922 = vadd.f32 %v5921, %v5897
    %v5923 = vadd.f32 %v5922, %v5899
    %v5924 = vadd.f32 %v5923, %v5901
    %v5925 = vadd.f32 %v5924, %v5903
    %v5926 = vrot.slane %v5925, 4
    %v5927 = vadd.f32 %v5925, %v5926
    %v5928 = vrot.slane %v5927, 2
    %v5929 = vadd.f32 %v5927, %v5928
    %v5930 = vrot.slane %v5929, 1
    %v5931 = vadd.f32 %v5929, %v5930
    %v5932 = vmul.f32 %v5888, %v5888
    %v5933 = vmul.f32 %v5889, %v5889
    %v5934 = vmul.f32 %v5890, %v5890
    %v5935 = vmul.f32 %v5891, %v5891
    %v5936 = vmul.f32 %v5892, %v5892
    %v5937 = vmul.f32 %v5893, %v5893
    %v5938 = vmul.f32 %v5894, %v5894
    %v5939 = vmul.f32 %v5895, %v5895
    %v5940 = vmul.f32 %v5896, %v5896
    %v5941 = vmul.f32 %v5897, %v5897
    %v5942 = vmul.f32 %v5898, %v5898
    %v5943 = vmul.f32 %v5899, %v5899
    %v5944 = vmul.f32 %v5900, %v5900
    %v5945 = vmul.f32 %v5901, %v5901
    %v5946 = vmul.f32 %v5902, %v5902
    %v5947 = vmul.f32 %v5903, %v5903
    %v5948 = vadd.f32 %v5932, %v5934
    %v5949 = vadd.f32 %v5948, %v5936
    %v5950 = vadd.f32 %v5949, %v5938
    %v5951 = vadd.f32 %v5950, %v5940
    %v5952 = vadd.f32 %v5951, %v5942
    %v5953 = vadd.f32 %v5952, %v5944
    %v5954 = vadd.f32 %v5953, %v5946
    %v5955 = vrot.slane %v5954, 4
    %v5956 = vadd.f32 %v5954, %v5955
    %v5957 = vrot.slane %v5956, 2
    %v5958 = vadd.f32 %v5956, %v5957
    %v5959 = vrot.slane %v5958, 1
    %v5960 = vadd.f32 %v5958, %v5959
    %v5961 = vadd.f32 %v5933, %v5935
    %v5962 = vadd.f32 %v5961, %v5937
    %v5963 = vadd.f32 %v5962, %v5939
    %v5964 = vadd.f32 %v5963, %v5941
    %v5965 = vadd.f32 %v5964, %v5943
    %v5966 = vadd.f32 %v5965, %v5945
    %v5967 = vadd.f32 %v5966, %v5947
    %v5968 = vrot.slane %v5967, 4
    %v5969 = vadd.f32 %v5967, %v5968
    %v5970 = vrot.slane %v5969, 2
    %v5971 = vadd.f32 %v5969, %v5970
    %v5972 = vrot.slane %v5971, 1
    %v5973 = vadd.f32 %v5971, %v5972
    %5974 = vmatprep.subr.mxu0 %v148
    %5975 = vmatpush1.msra.mxu0 %v147
    %5976 = vmatprep.subr.mxu0 %v150
    %5977 = vmatpush1.msra.mxu0 %v149
    %5978 = vmatprep.subr.mxu0 %v152
    %5979 = vmatpush1.msra.mxu0 %v151
    %5980 = vmatprep.subr.mxu0 %v154
    %5981 = vmatpush1.msra.mxu0 %v153
    %5982 = vmatprep.subr.mxu0 %v156
    %5983 = vmatpush1.msra.mxu0 %v155
    %5984 = vmatprep.subr.mxu0 %v158
    %5985 = vmatpush1.msra.mxu0 %v157
    %5986 = vmatprep.subr.mxu0 %v160
    %5987 = vmatpush1.msra.mxu0 %v159
    %5988 = vmatprep.subr.mxu0 %v162
    %5989 = vmatpush1.msra.mxu0 %v161
    %5990 = vmatprep.subr.mxu0 %v164
    %5991 = vmatpush1.msra.mxu0 %v163
    %5992 = vmatprep.subr.mxu0 %v166
    %5993 = vmatpush1.msra.mxu0 %v165
    %5994 = vmatprep.subr.mxu0 %v168
    %5995 = vmatpush1.msra.mxu0 %v167
    %5996 = vmatprep.subr.mxu0 %v170
    %5997 = vmatpush1.msra.mxu0 %v169
    %5998 = vmatprep.subr.mxu0 %v172
    %5999 = vmatpush1.msra.mxu0 %v171
    %6000 = vmatprep.subr.mxu0 %v174
    %6001 = vmatpush1.msra.mxu0 %v173
    %6002 = vmatprep.subr.mxu0 %v176
    %6003 = vmatpush1.msra.mxu0 %v175
    %6004 = vmatprep.subr.mxu0 %v178
    %6005 = vmatpush1.msra.mxu0 %v177
    %6006 = vmatprep.subr.mxu0 %v180
    %6007 = vmatpush1.msra.mxu0 %v179
    %6008 = vmatprep.subr.mxu0 %v182
    %6009 = vmatpush1.msra.mxu0 %v181
    %6010 = vmatprep.subr.mxu0 %v184
    %6011 = vmatpush1.msra.mxu0 %v183
    %6012 = vmatprep.subr.mxu0 %v186
    %6013 = vmatpush1.msra.mxu0 %v185
    %6014 = vmatprep.subr.mxu0 %v188
    %6015 = vmatpush1.msra.mxu0 %v187
    %6016 = vmatprep.subr.mxu0 %v190
    %6017 = vmatpush1.msra.mxu0 %v189
    %6018 = vmatprep.subr.mxu0 %v192
    %6019 = vmatpush1.msra.mxu0 %v191
    %6020 = vmatprep.subr.mxu0 %v194
    %6021 = vmatpush1.msra.mxu0 %v193
    %6022 = vmatprep.subr.mxu0 %v196
    %6023 = vmatpush1.msra.mxu0 %v195
    %6024 = vmatprep.subr.mxu0 %v198
    %6025 = vmatpush1.msra.mxu0 %v197
    %6026 = vmatprep.subr.mxu0 %v200
    %6027 = vmatpush1.msra.mxu0 %v199
    %6028 = vmatprep.subr.mxu0 %v202
    %6029 = vmatpush1.msra.mxu0 %v201
    %6030 = vmatprep.subr.mxu0 %v204
    %6031 = vmatpush1.msra.mxu0 %v203
    %6032 = vmatprep.subr.mxu0 %v206
    %6033 = vmatpush1.msra.mxu0 %v205
    %6034 = vmatprep.subr.mxu0 %v208
    %6035 = vmatpush1.msra.mxu0 %v207
    %6036 = vmatprep.subr.mxu0 %v210
    %6037 = vmatpush1.msra.mxu0 %v209
    %6038 = vmatprep.mubr.f32.mxu0 %v5931
    %6039 = vmatmul.mubr.f32.gmra.mrb[0].mxu0 %v5918
    %v6040 = vpop.f32.mrb[0].mxu0
    %v6041 = vadd.f32 0.0, %v6040
    %v6042 = vpop.f32.mrb[0].mxu0
    %v6043 = vadd.f32 0.0, %v6042
    %6044 = vdwg.mxu0
    %6045 = vmatprep.subr.mxu0 %v148
    %6046 = vmatpush1.msra.mxu0 %v147
    %6047 = vmatprep.subr.mxu0 %v150
    %6048 = vmatpush1.msra.mxu0 %v149
    %6049 = vmatprep.subr.mxu0 %v152
    %6050 = vmatpush1.msra.mxu0 %v151
    %6051 = vmatprep.subr.mxu0 %v154
    %6052 = vmatpush1.msra.mxu0 %v153
    %6053 = vmatprep.subr.mxu0 %v156
    %6054 = vmatpush1.msra.mxu0 %v155
    %6055 = vmatprep.subr.mxu0 %v158
    %6056 = vmatpush1.msra.mxu0 %v157
    %6057 = vmatprep.subr.mxu0 %v160
    %6058 = vmatpush1.msra.mxu0 %v159
    %6059 = vmatprep.subr.mxu0 %v162
    %6060 = vmatpush1.msra.mxu0 %v161
    %6061 = vmatprep.subr.mxu0 %v164
    %6062 = vmatpush1.msra.mxu0 %v163
    %6063 = vmatprep.subr.mxu0 %v166
    %6064 = vmatpush1.msra.mxu0 %v165
    %6065 = vmatprep.subr.mxu0 %v168
    %6066 = vmatpush1.msra.mxu0 %v167
    %6067 = vmatprep.subr.mxu0 %v170
    %6068 = vmatpush1.msra.mxu0 %v169
    %6069 = vmatprep.subr.mxu0 %v172
    %6070 = vmatpush1.msra.mxu0 %v171
    %6071 = vmatprep.subr.mxu0 %v174
    %6072 = vmatpush1.msra.mxu0 %v173
    %6073 = vmatprep.subr.mxu0 %v176
    %6074 = vmatpush1.msra.mxu0 %v175
    %6075 = vmatprep.subr.mxu0 %v178
    %6076 = vmatpush1.msra.mxu0 %v177
    %6077 = vmatprep.subr.mxu0 %v180
    %6078 = vmatpush1.msra.mxu0 %v179
    %6079 = vmatprep.subr.mxu0 %v182
    %6080 = vmatpush1.msra.mxu0 %v181
    %6081 = vmatprep.subr.mxu0 %v184
    %6082 = vmatpush1.msra.mxu0 %v183
    %6083 = vmatprep.subr.mxu0 %v186
    %6084 = vmatpush1.msra.mxu0 %v185
    %6085 = vmatprep.subr.mxu0 %v188
    %6086 = vmatpush1.msra.mxu0 %v187
    %6087 = vmatprep.subr.mxu0 %v190
    %6088 = vmatpush1.msra.mxu0 %v189
    %6089 = vmatprep.subr.mxu0 %v192
    %6090 = vmatpush1.msra.mxu0 %v191
    %6091 = vmatprep.subr.mxu0 %v194
    %6092 = vmatpush1.msra.mxu0 %v193
    %6093 = vmatprep.subr.mxu0 %v196
    %6094 = vmatpush1.msra.mxu0 %v195
    %6095 = vmatprep.subr.mxu0 %v198
    %6096 = vmatpush1.msra.mxu0 %v197
    %6097 = vmatprep.subr.mxu0 %v200
    %6098 = vmatpush1.msra.mxu0 %v199
    %6099 = vmatprep.subr.mxu0 %v202
    %6100 = vmatpush1.msra.mxu0 %v201
    %6101 = vmatprep.subr.mxu0 %v204
    %6102 = vmatpush1.msra.mxu0 %v203
    %6103 = vmatprep.subr.mxu0 %v206
    %6104 = vmatpush1.msra.mxu0 %v205
    %6105 = vmatprep.subr.mxu0 %v208
    %6106 = vmatpush1.msra.mxu0 %v207
    %6107 = vmatprep.subr.mxu0 %v210
    %6108 = vmatpush1.msra.mxu0 %v209
    %6109 = vmatprep.mubr.f32.mxu0 %v5973
    %6110 = vmatmul.mubr.f32.gmra.mrb[0].mxu0 %v5960
    %v6111 = vpop.f32.mrb[0].mxu0
    %v6112 = vadd.f32 0.0, %v6111
    %v6113 = vpop.f32.mrb[0].mxu0
    %v6114 = vadd.f32 0.0, %v6113
    %6115 = vdwg.mxu0
    %v6116 = vmul.f32 %v6041, %v6041
    %v6117 = vmul.f32 %v6043, %v6043
    %v6118 = vsub.f32 %v6112, %v6116
    %v6119 = vsub.f32 %v6114, %v6117
    %v6120 = vadd.f32 %v6118, 1e-05
    %v6121 = vadd.f32 %v6119, 1e-05
    %v6122 = vrsqrt.pop %v6120
    %v6123 = vrsqrt.pop %v6121
    %v6126 = vcombine.low %v6122, %v6123
    %v6128 = vunpack.c.l.s4 1966171168
    %v6129 = vunpack.c.0.s8 %v6128
    %v6130 = vlaneseq
    %v6131 = vshrl.u32 %v6130, 7
    %v6132 = vsub.s32 %v6129, %v6131
    %v6133 = vrot.slane %v6126, %v6132
    %v6135 = vunpack.c.l.s4 1966171168
    %v6136 = vunpack.c.0.s8 %v6135
    %v6137 = vlaneseq
    %v6138 = vshrl.u32 %v6137, 7
    %v6139 = vsub.s32 %v6136, %v6138
    %v6140 = vrot.slane %v6133, %v6139
    %v6142 = vmul.f32 %v5904, %v6140
    %v6144 = vlaneseq
    %v6145 = vshrl.u32 %v6144, 7
    %v6146 = vsub.s32 0, %v6145
    %v6147 = vrot.slane %v6142, %v6146
    %v6148 = vlaneseq
    %v6149 = vshrl.u32 %v6148, 7
    %v6150 = vsub.s32 1, %v6149
    %v6151 = vrot.slane %v6142, %v6150
    %v6154 = vmul.f32 %v6041, %v6147
    %v6155 = vmul.f32 %v6043, %v6151
    %v6158 = vcombine.low %v6154, %v6155
    %v6160 = vunpack.c.l.s4 1966171168
    %v6161 = vunpack.c.0.s8 %v6160
    %v6162 = vlaneseq
    %v6163 = vshrl.u32 %v6162, 7
    %v6164 = vsub.s32 %v6161, %v6163
    %v6165 = vrot.slane %v6158, %v6164
    %v6167 = vunpack.c.l.s4 1966171168
    %v6168 = vunpack.c.0.s8 %v6167
    %v6169 = vlaneseq
    %v6170 = vshrl.u32 %v6169, 7
    %v6171 = vsub.s32 %v6168, %v6170
    %v6172 = vrot.slane %v6165, %v6171
    %v6174 = vsub.f32 %v5905, %v6172
    %v6175 = vmul.f32 %v5888, %v6147
    %v6176 = vmul.f32 %v5889, %v6151
    %v6177 = vmul.f32 %v5890, %v6147
    %v6178 = vmul.f32 %v5891, %v6151
    %v6179 = vmul.f32 %v5892, %v6147
    %v6180 = vmul.f32 %v5893, %v6151
    %v6181 = vmul.f32 %v5894, %v6147
    %v6182 = vmul.f32 %v5895, %v6151
    %v6183 = vmul.f32 %v5896, %v6147
    %v6184 = vmul.f32 %v5897, %v6151
    %v6185 = vmul.f32 %v5898, %v6147
    %v6186 = vmul.f32 %v5899, %v6151
    %v6187 = vmul.f32 %v5900, %v6147
    %v6188 = vmul.f32 %v5901, %v6151
    %v6189 = vmul.f32 %v5902, %v6147
    %v6190 = vmul.f32 %v5903, %v6151
    %v6192 = vlaneseq
    %v6193 = vshrl.u32 %v6192, 7
    %v6194 = vsub.s32 0, %v6193
    %v6195 = vrot.slane %v6174, %v6194
    %v6196 = vlaneseq
    %v6197 = vshrl.u32 %v6196, 7
    %v6198 = vsub.s32 1, %v6197
    %v6199 = vrot.slane %v6174, %v6198
    %v6202 = vadd.f32 %v6175, %v6195
    %v6203 = vadd.f32 %v6176, %v6199
    %v6204 = vadd.f32 %v6177, %v6195
    %v6205 = vadd.f32 %v6178, %v6199
    %v6206 = vadd.f32 %v6179, %v6195
    %v6207 = vadd.f32 %v6180, %v6199
    %v6208 = vadd.f32 %v6181, %v6195
    %v6209 = vadd.f32 %v6182, %v6199
    %v6210 = vadd.f32 %v6183, %v6195
    %v6211 = vadd.f32 %v6184, %v6199
    %v6212 = vadd.f32 %v6185, %v6195
    %v6213 = vadd.f32 %v6186, %v6199
    %v6214 = vadd.f32 %v6187, %v6195
    %v6215 = vadd.f32 %v6188, %v6199
    %v6216 = vadd.f32 %v6189, %v6195
    %v6217 = vadd.f32 %v6190, %v6199
    %v6218 = vadd.f32 %v6202, %v131
    %v6219 = vadd.f32 %v6203, %v132
    %v6220 = vadd.f32 %v6204, %v133
    %v6221 = vadd.f32 %v6205, %v134
    %v6222 = vadd.f32 %v6206, %v135
    %v6223 = vadd.f32 %v6207, %v136
    %v6224 = vadd.f32 %v6208, %v137
    %v6225 = vadd.f32 %v6209, %v138
    %v6226 = vadd.f32 %v6210, %v139
    %v6227 = vadd.f32 %v6211, %v140
    %v6228 = vadd.f32 %v6212, %v141
    %v6229 = vadd.f32 %v6213, %v142
    %v6230 = vadd.f32 %v6214, %v143
    %v6231 = vadd.f32 %v6215, %v144
    %v6232 = vadd.f32 %v6216, %v145
    %v6233 = vadd.f32 %v6217, %v146
    %v6234 = vmax.f32 %v6218, 0.0
    %v6235 = vmax.f32 %v6219, 0.0
    %v6236 = vmax.f32 %v6220, 0.0
    %v6237 = vmax.f32 %v6221, 0.0
    %v6238 = vmax.f32 %v6222, 0.0
    %v6239 = vmax.f32 %v6223, 0.0
    %v6240 = vmax.f32 %v6224, 0.0
    %v6241 = vmax.f32 %v6225, 0.0
    %v6242 = vmax.f32 %v6226, 0.0
    %v6243 = vmax.f32 %v6227, 0.0
    %v6244 = vmax.f32 %v6228, 0.0
    %v6245 = vmax.f32 %v6229, 0.0
    %v6246 = vmax.f32 %v6230, 0.0
    %v6247 = vmax.f32 %v6231, 0.0
    %v6248 = vmax.f32 %v6232, 0.0
    %v6249 = vmax.f32 %v6233, 0.0
    %6250 = vst [vmem:[#allocation16] sm:$0xff] %v6234
    %6251 = vst [vmem:[#allocation16 + $0x8] sm:$0xff] %v6235
    %6252 = vst [vmem:[#allocation16 + $0x10] sm:$0xff] %v6236
    %6253 = vst [vmem:[#allocation16 + $0x18] sm:$0xff] %v6237
    %6254 = vst [vmem:[#allocation16 + $0x20] sm:$0xff] %v6238
    %6255 = vst [vmem:[#allocation16 + $0x28] sm:$0xff] %v6239
    %6256 = vst [vmem:[#allocation16 + $0x30] sm:$0xff] %v6240
    %6257 = vst [vmem:[#allocation16 + $0x38] sm:$0xff] %v6241
    %6258 = vst [vmem:[#allocation16 + $0x40] sm:$0xff] %v6242
    %6259 = vst [vmem:[#allocation16 + $0x48] sm:$0xff] %v6243
    %6260 = vst [vmem:[#allocation16 + $0x50] sm:$0xff] %v6244
    %6261 = vst [vmem:[#allocation16 + $0x58] sm:$0xff] %v6245
    %6262 = vst [vmem:[#allocation16 + $0x60] sm:$0xff] %v6246
    %6263 = vst [vmem:[#allocation16 + $0x68] sm:$0xff] %v6247
    %6264 = vst [vmem:[#allocation16 + $0x70] sm:$0xff] %v6248
    %6265 = vst [vmem:[#allocation16 + $0x78] sm:$0xff] %v6249
    // Predicated region
    $region66: #{tpu_custom_call.1} parent=1 // pred_check
      _
    $region67: #{tpu_custom_call.1} parent=1 // pred_check_branch
      %6267 = sbr.rel (0) target = $region69
    $region68: #{tpu_custom_call.1} parent=1 // pred_region
      %s6269 = ssub.s32 2048, 2048
      %6270 = vsyncadd [#allocation4], %s6269
      %s6271 = sshll.u32 [#allocation16], 4
      %s6272 = int_to_ptr.vmem [resolvable:$true] %s6271
      %6277 = dma.vmem_to_hbm [thread:$0]  %s6272, 2048, %s8, [#allocation4], 256, 256, 16
    $region69: #{tpu_custom_call.1} parent=1 // pred_fallthru
      _
    // Predicated region
    $region70: #{tpu_custom_call.1} parent=1 // pred_check
      _
    $region71: #{tpu_custom_call.1} parent=1 // pred_check_branch
      %6279 = sbr.rel (0) target = $region73
    $region72: #{tpu_custom_call.1} parent=1 // pred_region
      %6280 = dma.done [#allocation4], 2048
    $region73: #{tpu_custom_call.1} parent=1 // pred_fallthru
      _
    %6281 = vsyncpa [#allocation3], 1
    %6282 = vsyncpa [#allocation6], 1
    %6283 = vsyncpa [#allocation9], 1
    %6284 = vsyncpa [#allocation12], 1
    %6285 = vsyncpa [#allocation15], 1
    %6286 = vsyncpa [#allocation4], 1

</llo_original>
